<compile_context>
chip_gen: v6e
topology: v6e:2x2x1
jax: 0.10.0
libtpu: 0.0.40
codegen_flags: <defaults>
</compile_context>

<pallas_src>
import functools

import jax
import jax.numpy as jnp
from jax.experimental import pallas as pl
from jax.experimental.pallas import tpu as pltpu


def _packed_conv3x3_kernel(x_ref, w_ref, b_ref, o_ref, acc_ref, *, h, w):
    """One batch image of a fused loc||cls 3x3 SAME conv (packed-tap matmul).

    x_ref  : (1, H*W, C)       bf16 activations for this batch element
    w_ref  : (C, 9*Cout)       bf16 packed weights, tap-major along lanes
    b_ref  : (1, Cout)         f32 bias (loc || cls)
    o_ref  : (1, H, W, Cout)   f32 output
    acc_ref: (H+2, W+2, Cout)  f32 padded output accumulator (scratch)
    """
    cout = o_ref.shape[-1]

    # Single MXU pass: (H*W, C) @ (C, 9*Cout).  All 9 taps share one read of
    # the C-wide activation; N = 9*Cout lanes (216-432) instead of 24-48.
    p = jnp.dot(x_ref[0], w_ref[...], preferred_element_type=jnp.float32)
    p = p.reshape(h, w, 9 * cout)

    # Shift-and-add on the small f32 partials: scatter each tap slice into a
    # 1-pixel-padded accumulator.  Contributions that fall in the halo are
    # simply discarded, which is exactly SAME zero padding.
    acc_ref[...] = jnp.zeros_like(acc_ref)
    for ky in range(3):
        for kx in range(3):
            t = ky * 3 + kx
            pt = p[:, :, t * cout:(t + 1) * cout]          # (H, W, Cout) f32
            acc_ref[2 - ky:2 - ky + h, 2 - kx:2 - kx + w, :] += pt

    out = acc_ref[1:h + 1, 1:w + 1, :] + b_ref[...].astype(jnp.float32)
    o_ref[0] = out


def conv3x3_fused(x_nhwc, w_packed, bias, h, w, cout):
    """Fused loc+cls 3x3 stride-1 SAME conv. NHWC bf16 in / NHWC f32 out."""
    n, _, _, c = x_nhwc.shape
    x2d = x_nhwc.reshape(n, h * w, c)                       # free (row-major)
    kernel = functools.partial(_packed_conv3x3_kernel, h=h, w=w)
    return pl.pallas_call(
        kernel,
        out_shape=jax.ShapeDtypeStruct((n, h, w, cout), jnp.float32),
        grid_spec=pltpu.PrefetchScalarGridSpec(
            num_scalar_prefetch=0,
            grid=(n,),
            in_specs=[
                pl.BlockSpec((1, h * w, c), lambda b: (b, 0, 0)),
                pl.BlockSpec((c, 9 * cout), lambda b: (0, 0)),
                pl.BlockSpec((1, cout), lambda b: (0, 0)),
            ],
            out_specs=pl.BlockSpec((1, h, w, cout), lambda b: (b, 0, 0, 0)),
            scratch_shapes=[pltpu.VMEM((h + 2, w + 2, cout), jnp.float32)],
        ),
        compiler_params=pltpu.CompilerParams(
            dimension_semantics=("parallel",)),
    )(x2d, w_packed, bias)


class SSDHeadPallas:
    """JAX/Pallas port of the PyTorch SSDHead (forward only)."""

    IN_CHANNELS = [2048, 1024, 512, 512, 256, 256]

    def __init__(self, num_classes, num_boxes=(4, 6, 6, 6, 4, 4), key=None):
        self.num_classes = num_classes
        self.num_boxes = list(num_boxes)
        if key is None:
            key = jax.random.PRNGKey(0)
        # (packed bf16 (C, 9*Cout), bias f32 (1, Cout), Cout)
        self.fused_params = []
        # f32 HWIO copy of the (bf16-rounded) fused weights, kept only for the
        # numerical reference check (built from the pre-transpose layout so a
        # tap-packing bug cannot be masked).
        self.ref_params = []
        for i, c_in in enumerate(self.IN_CHANNELS):
            k = jax.random.fold_in(key, i)
            kl_w, kl_b, kc_w, kc_b = jax.random.split(k, 4)
            c_loc = self.num_boxes[i] * 4
            c_cls = self.num_boxes[i] * num_classes
            cout = c_loc + c_cls
            lw = jax.random.normal(kl_w, (3, 3, c_in, c_loc), jnp.float32) * 0.02
            lb = jax.random.normal(kl_b, (c_loc,), jnp.float32) * 0.02
            cw = jax.random.normal(kc_w, (3, 3, c_in, c_cls), jnp.float32) * 0.02
            cb = jax.random.normal(kc_b, (c_cls,), jnp.float32) * 0.02
            w_f = jnp.concatenate([lw, cw], axis=-1)            # (3,3,C,Cout)
            b_f = jnp.concatenate([lb, cb], axis=-1)            # (Cout,)
            w_bf16 = w_f.astype(jnp.bfloat16)
            # (3,3,C,Cout) -> (C,3,3,Cout) -> (C, 9*Cout): lane block t=ky*3+kx
            w_packed = jnp.transpose(w_bf16, (2, 0, 1, 3)).reshape(c_in, 9 * cout)
            self.fused_params.append((
                w_packed,
                b_f.reshape(1, cout).astype(jnp.float32),
                cout,
            ))
            self.ref_params.append((w_bf16.astype(jnp.float32),
                                    b_f.astype(jnp.float32)))

    def __call__(self, features_nchw):
        """features_nchw: list of (N, C, H, W) arrays (PyTorch convention).

        Returns (locs, confs): lists of NHWC f32 arrays, matching the PyTorch
        module's `.permute(0, 2, 3, 1)` outputs.
        """
        locs, confs = [], []
        for i, f in enumerate(features_nchw):
            nb4 = self.num_boxes[i] * 4
            w_packed, bias, cout = self.fused_params[i]
            # Cast to bf16 BEFORE the layout transpose (half the bytes moved).
            x = jnp.transpose(f.astype(jnp.bfloat16), (0, 2, 3, 1))
            n, h, w, _ = x.shape
            y = conv3x3_fused(x, w_packed, bias, h, w, cout)
            locs.append(y[..., :nb4])
            confs.append(y[..., nb4:])
        return locs, confs


def _ref_conv(x_nhwc, w_hwio, b):
    y = jax.lax.conv_general_dilated(
        x_nhwc, w_hwio, window_strides=(1, 1), padding="SAME",
        dimension_numbers=("NHWC", "HWIO", "NHWC"))
    return y + b


if __name__ == "__main__":
    key = jax.random.PRNGKey(0)
    num_classes = 4
    batch = 2
    spatial = [8, 4, 4, 2, 2, 1]  # small SSD-like pyramid

    head = SSDHeadPallas(num_classes, key=jax.random.fold_in(key, 123))

    features = []
    for i, (c, s) in enumerate(zip(SSDHeadPallas.IN_CHANNELS, spatial)):
        kf = jax.random.fold_in(key, 1000 + i)
        features.append(jax.random.normal(kf, (batch, c, s, s), jnp.float32))

    locs, confs = head(features)
    jax.block_until_ready(locs)
    jax.block_until_ready(confs)

    # Correctness vs XLA conv on the same bf16-cast operands (f32 accumulate).
    ok = True
    for i, f in enumerate(features):
        x = jnp.transpose(f, (0, 2, 3, 1)).astype(jnp.bfloat16).astype(jnp.float32)
        w_hwio, b_f = head.ref_params[i]
        ref = _ref_conv(x, w_hwio, b_f)
        got = jnp.concatenate([locs[i], confs[i]], axis=-1)
        scale = float(jnp.max(jnp.abs(ref))) + 1e-6
        err = float(jnp.max(jnp.abs(got - ref))) / scale
        if err > 2e-2:
            ok = False
            print(f"level {i}: rel err {err:.4f}")

    # Shape sanity: matches PyTorch's permute(0,2,3,1) outputs.
    for i, s in enumerate(spatial):
        assert locs[i].shape == (batch, s, s, head.num_boxes[i] * 4)
        assert confs[i].shape == (batch, s, s, head.num_boxes[i] * num_classes)

    if ok:
        print("KERNEL_OK")
    else:
        raise SystemExit("numerical mismatch vs reference conv")
</pallas_src>

<mosaic_0001>
module attributes {stable_mosaic.version = 11 : i64} {
  func.func @_packed_conv3x3_kernel(%arg0: i32, %arg1: memref<1x64x2048xbf16, #tpu.memory_space<vmem>>, %arg2: memref<2048x288xbf16, #tpu.memory_space<vmem>>, %arg3: memref<1x32xf32, #tpu.memory_space<vmem>>, %arg4: memref<1x8x8x32xf32, #tpu.memory_space<vmem>>, %arg5: memref<10x10x32xf32, #tpu.memory_space<vmem>>) attributes {dimension_semantics = [#tpu.dimension_semantics<parallel>], iteration_bounds = array<i64: 2>, scalar_prefetch = 0 : i64, scratch_operands = 1 : i64, tpu.core_type = #tpu.core_type<tc>, window_params = [{transform_indices = @transform_0, window_bounds = array<i64: 1, 64, 2048>}, {pipeline_mode = #tpu.pipeline_mode<synchronous>, transform_indices = @transform_1, window_bounds = array<i64: 2048, 288>}, {pipeline_mode = #tpu.pipeline_mode<synchronous>, transform_indices = @transform_2, window_bounds = array<i64: 1, 32>}, {transform_indices = @transform_3, window_bounds = array<i64: 1, 8, 8, 32>}]} {
    %c0 = arith.constant 0 : index
    %c0_0 = arith.constant 0 : index
    %c0_1 = arith.constant 0 : index
    %0 = vector.load %arg1[%c0, %c0_0, %c0_1] : memref<1x64x2048xbf16, #tpu.memory_space<vmem>>, vector<1x64x2048xbf16>
    %1 = vector.shape_cast %0 : vector<1x64x2048xbf16> to vector<64x2048xbf16>
    %c0_2 = arith.constant 0 : index
    %c0_3 = arith.constant 0 : index
    %2 = vector.load %arg2[%c0_2, %c0_3] : memref<2048x288xbf16, #tpu.memory_space<vmem>>, vector<2048x288xbf16>
    %cst = arith.constant dense<0.000000e+00> : vector<64x288xf32>
    %3 = tpu.matmul %1, %2, %cst {dimension_numbers = #tpu.dot_dimension_numbers<[1], [0], [0], [1], [0, 0, 1, 1], [], []>} : vector<64x2048xbf16>, vector<2048x288xbf16>, vector<64x288xf32> -> vector<64x288xf32>
    %4 = vector.shape_cast %3 : vector<64x288xf32> to vector<8x8x288xf32>
    %cst_4 = arith.constant 0.000000e+00 : f32
    %5 = vector.broadcast %cst_4 : f32 to vector<10x10x32xf32>
    %c0_5 = arith.constant 0 : index
    %c0_6 = arith.constant 0 : index
    %c0_7 = arith.constant 0 : index
    %6 = vector.load %arg5[%c0_5, %c0_6, %c0_7] : memref<10x10x32xf32, #tpu.memory_space<vmem>>, vector<10x10x32xf32>
    tpu.vector_store %arg5[%c0_5, %c0_6, %c0_7], %5 {strides = array<i32>} : memref<10x10x32xf32, #tpu.memory_space<vmem>>, vector<10x10x32xf32>,
    %7 = vector.extract_strided_slice %4 {offsets = [0, 0, 0], sizes = [8, 8, 32], strides = [1, 1, 1]} : vector<8x8x288xf32> to vector<8x8x32xf32>
    %c2 = arith.constant 2 : index
    %c2_8 = arith.constant 2 : index
    %c0_9 = arith.constant 0 : index
    %8 = vector.load %arg5[%c2, %c2_8, %c0_9] : memref<10x10x32xf32, #tpu.memory_space<vmem>>, vector<8x8x32xf32>
    %9 = arith.addf %8, %7 : vector<8x8x32xf32>
    %c2_10 = arith.constant 2 : index
    %c2_11 = arith.constant 2 : index
    %c0_12 = arith.constant 0 : index
    %10 = vector.load %arg5[%c2_10, %c2_11, %c0_12] : memref<10x10x32xf32, #tpu.memory_space<vmem>>, vector<8x8x32xf32>
    tpu.vector_store %arg5[%c2_10, %c2_11, %c0_12], %9 {strides = array<i32>} : memref<10x10x32xf32, #tpu.memory_space<vmem>>, vector<8x8x32xf32>,
    %11 = vector.extract_strided_slice %4 {offsets = [0, 0, 32], sizes = [8, 8, 32], strides = [1, 1, 1]} : vector<8x8x288xf32> to vector<8x8x32xf32>
    %c2_13 = arith.constant 2 : index
    %c1 = arith.constant 1 : index
    %c0_14 = arith.constant 0 : index
    %12 = vector.load %arg5[%c2_13, %c1, %c0_14] : memref<10x10x32xf32, #tpu.memory_space<vmem>>, vector<8x8x32xf32>
    %13 = arith.addf %12, %11 : vector<8x8x32xf32>
    %c2_15 = arith.constant 2 : index
    %c1_16 = arith.constant 1 : index
    %c0_17 = arith.constant 0 : index
    %14 = vector.load %arg5[%c2_15, %c1_16, %c0_17] : memref<10x10x32xf32, #tpu.memory_space<vmem>>, vector<8x8x32xf32>
    tpu.vector_store %arg5[%c2_15, %c1_16, %c0_17], %13 {strides = array<i32>} : memref<10x10x32xf32, #tpu.memory_space<vmem>>, vector<8x8x32xf32>,
    %15 = vector.extract_strided_slice %4 {offsets = [0, 0, 64], sizes = [8, 8, 32], strides = [1, 1, 1]} : vector<8x8x288xf32> to vector<8x8x32xf32>
    %c2_18 = arith.constant 2 : index
    %c0_19 = arith.constant 0 : index
    %c0_20 = arith.constant 0 : index
    %16 = vector.load %arg5[%c2_18, %c0_19, %c0_20] : memref<10x10x32xf32, #tpu.memory_space<vmem>>, vector<8x8x32xf32>
    %17 = arith.addf %16, %15 : vector<8x8x32xf32>
    %c2_21 = arith.constant 2 : index
    %c0_22 = arith.constant 0 : index
    %c0_23 = arith.constant 0 : index
    %18 = vector.load %arg5[%c2_21, %c0_22, %c0_23] : memref<10x10x32xf32, #tpu.memory_space<vmem>>, vector<8x8x32xf32>
    tpu.vector_store %arg5[%c2_21, %c0_22, %c0_23], %17 {strides = array<i32>} : memref<10x10x32xf32, #tpu.memory_space<vmem>>, vector<8x8x32xf32>,
    %19 = vector.extract_strided_slice %4 {offsets = [0, 0, 96], sizes = [8, 8, 32], strides = [1, 1, 1]} : vector<8x8x288xf32> to vector<8x8x32xf32>
    %c1_24 = arith.constant 1 : index
    %c2_25 = arith.constant 2 : index
    %c0_26 = arith.constant 0 : index
    %20 = vector.load %arg5[%c1_24, %c2_25, %c0_26] : memref<10x10x32xf32, #tpu.memory_space<vmem>>, vector<8x8x32xf32>
    %21 = arith.addf %20, %19 : vector<8x8x32xf32>
    %c1_27 = arith.constant 1 : index
    %c2_28 = arith.constant 2 : index
    %c0_29 = arith.constant 0 : index
    %22 = vector.load %arg5[%c1_27, %c2_28, %c0_29] : memref<10x10x32xf32, #tpu.memory_space<vmem>>, vector<8x8x32xf32>
    tpu.vector_store %arg5[%c1_27, %c2_28, %c0_29], %21 {strides = array<i32>} : memref<10x10x32xf32, #tpu.memory_space<vmem>>, vector<8x8x32xf32>,
    %23 = vector.extract_strided_slice %4 {offsets = [0, 0, 128], sizes = [8, 8, 32], strides = [1, 1, 1]} : vector<8x8x288xf32> to vector<8x8x32xf32>
    %c1_30 = arith.constant 1 : index
    %c1_31 = arith.constant 1 : index
    %c0_32 = arith.constant 0 : index
    %24 = vector.load %arg5[%c1_30, %c1_31, %c0_32] : memref<10x10x32xf32, #tpu.memory_space<vmem>>, vector<8x8x32xf32>
    %25 = arith.addf %24, %23 : vector<8x8x32xf32>
    %c1_33 = arith.constant 1 : index
    %c1_34 = arith.constant 1 : index
    %c0_35 = arith.constant 0 : index
    %26 = vector.load %arg5[%c1_33, %c1_34, %c0_35] : memref<10x10x32xf32, #tpu.memory_space<vmem>>, vector<8x8x32xf32>
    tpu.vector_store %arg5[%c1_33, %c1_34, %c0_35], %25 {strides = array<i32>} : memref<10x10x32xf32, #tpu.memory_space<vmem>>, vector<8x8x32xf32>,
    %27 = vector.extract_strided_slice %4 {offsets = [0, 0, 160], sizes = [8, 8, 32], strides = [1, 1, 1]} : vector<8x8x288xf32> to vector<8x8x32xf32>
    %c1_36 = arith.constant 1 : index
    %c0_37 = arith.constant 0 : index
    %c0_38 = arith.constant 0 : index
    %28 = vector.load %arg5[%c1_36, %c0_37, %c0_38] : memref<10x10x32xf32, #tpu.memory_space<vmem>>, vector<8x8x32xf32>
    %29 = arith.addf %28, %27 : vector<8x8x32xf32>
    %c1_39 = arith.constant 1 : index
    %c0_40 = arith.constant 0 : index
    %c0_41 = arith.constant 0 : index
    %30 = vector.load %arg5[%c1_39, %c0_40, %c0_41] : memref<10x10x32xf32, #tpu.memory_space<vmem>>, vector<8x8x32xf32>
    tpu.vector_store %arg5[%c1_39, %c0_40, %c0_41], %29 {strides = array<i32>} : memref<10x10x32xf32, #tpu.memory_space<vmem>>, vector<8x8x32xf32>,
    %31 = vector.extract_strided_slice %4 {offsets = [0, 0, 192], sizes = [8, 8, 32], strides = [1, 1, 1]} : vector<8x8x288xf32> to vector<8x8x32xf32>
    %c0_42 = arith.constant 0 : index
    %c2_43 = arith.constant 2 : index
    %c0_44 = arith.constant 0 : index
    %32 = vector.load %arg5[%c0_42, %c2_43, %c0_44] : memref<10x10x32xf32, #tpu.memory_space<vmem>>, vector<8x8x32xf32>
    %33 = arith.addf %32, %31 : vector<8x8x32xf32>
    %c0_45 = arith.constant 0 : index
    %c2_46 = arith.constant 2 : index
    %c0_47 = arith.constant 0 : index
    %34 = vector.load %arg5[%c0_45, %c2_46, %c0_47] : memref<10x10x32xf32, #tpu.memory_space<vmem>>, vector<8x8x32xf32>
    tpu.vector_store %arg5[%c0_45, %c2_46, %c0_47], %33 {strides = array<i32>} : memref<10x10x32xf32, #tpu.memory_space<vmem>>, vector<8x8x32xf32>,
    %35 = vector.extract_strided_slice %4 {offsets = [0, 0, 224], sizes = [8, 8, 32], strides = [1, 1, 1]} : vector<8x8x288xf32> to vector<8x8x32xf32>
    %c0_48 = arith.constant 0 : index
    %c1_49 = arith.constant 1 : index
    %c0_50 = arith.constant 0 : index
    %36 = vector.load %arg5[%c0_48, %c1_49, %c0_50] : memref<10x10x32xf32, #tpu.memory_space<vmem>>, vector<8x8x32xf32>
    %37 = arith.addf %36, %35 : vector<8x8x32xf32>
    %c0_51 = arith.constant 0 : index
    %c1_52 = arith.constant 1 : index
    %c0_53 = arith.constant 0 : index
    %38 = vector.load %arg5[%c0_51, %c1_52, %c0_53] : memref<10x10x32xf32, #tpu.memory_space<vmem>>, vector<8x8x32xf32>
    tpu.vector_store %arg5[%c0_51, %c1_52, %c0_53], %37 {strides = array<i32>} : memref<10x10x32xf32, #tpu.memory_space<vmem>>, vector<8x8x32xf32>,
    %39 = vector.extract_strided_slice %4 {offsets = [0, 0, 256], sizes = [8, 8, 32], strides = [1, 1, 1]} : vector<8x8x288xf32> to vector<8x8x32xf32>
    %c0_54 = arith.constant 0 : index
    %c0_55 = arith.constant 0 : index
    %c0_56 = arith.constant 0 : index
    %40 = vector.load %arg5[%c0_54, %c0_55, %c0_56] : memref<10x10x32xf32, #tpu.memory_space<vmem>>, vector<8x8x32xf32>
    %41 = arith.addf %40, %39 : vector<8x8x32xf32>
    %c0_57 = arith.constant 0 : index
    %c0_58 = arith.constant 0 : index
    %c0_59 = arith.constant 0 : index
    %42 = vector.load %arg5[%c0_57, %c0_58, %c0_59] : memref<10x10x32xf32, #tpu.memory_space<vmem>>, vector<8x8x32xf32>
    tpu.vector_store %arg5[%c0_57, %c0_58, %c0_59], %41 {strides = array<i32>} : memref<10x10x32xf32, #tpu.memory_space<vmem>>, vector<8x8x32xf32>,
    %c1_60 = arith.constant 1 : index
    %c1_61 = arith.constant 1 : index
    %c0_62 = arith.constant 0 : index
    %43 = vector.load %arg5[%c1_60, %c1_61, %c0_62] : memref<10x10x32xf32, #tpu.memory_space<vmem>>, vector<8x8x32xf32>
    %c0_63 = arith.constant 0 : index
    %c0_64 = arith.constant 0 : index
    %44 = vector.load %arg3[%c0_63, %c0_64] : memref<1x32xf32, #tpu.memory_space<vmem>>, vector<1x32xf32>
    %45 = vector.shape_cast %44 : vector<1x32xf32> to vector<1x1x32xf32>
    %46 = vector.broadcast %45 : vector<1x1x32xf32> to vector<8x8x32xf32>
    %47 = arith.addf %43, %46 : vector<8x8x32xf32>
    %c0_65 = arith.constant 0 : index
    %c0_66 = arith.constant 0 : index
    %c0_67 = arith.constant 0 : index
    %c0_68 = arith.constant 0 : index
    %48 = vector.load %arg4[%c0_65, %c0_66, %c0_67, %c0_68] : memref<1x8x8x32xf32, #tpu.memory_space<vmem>>, vector<1x8x8x32xf32>
    %49 = vector.shape_cast %48 : vector<1x8x8x32xf32> to vector<8x8x32xf32>
    %50 = vector.shape_cast %47 : vector<8x8x32xf32> to vector<1x8x8x32xf32>
    tpu.vector_store %arg4[%c0_65, %c0_66, %c0_67, %c0_68], %50 {strides = array<i32>} : memref<1x8x8x32xf32, #tpu.memory_space<vmem>>, vector<1x8x8x32xf32>,
    return
  }
  func.func @transform_0(%arg0: i32) -> (i32, i32, i32) {
    %c0_i32 = arith.constant 0 : i32
    %c0_i32_0 = arith.constant 0 : i32
    %c0_i32_1 = arith.constant 0 : i32
    return %arg0, %c0_i32, %c0_i32_0 : i32, i32, i32
  }
  func.func @transform_1(%arg0: i32) -> (i32, i32) {
    %c0_i32 = arith.constant 0 : i32
    %c0_i32_0 = arith.constant 0 : i32
    %c0_i32_1 = arith.constant 0 : i32
    return %c0_i32, %c0_i32_0 : i32, i32
  }
  func.func @transform_2(%arg0: i32) -> (i32, i32) {
    %c0_i32 = arith.constant 0 : i32
    %c0_i32_0 = arith.constant 0 : i32
    %c0_i32_1 = arith.constant 0 : i32
    return %c0_i32, %c0_i32_0 : i32, i32
  }
  func.func @transform_3(%arg0: i32) -> (i32, i32, i32, i32) {
    %c0_i32 = arith.constant 0 : i32
    %c0_i32_0 = arith.constant 0 : i32
    %c0_i32_1 = arith.constant 0 : i32
    %c0_i32_2 = arith.constant 0 : i32
    return %arg0, %c0_i32, %c0_i32_0, %c0_i32_1 : i32, i32, i32, i32
  }
}

</mosaic_0001>

<llo_original>
// kernel: tpu_custom_call.1
$region0: #{tpu_custom_call.1}
  #allocation0 [shape = 'u32[]', space=smem, size = 0x4, offset = 0x4, fixed_abs, tag = 'smem constant byte address 0x4 - core index']
  #allocation1 [shape = 'u32[144,128]{1,0:T(1,128)}', space=vmem, size = 0x12000, scoped, tag = 'internal scratch']
  #allocation2 [shape = 'f32[10,10,32]{2,1,0:T(8,128)}', space=vmem, size = 0x14000, scoped, tag = 'scratch operand']
  %s0 = inlined_call_operand.vmem [shape: bf16[2,64,2048], index: 0, kind: input, shape index: {}]
  %s1 = inlined_call_operand.vmem [shape: bf16[2048,288], index: 1, kind: input, shape index: {}]
  %s2 = inlined_call_operand.vmem [shape: f32[1,32], index: 2, kind: input, shape index: {}]
  %s3 = inlined_call_operand.hbm [shape: f32[2,8,8,32], index: 3, kind: output, shape index: {}]
  %s4 = sld [smem:[#allocation0]]
  $region45: #{tpu_custom_call.1} parent=0
    _
  %s6 = ssub.s32 1, %s4
  %s7 = scalar_select 0, %s6, %s4
  $region1: #{tpu_custom_call.1} parent=0
    #allocation3 [shape = 'u8[65536]{0}', space=vmem, size = 0x10000, scoped, tag = 'output window, operand 0']
    #allocation4 [shape = 's32[2]{0}', space=sflag, size = 0x8, scoped, tag = 'scoped memory for tpu_custom_call.1']
    %8 = vsyncpa [#allocation4], 0
    %s9 = scalar_lea.sflag [#allocation4], 1
    %10 = vsyncpa %s9, 0
    loop: start=0, step=1, limit=4
    $region2: #{tpu_custom_call.1} parent=1 // loop_pre_header
      _
    $region3: #{tpu_custom_call.1} parent=1 // loop_header
      %s12 = sphi 0, %s16
      %p13 = scmp.ge.s32.totalorder %s12, 4
      %s22 = sphi 0, %s24
      %s25 = sphi 0, %s22
      %s26 = sphi 0, %s25
      %s42 = sphi 0, %s26
      %s46 = sphi 0, %s46
      %s48 = sphi 0, %s46
      %s49 = sphi 0, %s48
      %s63 = sphi 0, %s49
      %s67 = sphi 0, %s67
      %s69 = sphi 0, %s67
      %s70 = sphi 0, %s69
      %s84 = sphi 0, %s70
      %s90 = sphi 0, %s92
      %s93 = sphi 0, %s90
      %s94 = sphi 0, %s93
      %s110 = sphi 0, %s94
    $region4: #{tpu_custom_call.1} parent=1 // loop_header_branch
      %15 = sbr.rel (%p13) target = $region8
    $region5: #{tpu_custom_call.1} parent=1 // loop_body
      %s17 = ssub.s32 %s12, 1
      %s18 = ssub.s32 %s12, 2
      %s19 = sadd.s32 %s12, 1
      %s20 = ssub.s32 %s12, %s19
      %p21 = scmp.eq.s32.totalorder %s20, 0
      %s23 = sadd.s32 %s22, 1
      %s24 = scalar_select %p21, %s22, %s23
      %p27 = pneg %p21
      %p28 = scmp.eq.s32.totalorder %s12, 1
      %p29 = por %p27, %p28
      %p30 = scmp.ne.s32.totalorder %s22, %s25
      %p31 = scmp.eq.s32.totalorder %s12, 0
      %p32 = por %p30, %p31
      %p33 = scmp.ne.s32.totalorder %s22, %s25
      %p34 = scmp.eq.s32.totalorder %s17, 1
      %p35 = por %p33, %p34
      %p36 = scmp.ne.s32.totalorder %s25, %s26
      %p37 = scmp.eq.s32.totalorder %s17, 0
      %p38 = por %p36, %p37
      %p39 = scmp.ne.s32.totalorder %s25, %s26
      %p40 = scmp.eq.s32.totalorder %s18, 1
      %p41 = por %p39, %p40
      %p43 = scmp.ne.s32.totalorder %s26, %s42
      %p44 = scmp.eq.s32.totalorder %s18, 0
      %p45 = por %p43, %p44
      %s47 = sadd.s32 %s46, 1
      %p50 = scmp.eq.s32.totalorder %s12, 1
      %p51 = scmp.ne.s32.totalorder %s46, %s48
      %p52 = scmp.eq.s32.totalorder %s12, 0
      %p53 = por %p51, %p52
      %p54 = scmp.ne.s32.totalorder %s46, %s48
      %p55 = scmp.eq.s32.totalorder %s17, 1
      %p56 = por %p54, %p55
      %p57 = scmp.ne.s32.totalorder %s48, %s49
      %p58 = scmp.eq.s32.totalorder %s17, 0
      %p59 = por %p57, %p58
      %p60 = scmp.ne.s32.totalorder %s48, %s49
      %p61 = scmp.eq.s32.totalorder %s18, 1
      %p62 = por %p60, %p61
      %p64 = scmp.ne.s32.totalorder %s49, %s63
      %p65 = scmp.eq.s32.totalorder %s18, 0
      %p66 = por %p64, %p65
      %s68 = sadd.s32 %s67, 1
      %p71 = scmp.eq.s32.totalorder %s12, 1
      %p72 = scmp.ne.s32.totalorder %s67, %s69
      %p73 = scmp.eq.s32.totalorder %s12, 0
      %p74 = por %p72, %p73
      %p75 = scmp.ne.s32.totalorder %s67, %s69
      %p76 = scmp.eq.s32.totalorder %s17, 1
      %p77 = por %p75, %p76
      %p78 = scmp.ne.s32.totalorder %s69, %s70
      %p79 = scmp.eq.s32.totalorder %s17, 0
      %p80 = por %p78, %p79
      %p81 = scmp.ne.s32.totalorder %s69, %s70
      %p82 = scmp.eq.s32.totalorder %s18, 1
      %p83 = por %p81, %p82
      %p85 = scmp.ne.s32.totalorder %s70, %s84
      %p86 = scmp.eq.s32.totalorder %s18, 0
      %p87 = por %p85, %p86
      %s88 = ssub.s32 %s12, %s19
      %p89 = scmp.eq.s32.totalorder %s88, 0
      %s91 = sadd.s32 %s90, 1
      %s92 = scalar_select %p89, %s90, %s91
      %p95 = pneg %p89
      %p96 = scmp.eq.s32.totalorder %s12, 1
      %p97 = por %p95, %p96
      %p98 = scmp.ne.s32.totalorder %s90, %s93
      %p99 = scmp.eq.s32.totalorder %s12, 0
      %p100 = por %p98, %p99
      %p101 = scmp.ne.s32.totalorder %s90, %s93
      %p102 = scmp.eq.s32.totalorder %s17, 1
      %p103 = por %p101, %p102
      %p104 = scmp.ne.s32.totalorder %s93, %s94
      %p105 = scmp.eq.s32.totalorder %s17, 0
      %p106 = por %p104, %p105
      %p107 = scmp.ne.s32.totalorder %s93, %s94
      %p108 = scmp.eq.s32.totalorder %s18, 1
      %p109 = por %p107, %p108
      %p111 = scmp.ne.s32.totalorder %s94, %s110
      %p112 = scmp.eq.s32.totalorder %s18, 0
      %p113 = por %p111, %p112
      %p114 = scmp.le.s32.totalorder 1, %s12
      %p115 = scmp.lt.s32.totalorder %s12, 3
      %p116 = pnand %p114, %p115
      %p117 = pneg %p116
      // Predicated region
      $region9: #{tpu_custom_call.1} parent=5 // pred_check
        _
      $region10: #{tpu_custom_call.1} parent=5 // pred_check_branch
        %119 = sbr.rel (%p116) target = $region12
      $region11: #{tpu_custom_call.1} parent=5 // pred_region
        %s120 = ssub.s32 %s12, 1
        // Predicated region
        $region13: #{tpu_custom_call.1} parent=11 // pred_check
          %p121 = pneg %p59
        $region14: #{tpu_custom_call.1} parent=11 // pred_check_branch
          %123 = sbr.rel (%p121) target = $region16
        $region15: #{tpu_custom_call.1} parent=11 // pred_region
          _
        $region16: #{tpu_custom_call.1} parent=11 // pred_fallthru
          _
        // Predicated region
        $region17: #{tpu_custom_call.1} parent=11 // pred_check
          %p124 = pneg %p80
        $region18: #{tpu_custom_call.1} parent=11 // pred_check_branch
          %126 = sbr.rel (%p124) target = $region20
        $region19: #{tpu_custom_call.1} parent=11 // pred_region
          _
        $region20: #{tpu_custom_call.1} parent=11 // pred_fallthru
          _
      $region12: #{tpu_custom_call.1} parent=5 // pred_fallthru
        _
      %p127 = scmp.lt.s32.totalorder %s12, 2
      // Predicated region
      $region21: #{tpu_custom_call.1} parent=5 // pred_check
        %p128 = pneg %p127
      $region22: #{tpu_custom_call.1} parent=5 // pred_check_branch
        %130 = sbr.rel (%p128) target = $region24
      $region23: #{tpu_custom_call.1} parent=5 // pred_region
        // Predicated region
        $region25: #{tpu_custom_call.1} parent=23 // pred_check
          %p131 = pneg %p32
        $region26: #{tpu_custom_call.1} parent=23 // pred_check_branch
          %133 = sbr.rel (%p131) target = $region28
        $region27: #{tpu_custom_call.1} parent=23 // pred_region
          %p134 = scmp.lt.s32.totalorder %s12, 1
          %s135 = scalar_select %p134, %s12, 1
          %s136 = smul.addr %s135, 128
          %s137 = smul.addr %s136, 4
          %s138 = scalar_lea.vmem %s0, %s137
        $region28: #{tpu_custom_call.1} parent=23 // pred_fallthru
          _
      $region24: #{tpu_custom_call.1} parent=5 // pred_fallthru
        _
      %p139 = scmp.le.s32.totalorder 1, %s12
      %p140 = scmp.lt.s32.totalorder %s12, 3
      %p141 = pnand %p139, %p140
      %p142 = pneg %p141
      // Predicated region
      $region29: #{tpu_custom_call.1} parent=5 // pred_check
        _
      $region30: #{tpu_custom_call.1} parent=5 // pred_check_branch
        %144 = sbr.rel (%p141) target = $region32
      $region31: #{tpu_custom_call.1} parent=5 // pred_region
        %s145 = ssub.s32 %s12, 1
        %p146 = scmp.lt.s32.totalorder %s17, 1
        %s147 = scalar_select %p146, %s17, 1
        %s148 = smul.addr %s147, 128
        %s149 = smul.addr %s148, 4
        %s150 = scalar_lea.vmem %s0, %s149
        %p151 = pneg %p38
        %p152 = pneg %p35
        %p153 = pneg %p59
        %p154 = pneg %p56
        %p155 = pneg %p80
        %p156 = pneg %p77
        %p157 = pneg %p106
        %p158 = pneg %p103
        %s159 = sand.u32 %s93, 1
        %s160 = scalar_lea.sflag [#allocation4], %s159
        %s161 = sand.u32 %s93, 1
        %s162 = smul.addr %s161, 64
        %s163 = scalar_lea.vmem [#allocation3], %s162
        %p164 = scmp.lt.s32.totalorder %s17, 1
        %s165 = scalar_select %p164, %s17, 1
        %s166 = smul.addr %s165, 128
        %s167 = smul.addr %s166, 4
        %s168 = scalar_lea.vmem %s0, %s167
        %v170 = vld [vmem:[%s168] sm:$0xff]
        %v171 = vld [vmem:[%s168 + $0x8] sm:$0xff]
        %v172 = vld [vmem:[%s168 + $0x10] sm:$0xff]
        %v173 = vld [vmem:[%s168 + $0x18] sm:$0xff]
        %v174 = vld [vmem:[%s168 + $0x20] sm:$0xff]
        %v175 = vld [vmem:[%s168 + $0x28] sm:$0xff]
        %v176 = vld [vmem:[%s168 + $0x30] sm:$0xff]
        %v177 = vld [vmem:[%s168 + $0x38] sm:$0xff]
        %v178 = vld [vmem:[%s168 + $0x40] sm:$0xff]
        %v179 = vld [vmem:[%s168 + $0x48] sm:$0xff]
        %v180 = vld [vmem:[%s168 + $0x50] sm:$0xff]
        %v181 = vld [vmem:[%s168 + $0x58] sm:$0xff]
        %v182 = vld [vmem:[%s168 + $0x60] sm:$0xff]
        %v183 = vld [vmem:[%s168 + $0x68] sm:$0xff]
        %v184 = vld [vmem:[%s168 + $0x70] sm:$0xff]
        %v185 = vld [vmem:[%s168 + $0x78] sm:$0xff]
        %v186 = vld [vmem:[%s168 + $0x80] sm:$0xff]
        %v187 = vld [vmem:[%s168 + $0x88] sm:$0xff]
        %v188 = vld [vmem:[%s168 + $0x90] sm:$0xff]
        %v189 = vld [vmem:[%s168 + $0x98] sm:$0xff]
        %v190 = vld [vmem:[%s168 + $0xa0] sm:$0xff]
        %v191 = vld [vmem:[%s168 + $0xa8] sm:$0xff]
        %v192 = vld [vmem:[%s168 + $0xb0] sm:$0xff]
        %v193 = vld [vmem:[%s168 + $0xb8] sm:$0xff]
        %v194 = vld [vmem:[%s168 + $0xc0] sm:$0xff]
        %v195 = vld [vmem:[%s168 + $0xc8] sm:$0xff]
        %v196 = vld [vmem:[%s168 + $0xd0] sm:$0xff]
        %v197 = vld [vmem:[%s168 + $0xd8] sm:$0xff]
        %v198 = vld [vmem:[%s168 + $0xe0] sm:$0xff]
        %v199 = vld [vmem:[%s168 + $0xe8] sm:$0xff]
        %v200 = vld [vmem:[%s168 + $0xf0] sm:$0xff]
        %v201 = vld [vmem:[%s168 + $0xf8] sm:$0xff]
        %v202 = vld [vmem:[%s168 + $0x100] sm:$0xff]
        %v203 = vld [vmem:[%s168 + $0x108] sm:$0xff]
        %v204 = vld [vmem:[%s168 + $0x110] sm:$0xff]
        %v205 = vld [vmem:[%s168 + $0x118] sm:$0xff]
        %v206 = vld [vmem:[%s168 + $0x120] sm:$0xff]
        %v207 = vld [vmem:[%s168 + $0x128] sm:$0xff]
        %v208 = vld [vmem:[%s168 + $0x130] sm:$0xff]
        %v209 = vld [vmem:[%s168 + $0x138] sm:$0xff]
        %v210 = vld [vmem:[%s168 + $0x140] sm:$0xff]
        %v211 = vld [vmem:[%s168 + $0x148] sm:$0xff]
        %v212 = vld [vmem:[%s168 + $0x150] sm:$0xff]
        %v213 = vld [vmem:[%s168 + $0x158] sm:$0xff]
        %v214 = vld [vmem:[%s168 + $0x160] sm:$0xff]
        %v215 = vld [vmem:[%s168 + $0x168] sm:$0xff]
        %v216 = vld [vmem:[%s168 + $0x170] sm:$0xff]
        %v217 = vld [vmem:[%s168 + $0x178] sm:$0xff]
        %v218 = vld [vmem:[%s168 + $0x180] sm:$0xff]
        %v219 = vld [vmem:[%s168 + $0x188] sm:$0xff]
        %v220 = vld [vmem:[%s168 + $0x190] sm:$0xff]
        %v221 = vld [vmem:[%s168 + $0x198] sm:$0xff]
        %v222 = vld [vmem:[%s168 + $0x1a0] sm:$0xff]
        %v223 = vld [vmem:[%s168 + $0x1a8] sm:$0xff]
        %v224 = vld [vmem:[%s168 + $0x1b0] sm:$0xff]
        %v225 = vld [vmem:[%s168 + $0x1b8] sm:$0xff]
        %v226 = vld [vmem:[%s168 + $0x1c0] sm:$0xff]
        %v227 = vld [vmem:[%s168 + $0x1c8] sm:$0xff]
        %v228 = vld [vmem:[%s168 + $0x1d0] sm:$0xff]
        %v229 = vld [vmem:[%s168 + $0x1d8] sm:$0xff]
        %v230 = vld [vmem:[%s168 + $0x1e0] sm:$0xff]
        %v231 = vld [vmem:[%s168 + $0x1e8] sm:$0xff]
        %v232 = vld [vmem:[%s168 + $0x1f0] sm:$0xff]
        %v233 = vld [vmem:[%s168 + $0x1f8] sm:$0xff]
        %v234 = vld [vmem:[%s1] sm:$0xff]
        %v235 = vld [vmem:[%s1 + $0x8] sm:$0xf]
        %v236 = vld [vmem:[%s1 + $0xc] sm:$0xff]
        %v237 = vld [vmem:[%s1 + $0x14] sm:$0xf]
        %v238 = vld [vmem:[%s1 + $0x18] sm:$0xff]
        %v239 = vld [vmem:[%s1 + $0x20] sm:$0xf]
        %v240 = vld [vmem:[%s1 + $0x24] sm:$0xff]
        %v241 = vld [vmem:[%s1 + $0x2c] sm:$0xf]
        %v242 = vld [vmem:[%s1 + $0x30] sm:$0xff]
        %v243 = vld [vmem:[%s1 + $0x38] sm:$0xf]
        %v244 = vld [vmem:[%s1 + $0x3c] sm:$0xff]
        %v245 = vld [vmem:[%s1 + $0x44] sm:$0xf]
        %v246 = vld [vmem:[%s1 + $0x48] sm:$0xff]
        %v247 = vld [vmem:[%s1 + $0x50] sm:$0xf]
        %v248 = vld [vmem:[%s1 + $0x54] sm:$0xff]
        %v249 = vld [vmem:[%s1 + $0x5c] sm:$0xf]
        %v250 = vld [vmem:[%s1 + $0x60] sm:$0xff]
        %v251 = vld [vmem:[%s1 + $0x68] sm:$0xf]
        %v252 = vld [vmem:[%s1 + $0x6c] sm:$0xff]
        %v253 = vld [vmem:[%s1 + $0x74] sm:$0xf]
        %v254 = vld [vmem:[%s1 + $0x78] sm:$0xff]
        %v255 = vld [vmem:[%s1 + $0x80] sm:$0xf]
        %v256 = vld [vmem:[%s1 + $0x84] sm:$0xff]
        %v257 = vld [vmem:[%s1 + $0x8c] sm:$0xf]
        %v258 = vld [vmem:[%s1 + $0x90] sm:$0xff]
        %v259 = vld [vmem:[%s1 + $0x98] sm:$0xf]
        %v260 = vld [vmem:[%s1 + $0x9c] sm:$0xff]
        %v261 = vld [vmem:[%s1 + $0xa4] sm:$0xf]
        %v262 = vld [vmem:[%s1 + $0xa8] sm:$0xff]
        %v263 = vld [vmem:[%s1 + $0xb0] sm:$0xf]
        %v264 = vld [vmem:[%s1 + $0xb4] sm:$0xff]
        %v265 = vld [vmem:[%s1 + $0xbc] sm:$0xf]
        %v266 = vld [vmem:[%s1 + $0xc0] sm:$0xff]
        %v267 = vld [vmem:[%s1 + $0xc8] sm:$0xf]
        %v268 = vld [vmem:[%s1 + $0xcc] sm:$0xff]
        %v269 = vld [vmem:[%s1 + $0xd4] sm:$0xf]
        %v270 = vld [vmem:[%s1 + $0xd8] sm:$0xff]
        %v271 = vld [vmem:[%s1 + $0xe0] sm:$0xf]
        %v272 = vld [vmem:[%s1 + $0xe4] sm:$0xff]
        %v273 = vld [vmem:[%s1 + $0xec] sm:$0xf]
        %v274 = vld [vmem:[%s1 + $0xf0] sm:$0xff]
        %v275 = vld [vmem:[%s1 + $0xf8] sm:$0xf]
        %v276 = vld [vmem:[%s1 + $0xfc] sm:$0xff]
        %v277 = vld [vmem:[%s1 + $0x104] sm:$0xf]
        %v278 = vld [vmem:[%s1 + $0x108] sm:$0xff]
        %v279 = vld [vmem:[%s1 + $0x110] sm:$0xf]
        %v280 = vld [vmem:[%s1 + $0x114] sm:$0xff]
        %v281 = vld [vmem:[%s1 + $0x11c] sm:$0xf]
        %v282 = vld [vmem:[%s1 + $0x120] sm:$0xff]
        %v283 = vld [vmem:[%s1 + $0x128] sm:$0xf]
        %v284 = vld [vmem:[%s1 + $0x12c] sm:$0xff]
        %v285 = vld [vmem:[%s1 + $0x134] sm:$0xf]
        %v286 = vld [vmem:[%s1 + $0x138] sm:$0xff]
        %v287 = vld [vmem:[%s1 + $0x140] sm:$0xf]
        %v288 = vld [vmem:[%s1 + $0x144] sm:$0xff]
        %v289 = vld [vmem:[%s1 + $0x14c] sm:$0xf]
        %v290 = vld [vmem:[%s1 + $0x150] sm:$0xff]
        %v291 = vld [vmem:[%s1 + $0x158] sm:$0xf]
        %v292 = vld [vmem:[%s1 + $0x15c] sm:$0xff]
        %v293 = vld [vmem:[%s1 + $0x164] sm:$0xf]
        %v294 = vld [vmem:[%s1 + $0x168] sm:$0xff]
        %v295 = vld [vmem:[%s1 + $0x170] sm:$0xf]
        %v296 = vld [vmem:[%s1 + $0x174] sm:$0xff]
        %v297 = vld [vmem:[%s1 + $0x17c] sm:$0xf]
        %v298 = vld [vmem:[%s1 + $0x180] sm:$0xff]
        %v299 = vld [vmem:[%s1 + $0x188] sm:$0xf]
        %v300 = vld [vmem:[%s1 + $0x18c] sm:$0xff]
        %v301 = vld [vmem:[%s1 + $0x194] sm:$0xf]
        %v302 = vld [vmem:[%s1 + $0x198] sm:$0xff]
        %v303 = vld [vmem:[%s1 + $0x1a0] sm:$0xf]
        %v304 = vld [vmem:[%s1 + $0x1a4] sm:$0xff]
        %v305 = vld [vmem:[%s1 + $0x1ac] sm:$0xf]
        %v306 = vld [vmem:[%s1 + $0x1b0] sm:$0xff]
        %v307 = vld [vmem:[%s1 + $0x1b8] sm:$0xf]
        %v308 = vld [vmem:[%s1 + $0x1bc] sm:$0xff]
        %v309 = vld [vmem:[%s1 + $0x1c4] sm:$0xf]
        %v310 = vld [vmem:[%s1 + $0x1c8] sm:$0xff]
        %v311 = vld [vmem:[%s1 + $0x1d0] sm:$0xf]
        %v312 = vld [vmem:[%s1 + $0x1d4] sm:$0xff]
        %v313 = vld [vmem:[%s1 + $0x1dc] sm:$0xf]
        %v314 = vld [vmem:[%s1 + $0x1e0] sm:$0xff]
        %v315 = vld [vmem:[%s1 + $0x1e8] sm:$0xf]
        %v316 = vld [vmem:[%s1 + $0x1ec] sm:$0xff]
        %v317 = vld [vmem:[%s1 + $0x1f4] sm:$0xf]
        %v318 = vld [vmem:[%s1 + $0x1f8] sm:$0xff]
        %v319 = vld [vmem:[%s1 + $0x200] sm:$0xf]
        %v320 = vld [vmem:[%s1 + $0x204] sm:$0xff]
        %v321 = vld [vmem:[%s1 + $0x20c] sm:$0xf]
        %v322 = vld [vmem:[%s1 + $0x210] sm:$0xff]
        %v323 = vld [vmem:[%s1 + $0x218] sm:$0xf]
        %v324 = vld [vmem:[%s1 + $0x21c] sm:$0xff]
        %v325 = vld [vmem:[%s1 + $0x224] sm:$0xf]
        %v326 = vld [vmem:[%s1 + $0x228] sm:$0xff]
        %v327 = vld [vmem:[%s1 + $0x230] sm:$0xf]
        %v328 = vld [vmem:[%s1 + $0x234] sm:$0xff]
        %v329 = vld [vmem:[%s1 + $0x23c] sm:$0xf]
        %v330 = vld [vmem:[%s1 + $0x240] sm:$0xff]
        %v331 = vld [vmem:[%s1 + $0x248] sm:$0xf]
        %v332 = vld [vmem:[%s1 + $0x24c] sm:$0xff]
        %v333 = vld [vmem:[%s1 + $0x254] sm:$0xf]
        %v334 = vld [vmem:[%s1 + $0x258] sm:$0xff]
        %v335 = vld [vmem:[%s1 + $0x260] sm:$0xf]
        %v336 = vld [vmem:[%s1 + $0x264] sm:$0xff]
        %v337 = vld [vmem:[%s1 + $0x26c] sm:$0xf]
        %v338 = vld [vmem:[%s1 + $0x270] sm:$0xff]
        %v339 = vld [vmem:[%s1 + $0x278] sm:$0xf]
        %v340 = vld [vmem:[%s1 + $0x27c] sm:$0xff]
        %v341 = vld [vmem:[%s1 + $0x284] sm:$0xf]
        %v342 = vld [vmem:[%s1 + $0x288] sm:$0xff]
        %v343 = vld [vmem:[%s1 + $0x290] sm:$0xf]
        %v344 = vld [vmem:[%s1 + $0x294] sm:$0xff]
        %v345 = vld [vmem:[%s1 + $0x29c] sm:$0xf]
        %v346 = vld [vmem:[%s1 + $0x2a0] sm:$0xff]
        %v347 = vld [vmem:[%s1 + $0x2a8] sm:$0xf]
        %v348 = vld [vmem:[%s1 + $0x2ac] sm:$0xff]
        %v349 = vld [vmem:[%s1 + $0x2b4] sm:$0xf]
        %v350 = vld [vmem:[%s1 + $0x2b8] sm:$0xff]
        %v351 = vld [vmem:[%s1 + $0x2c0] sm:$0xf]
        %v352 = vld [vmem:[%s1 + $0x2c4] sm:$0xff]
        %v353 = vld [vmem:[%s1 + $0x2cc] sm:$0xf]
        %v354 = vld [vmem:[%s1 + $0x2d0] sm:$0xff]
        %v355 = vld [vmem:[%s1 + $0x2d8] sm:$0xf]
        %v356 = vld [vmem:[%s1 + $0x2dc] sm:$0xff]
        %v357 = vld [vmem:[%s1 + $0x2e4] sm:$0xf]
        %v358 = vld [vmem:[%s1 + $0x2e8] sm:$0xff]
        %v359 = vld [vmem:[%s1 + $0x2f0] sm:$0xf]
        %v360 = vld [vmem:[%s1 + $0x2f4] sm:$0xff]
        %v361 = vld [vmem:[%s1 + $0x2fc] sm:$0xf]
        %v362 = vld [vmem:[%s1 + $0x300] sm:$0xff]
        %v363 = vld [vmem:[%s1 + $0x308] sm:$0xf]
        %v364 = vld [vmem:[%s1 + $0x30c] sm:$0xff]
        %v365 = vld [vmem:[%s1 + $0x314] sm:$0xf]
        %v366 = vld [vmem:[%s1 + $0x318] sm:$0xff]
        %v367 = vld [vmem:[%s1 + $0x320] sm:$0xf]
        %v368 = vld [vmem:[%s1 + $0x324] sm:$0xff]
        %v369 = vld [vmem:[%s1 + $0x32c] sm:$0xf]
        %v370 = vld [vmem:[%s1 + $0x330] sm:$0xff]
        %v371 = vld [vmem:[%s1 + $0x338] sm:$0xf]
        %v372 = vld [vmem:[%s1 + $0x33c] sm:$0xff]
        %v373 = vld [vmem:[%s1 + $0x344] sm:$0xf]
        %v374 = vld [vmem:[%s1 + $0x348] sm:$0xff]
        %v375 = vld [vmem:[%s1 + $0x350] sm:$0xf]
        %v376 = vld [vmem:[%s1 + $0x354] sm:$0xff]
        %v377 = vld [vmem:[%s1 + $0x35c] sm:$0xf]
        %v378 = vld [vmem:[%s1 + $0x360] sm:$0xff]
        %v379 = vld [vmem:[%s1 + $0x368] sm:$0xf]
        %v380 = vld [vmem:[%s1 + $0x36c] sm:$0xff]
        %v381 = vld [vmem:[%s1 + $0x374] sm:$0xf]
        %v382 = vld [vmem:[%s1 + $0x378] sm:$0xff]
        %v383 = vld [vmem:[%s1 + $0x380] sm:$0xf]
        %v384 = vld [vmem:[%s1 + $0x384] sm:$0xff]
        %v385 = vld [vmem:[%s1 + $0x38c] sm:$0xf]
        %v386 = vld [vmem:[%s1 + $0x390] sm:$0xff]
        %v387 = vld [vmem:[%s1 + $0x398] sm:$0xf]
        %v388 = vld [vmem:[%s1 + $0x39c] sm:$0xff]
        %v389 = vld [vmem:[%s1 + $0x3a4] sm:$0xf]
        %v390 = vld [vmem:[%s1 + $0x3a8] sm:$0xff]
        %v391 = vld [vmem:[%s1 + $0x3b0] sm:$0xf]
        %v392 = vld [vmem:[%s1 + $0x3b4] sm:$0xff]
        %v393 = vld [vmem:[%s1 + $0x3bc] sm:$0xf]
        %v394 = vld [vmem:[%s1 + $0x3c0] sm:$0xff]
        %v395 = vld [vmem:[%s1 + $0x3c8] sm:$0xf]
        %v396 = vld [vmem:[%s1 + $0x3cc] sm:$0xff]
        %v397 = vld [vmem:[%s1 + $0x3d4] sm:$0xf]
        %v398 = vld [vmem:[%s1 + $0x3d8] sm:$0xff]
        %v399 = vld [vmem:[%s1 + $0x3e0] sm:$0xf]
        %v400 = vld [vmem:[%s1 + $0x3e4] sm:$0xff]
        %v401 = vld [vmem:[%s1 + $0x3ec] sm:$0xf]
        %v402 = vld [vmem:[%s1 + $0x3f0] sm:$0xff]
        %v403 = vld [vmem:[%s1 + $0x3f8] sm:$0xf]
        %v404 = vld [vmem:[%s1 + $0x3fc] sm:$0xff]
        %v405 = vld [vmem:[%s1 + $0x404] sm:$0xf]
        %v406 = vld [vmem:[%s1 + $0x408] sm:$0xff]
        %v407 = vld [vmem:[%s1 + $0x410] sm:$0xf]
        %v408 = vld [vmem:[%s1 + $0x414] sm:$0xff]
        %v409 = vld [vmem:[%s1 + $0x41c] sm:$0xf]
        %v410 = vld [vmem:[%s1 + $0x420] sm:$0xff]
        %v411 = vld [vmem:[%s1 + $0x428] sm:$0xf]
        %v412 = vld [vmem:[%s1 + $0x42c] sm:$0xff]
        %v413 = vld [vmem:[%s1 + $0x434] sm:$0xf]
        %v414 = vld [vmem:[%s1 + $0x438] sm:$0xff]
        %v415 = vld [vmem:[%s1 + $0x440] sm:$0xf]
        %v416 = vld [vmem:[%s1 + $0x444] sm:$0xff]
        %v417 = vld [vmem:[%s1 + $0x44c] sm:$0xf]
        %v418 = vld [vmem:[%s1 + $0x450] sm:$0xff]
        %v419 = vld [vmem:[%s1 + $0x458] sm:$0xf]
        %v420 = vld [vmem:[%s1 + $0x45c] sm:$0xff]
        %v421 = vld [vmem:[%s1 + $0x464] sm:$0xf]
        %v422 = vld [vmem:[%s1 + $0x468] sm:$0xff]
        %v423 = vld [vmem:[%s1 + $0x470] sm:$0xf]
        %v424 = vld [vmem:[%s1 + $0x474] sm:$0xff]
        %v425 = vld [vmem:[%s1 + $0x47c] sm:$0xf]
        %v426 = vld [vmem:[%s1 + $0x480] sm:$0xff]
        %v427 = vld [vmem:[%s1 + $0x488] sm:$0xf]
        %v428 = vld [vmem:[%s1 + $0x48c] sm:$0xff]
        %v429 = vld [vmem:[%s1 + $0x494] sm:$0xf]
        %v430 = vld [vmem:[%s1 + $0x498] sm:$0xff]
        %v431 = vld [vmem:[%s1 + $0x4a0] sm:$0xf]
        %v432 = vld [vmem:[%s1 + $0x4a4] sm:$0xff]
        %v433 = vld [vmem:[%s1 + $0x4ac] sm:$0xf]
        %v434 = vld [vmem:[%s1 + $0x4b0] sm:$0xff]
        %v435 = vld [vmem:[%s1 + $0x4b8] sm:$0xf]
        %v436 = vld [vmem:[%s1 + $0x4bc] sm:$0xff]
        %v437 = vld [vmem:[%s1 + $0x4c4] sm:$0xf]
        %v438 = vld [vmem:[%s1 + $0x4c8] sm:$0xff]
        %v439 = vld [vmem:[%s1 + $0x4d0] sm:$0xf]
        %v440 = vld [vmem:[%s1 + $0x4d4] sm:$0xff]
        %v441 = vld [vmem:[%s1 + $0x4dc] sm:$0xf]
        %v442 = vld [vmem:[%s1 + $0x4e0] sm:$0xff]
        %v443 = vld [vmem:[%s1 + $0x4e8] sm:$0xf]
        %v444 = vld [vmem:[%s1 + $0x4ec] sm:$0xff]
        %v445 = vld [vmem:[%s1 + $0x4f4] sm:$0xf]
        %v446 = vld [vmem:[%s1 + $0x4f8] sm:$0xff]
        %v447 = vld [vmem:[%s1 + $0x500] sm:$0xf]
        %v448 = vld [vmem:[%s1 + $0x504] sm:$0xff]
        %v449 = vld [vmem:[%s1 + $0x50c] sm:$0xf]
        %v450 = vld [vmem:[%s1 + $0x510] sm:$0xff]
        %v451 = vld [vmem:[%s1 + $0x518] sm:$0xf]
        %v452 = vld [vmem:[%s1 + $0x51c] sm:$0xff]
        %v453 = vld [vmem:[%s1 + $0x524] sm:$0xf]
        %v454 = vld [vmem:[%s1 + $0x528] sm:$0xff]
        %v455 = vld [vmem:[%s1 + $0x530] sm:$0xf]
        %v456 = vld [vmem:[%s1 + $0x534] sm:$0xff]
        %v457 = vld [vmem:[%s1 + $0x53c] sm:$0xf]
        %v458 = vld [vmem:[%s1 + $0x540] sm:$0xff]
        %v459 = vld [vmem:[%s1 + $0x548] sm:$0xf]
        %v460 = vld [vmem:[%s1 + $0x54c] sm:$0xff]
        %v461 = vld [vmem:[%s1 + $0x554] sm:$0xf]
        %v462 = vld [vmem:[%s1 + $0x558] sm:$0xff]
        %v463 = vld [vmem:[%s1 + $0x560] sm:$0xf]
        %v464 = vld [vmem:[%s1 + $0x564] sm:$0xff]
        %v465 = vld [vmem:[%s1 + $0x56c] sm:$0xf]
        %v466 = vld [vmem:[%s1 + $0x570] sm:$0xff]
        %v467 = vld [vmem:[%s1 + $0x578] sm:$0xf]
        %v468 = vld [vmem:[%s1 + $0x57c] sm:$0xff]
        %v469 = vld [vmem:[%s1 + $0x584] sm:$0xf]
        %v470 = vld [vmem:[%s1 + $0x588] sm:$0xff]
        %v471 = vld [vmem:[%s1 + $0x590] sm:$0xf]
        %v472 = vld [vmem:[%s1 + $0x594] sm:$0xff]
        %v473 = vld [vmem:[%s1 + $0x59c] sm:$0xf]
        %v474 = vld [vmem:[%s1 + $0x5a0] sm:$0xff]
        %v475 = vld [vmem:[%s1 + $0x5a8] sm:$0xf]
        %v476 = vld [vmem:[%s1 + $0x5ac] sm:$0xff]
        %v477 = vld [vmem:[%s1 + $0x5b4] sm:$0xf]
        %v478 = vld [vmem:[%s1 + $0x5b8] sm:$0xff]
        %v479 = vld [vmem:[%s1 + $0x5c0] sm:$0xf]
        %v480 = vld [vmem:[%s1 + $0x5c4] sm:$0xff]
        %v481 = vld [vmem:[%s1 + $0x5cc] sm:$0xf]
        %v482 = vld [vmem:[%s1 + $0x5d0] sm:$0xff]
        %v483 = vld [vmem:[%s1 + $0x5d8] sm:$0xf]
        %v484 = vld [vmem:[%s1 + $0x5dc] sm:$0xff]
        %v485 = vld [vmem:[%s1 + $0x5e4] sm:$0xf]
        %v486 = vld [vmem:[%s1 + $0x5e8] sm:$0xff]
        %v487 = vld [vmem:[%s1 + $0x5f0] sm:$0xf]
        %v488 = vld [vmem:[%s1 + $0x5f4] sm:$0xff]
        %v489 = vld [vmem:[%s1 + $0x5fc] sm:$0xf]
        %v490 = vld [vmem:[%s1 + $0x600] sm:$0xff]
        %v491 = vld [vmem:[%s1 + $0x608] sm:$0xf]
        %v492 = vld [vmem:[%s1 + $0x60c] sm:$0xff]
        %v493 = vld [vmem:[%s1 + $0x614] sm:$0xf]
        %v494 = vld [vmem:[%s1 + $0x618] sm:$0xff]
        %v495 = vld [vmem:[%s1 + $0x620] sm:$0xf]
        %v496 = vld [vmem:[%s1 + $0x624] sm:$0xff]
        %v497 = vld [vmem:[%s1 + $0x62c] sm:$0xf]
        %v498 = vld [vmem:[%s1 + $0x630] sm:$0xff]
        %v499 = vld [vmem:[%s1 + $0x638] sm:$0xf]
        %v500 = vld [vmem:[%s1 + $0x63c] sm:$0xff]
        %v501 = vld [vmem:[%s1 + $0x644] sm:$0xf]
        %v502 = vld [vmem:[%s1 + $0x648] sm:$0xff]
        %v503 = vld [vmem:[%s1 + $0x650] sm:$0xf]
        %v504 = vld [vmem:[%s1 + $0x654] sm:$0xff]
        %v505 = vld [vmem:[%s1 + $0x65c] sm:$0xf]
        %v506 = vld [vmem:[%s1 + $0x660] sm:$0xff]
        %v507 = vld [vmem:[%s1 + $0x668] sm:$0xf]
        %v508 = vld [vmem:[%s1 + $0x66c] sm:$0xff]
        %v509 = vld [vmem:[%s1 + $0x674] sm:$0xf]
        %v510 = vld [vmem:[%s1 + $0x678] sm:$0xff]
        %v511 = vld [vmem:[%s1 + $0x680] sm:$0xf]
        %v512 = vld [vmem:[%s1 + $0x684] sm:$0xff]
        %v513 = vld [vmem:[%s1 + $0x68c] sm:$0xf]
        %v514 = vld [vmem:[%s1 + $0x690] sm:$0xff]
        %v515 = vld [vmem:[%s1 + $0x698] sm:$0xf]
        %v516 = vld [vmem:[%s1 + $0x69c] sm:$0xff]
        %v517 = vld [vmem:[%s1 + $0x6a4] sm:$0xf]
        %v518 = vld [vmem:[%s1 + $0x6a8] sm:$0xff]
        %v519 = vld [vmem:[%s1 + $0x6b0] sm:$0xf]
        %v520 = vld [vmem:[%s1 + $0x6b4] sm:$0xff]
        %v521 = vld [vmem:[%s1 + $0x6bc] sm:$0xf]
        %v522 = vld [vmem:[%s1 + $0x6c0] sm:$0xff]
        %v523 = vld [vmem:[%s1 + $0x6c8] sm:$0xf]
        %v524 = vld [vmem:[%s1 + $0x6cc] sm:$0xff]
        %v525 = vld [vmem:[%s1 + $0x6d4] sm:$0xf]
        %v526 = vld [vmem:[%s1 + $0x6d8] sm:$0xff]
        %v527 = vld [vmem:[%s1 + $0x6e0] sm:$0xf]
        %v528 = vld [vmem:[%s1 + $0x6e4] sm:$0xff]
        %v529 = vld [vmem:[%s1 + $0x6ec] sm:$0xf]
        %v530 = vld [vmem:[%s1 + $0x6f0] sm:$0xff]
        %v531 = vld [vmem:[%s1 + $0x6f8] sm:$0xf]
        %v532 = vld [vmem:[%s1 + $0x6fc] sm:$0xff]
        %v533 = vld [vmem:[%s1 + $0x704] sm:$0xf]
        %v534 = vld [vmem:[%s1 + $0x708] sm:$0xff]
        %v535 = vld [vmem:[%s1 + $0x710] sm:$0xf]
        %v536 = vld [vmem:[%s1 + $0x714] sm:$0xff]
        %v537 = vld [vmem:[%s1 + $0x71c] sm:$0xf]
        %v538 = vld [vmem:[%s1 + $0x720] sm:$0xff]
        %v539 = vld [vmem:[%s1 + $0x728] sm:$0xf]
        %v540 = vld [vmem:[%s1 + $0x72c] sm:$0xff]
        %v541 = vld [vmem:[%s1 + $0x734] sm:$0xf]
        %v542 = vld [vmem:[%s1 + $0x738] sm:$0xff]
        %v543 = vld [vmem:[%s1 + $0x740] sm:$0xf]
        %v544 = vld [vmem:[%s1 + $0x744] sm:$0xff]
        %v545 = vld [vmem:[%s1 + $0x74c] sm:$0xf]
        %v546 = vld [vmem:[%s1 + $0x750] sm:$0xff]
        %v547 = vld [vmem:[%s1 + $0x758] sm:$0xf]
        %v548 = vld [vmem:[%s1 + $0x75c] sm:$0xff]
        %v549 = vld [vmem:[%s1 + $0x764] sm:$0xf]
        %v550 = vld [vmem:[%s1 + $0x768] sm:$0xff]
        %v551 = vld [vmem:[%s1 + $0x770] sm:$0xf]
        %v552 = vld [vmem:[%s1 + $0x774] sm:$0xff]
        %v553 = vld [vmem:[%s1 + $0x77c] sm:$0xf]
        %v554 = vld [vmem:[%s1 + $0x780] sm:$0xff]
        %v555 = vld [vmem:[%s1 + $0x788] sm:$0xf]
        %v556 = vld [vmem:[%s1 + $0x78c] sm:$0xff]
        %v557 = vld [vmem:[%s1 + $0x794] sm:$0xf]
        %v558 = vld [vmem:[%s1 + $0x798] sm:$0xff]
        %v559 = vld [vmem:[%s1 + $0x7a0] sm:$0xf]
        %v560 = vld [vmem:[%s1 + $0x7a4] sm:$0xff]
        %v561 = vld [vmem:[%s1 + $0x7ac] sm:$0xf]
        %v562 = vld [vmem:[%s1 + $0x7b0] sm:$0xff]
        %v563 = vld [vmem:[%s1 + $0x7b8] sm:$0xf]
        %v564 = vld [vmem:[%s1 + $0x7bc] sm:$0xff]
        %v565 = vld [vmem:[%s1 + $0x7c4] sm:$0xf]
        %v566 = vld [vmem:[%s1 + $0x7c8] sm:$0xff]
        %v567 = vld [vmem:[%s1 + $0x7d0] sm:$0xf]
        %v568 = vld [vmem:[%s1 + $0x7d4] sm:$0xff]
        %v569 = vld [vmem:[%s1 + $0x7dc] sm:$0xf]
        %v570 = vld [vmem:[%s1 + $0x7e0] sm:$0xff]
        %v571 = vld [vmem:[%s1 + $0x7e8] sm:$0xf]
        %v572 = vld [vmem:[%s1 + $0x7ec] sm:$0xff]
        %v573 = vld [vmem:[%s1 + $0x7f4] sm:$0xf]
        %v574 = vld [vmem:[%s1 + $0x7f8] sm:$0xff]
        %v575 = vld [vmem:[%s1 + $0x800] sm:$0xf]
        %v576 = vld [vmem:[%s1 + $0x804] sm:$0xff]
        %v577 = vld [vmem:[%s1 + $0x80c] sm:$0xf]
        %v578 = vld [vmem:[%s1 + $0x810] sm:$0xff]
        %v579 = vld [vmem:[%s1 + $0x818] sm:$0xf]
        %v580 = vld [vmem:[%s1 + $0x81c] sm:$0xff]
        %v581 = vld [vmem:[%s1 + $0x824] sm:$0xf]
        %v582 = vld [vmem:[%s1 + $0x828] sm:$0xff]
        %v583 = vld [vmem:[%s1 + $0x830] sm:$0xf]
        %v584 = vld [vmem:[%s1 + $0x834] sm:$0xff]
        %v585 = vld [vmem:[%s1 + $0x83c] sm:$0xf]
        %v586 = vld [vmem:[%s1 + $0x840] sm:$0xff]
        %v587 = vld [vmem:[%s1 + $0x848] sm:$0xf]
        %v588 = vld [vmem:[%s1 + $0x84c] sm:$0xff]
        %v589 = vld [vmem:[%s1 + $0x854] sm:$0xf]
        %v590 = vld [vmem:[%s1 + $0x858] sm:$0xff]
        %v591 = vld [vmem:[%s1 + $0x860] sm:$0xf]
        %v592 = vld [vmem:[%s1 + $0x864] sm:$0xff]
        %v593 = vld [vmem:[%s1 + $0x86c] sm:$0xf]
        %v594 = vld [vmem:[%s1 + $0x870] sm:$0xff]
        %v595 = vld [vmem:[%s1 + $0x878] sm:$0xf]
        %v596 = vld [vmem:[%s1 + $0x87c] sm:$0xff]
        %v597 = vld [vmem:[%s1 + $0x884] sm:$0xf]
        %v598 = vld [vmem:[%s1 + $0x888] sm:$0xff]
        %v599 = vld [vmem:[%s1 + $0x890] sm:$0xf]
        %v600 = vld [vmem:[%s1 + $0x894] sm:$0xff]
        %v601 = vld [vmem:[%s1 + $0x89c] sm:$0xf]
        %v602 = vld [vmem:[%s1 + $0x8a0] sm:$0xff]
        %v603 = vld [vmem:[%s1 + $0x8a8] sm:$0xf]
        %v604 = vld [vmem:[%s1 + $0x8ac] sm:$0xff]
        %v605 = vld [vmem:[%s1 + $0x8b4] sm:$0xf]
        %v606 = vld [vmem:[%s1 + $0x8b8] sm:$0xff]
        %v607 = vld [vmem:[%s1 + $0x8c0] sm:$0xf]
        %v608 = vld [vmem:[%s1 + $0x8c4] sm:$0xff]
        %v609 = vld [vmem:[%s1 + $0x8cc] sm:$0xf]
        %v610 = vld [vmem:[%s1 + $0x8d0] sm:$0xff]
        %v611 = vld [vmem:[%s1 + $0x8d8] sm:$0xf]
        %v612 = vld [vmem:[%s1 + $0x8dc] sm:$0xff]
        %v613 = vld [vmem:[%s1 + $0x8e4] sm:$0xf]
        %v614 = vld [vmem:[%s1 + $0x8e8] sm:$0xff]
        %v615 = vld [vmem:[%s1 + $0x8f0] sm:$0xf]
        %v616 = vld [vmem:[%s1 + $0x8f4] sm:$0xff]
        %v617 = vld [vmem:[%s1 + $0x8fc] sm:$0xf]
        %v618 = vld [vmem:[%s1 + $0x900] sm:$0xff]
        %v619 = vld [vmem:[%s1 + $0x908] sm:$0xf]
        %v620 = vld [vmem:[%s1 + $0x90c] sm:$0xff]
        %v621 = vld [vmem:[%s1 + $0x914] sm:$0xf]
        %v622 = vld [vmem:[%s1 + $0x918] sm:$0xff]
        %v623 = vld [vmem:[%s1 + $0x920] sm:$0xf]
        %v624 = vld [vmem:[%s1 + $0x924] sm:$0xff]
        %v625 = vld [vmem:[%s1 + $0x92c] sm:$0xf]
        %v626 = vld [vmem:[%s1 + $0x930] sm:$0xff]
        %v627 = vld [vmem:[%s1 + $0x938] sm:$0xf]
        %v628 = vld [vmem:[%s1 + $0x93c] sm:$0xff]
        %v629 = vld [vmem:[%s1 + $0x944] sm:$0xf]
        %v630 = vld [vmem:[%s1 + $0x948] sm:$0xff]
        %v631 = vld [vmem:[%s1 + $0x950] sm:$0xf]
        %v632 = vld [vmem:[%s1 + $0x954] sm:$0xff]
        %v633 = vld [vmem:[%s1 + $0x95c] sm:$0xf]
        %v634 = vld [vmem:[%s1 + $0x960] sm:$0xff]
        %v635 = vld [vmem:[%s1 + $0x968] sm:$0xf]
        %v636 = vld [vmem:[%s1 + $0x96c] sm:$0xff]
        %v637 = vld [vmem:[%s1 + $0x974] sm:$0xf]
        %v638 = vld [vmem:[%s1 + $0x978] sm:$0xff]
        %v639 = vld [vmem:[%s1 + $0x980] sm:$0xf]
        %v640 = vld [vmem:[%s1 + $0x984] sm:$0xff]
        %v641 = vld [vmem:[%s1 + $0x98c] sm:$0xf]
        %v642 = vld [vmem:[%s1 + $0x990] sm:$0xff]
        %v643 = vld [vmem:[%s1 + $0x998] sm:$0xf]
        %v644 = vld [vmem:[%s1 + $0x99c] sm:$0xff]
        %v645 = vld [vmem:[%s1 + $0x9a4] sm:$0xf]
        %v646 = vld [vmem:[%s1 + $0x9a8] sm:$0xff]
        %v647 = vld [vmem:[%s1 + $0x9b0] sm:$0xf]
        %v648 = vld [vmem:[%s1 + $0x9b4] sm:$0xff]
        %v649 = vld [vmem:[%s1 + $0x9bc] sm:$0xf]
        %v650 = vld [vmem:[%s1 + $0x9c0] sm:$0xff]
        %v651 = vld [vmem:[%s1 + $0x9c8] sm:$0xf]
        %v652 = vld [vmem:[%s1 + $0x9cc] sm:$0xff]
        %v653 = vld [vmem:[%s1 + $0x9d4] sm:$0xf]
        %v654 = vld [vmem:[%s1 + $0x9d8] sm:$0xff]
        %v655 = vld [vmem:[%s1 + $0x9e0] sm:$0xf]
        %v656 = vld [vmem:[%s1 + $0x9e4] sm:$0xff]
        %v657 = vld [vmem:[%s1 + $0x9ec] sm:$0xf]
        %v658 = vld [vmem:[%s1 + $0x9f0] sm:$0xff]
        %v659 = vld [vmem:[%s1 + $0x9f8] sm:$0xf]
        %v660 = vld [vmem:[%s1 + $0x9fc] sm:$0xff]
        %v661 = vld [vmem:[%s1 + $0xa04] sm:$0xf]
        %v662 = vld [vmem:[%s1 + $0xa08] sm:$0xff]
        %v663 = vld [vmem:[%s1 + $0xa10] sm:$0xf]
        %v664 = vld [vmem:[%s1 + $0xa14] sm:$0xff]
        %v665 = vld [vmem:[%s1 + $0xa1c] sm:$0xf]
        %v666 = vld [vmem:[%s1 + $0xa20] sm:$0xff]
        %v667 = vld [vmem:[%s1 + $0xa28] sm:$0xf]
        %v668 = vld [vmem:[%s1 + $0xa2c] sm:$0xff]
        %v669 = vld [vmem:[%s1 + $0xa34] sm:$0xf]
        %v670 = vld [vmem:[%s1 + $0xa38] sm:$0xff]
        %v671 = vld [vmem:[%s1 + $0xa40] sm:$0xf]
        %v672 = vld [vmem:[%s1 + $0xa44] sm:$0xff]
        %v673 = vld [vmem:[%s1 + $0xa4c] sm:$0xf]
        %v674 = vld [vmem:[%s1 + $0xa50] sm:$0xff]
        %v675 = vld [vmem:[%s1 + $0xa58] sm:$0xf]
        %v676 = vld [vmem:[%s1 + $0xa5c] sm:$0xff]
        %v677 = vld [vmem:[%s1 + $0xa64] sm:$0xf]
        %v678 = vld [vmem:[%s1 + $0xa68] sm:$0xff]
        %v679 = vld [vmem:[%s1 + $0xa70] sm:$0xf]
        %v680 = vld [vmem:[%s1 + $0xa74] sm:$0xff]
        %v681 = vld [vmem:[%s1 + $0xa7c] sm:$0xf]
        %v682 = vld [vmem:[%s1 + $0xa80] sm:$0xff]
        %v683 = vld [vmem:[%s1 + $0xa88] sm:$0xf]
        %v684 = vld [vmem:[%s1 + $0xa8c] sm:$0xff]
        %v685 = vld [vmem:[%s1 + $0xa94] sm:$0xf]
        %v686 = vld [vmem:[%s1 + $0xa98] sm:$0xff]
        %v687 = vld [vmem:[%s1 + $0xaa0] sm:$0xf]
        %v688 = vld [vmem:[%s1 + $0xaa4] sm:$0xff]
        %v689 = vld [vmem:[%s1 + $0xaac] sm:$0xf]
        %v690 = vld [vmem:[%s1 + $0xab0] sm:$0xff]
        %v691 = vld [vmem:[%s1 + $0xab8] sm:$0xf]
        %v692 = vld [vmem:[%s1 + $0xabc] sm:$0xff]
        %v693 = vld [vmem:[%s1 + $0xac4] sm:$0xf]
        %v694 = vld [vmem:[%s1 + $0xac8] sm:$0xff]
        %v695 = vld [vmem:[%s1 + $0xad0] sm:$0xf]
        %v696 = vld [vmem:[%s1 + $0xad4] sm:$0xff]
        %v697 = vld [vmem:[%s1 + $0xadc] sm:$0xf]
        %v698 = vld [vmem:[%s1 + $0xae0] sm:$0xff]
        %v699 = vld [vmem:[%s1 + $0xae8] sm:$0xf]
        %v700 = vld [vmem:[%s1 + $0xaec] sm:$0xff]
        %v701 = vld [vmem:[%s1 + $0xaf4] sm:$0xf]
        %v702 = vld [vmem:[%s1 + $0xaf8] sm:$0xff]
        %v703 = vld [vmem:[%s1 + $0xb00] sm:$0xf]
        %v704 = vld [vmem:[%s1 + $0xb04] sm:$0xff]
        %v705 = vld [vmem:[%s1 + $0xb0c] sm:$0xf]
        %v706 = vld [vmem:[%s1 + $0xb10] sm:$0xff]
        %v707 = vld [vmem:[%s1 + $0xb18] sm:$0xf]
        %v708 = vld [vmem:[%s1 + $0xb1c] sm:$0xff]
        %v709 = vld [vmem:[%s1 + $0xb24] sm:$0xf]
        %v710 = vld [vmem:[%s1 + $0xb28] sm:$0xff]
        %v711 = vld [vmem:[%s1 + $0xb30] sm:$0xf]
        %v712 = vld [vmem:[%s1 + $0xb34] sm:$0xff]
        %v713 = vld [vmem:[%s1 + $0xb3c] sm:$0xf]
        %v714 = vld [vmem:[%s1 + $0xb40] sm:$0xff]
        %v715 = vld [vmem:[%s1 + $0xb48] sm:$0xf]
        %v716 = vld [vmem:[%s1 + $0xb4c] sm:$0xff]
        %v717 = vld [vmem:[%s1 + $0xb54] sm:$0xf]
        %v718 = vld [vmem:[%s1 + $0xb58] sm:$0xff]
        %v719 = vld [vmem:[%s1 + $0xb60] sm:$0xf]
        %v720 = vld [vmem:[%s1 + $0xb64] sm:$0xff]
        %v721 = vld [vmem:[%s1 + $0xb6c] sm:$0xf]
        %v722 = vld [vmem:[%s1 + $0xb70] sm:$0xff]
        %v723 = vld [vmem:[%s1 + $0xb78] sm:$0xf]
        %v724 = vld [vmem:[%s1 + $0xb7c] sm:$0xff]
        %v725 = vld [vmem:[%s1 + $0xb84] sm:$0xf]
        %v726 = vld [vmem:[%s1 + $0xb88] sm:$0xff]
        %v727 = vld [vmem:[%s1 + $0xb90] sm:$0xf]
        %v728 = vld [vmem:[%s1 + $0xb94] sm:$0xff]
        %v729 = vld [vmem:[%s1 + $0xb9c] sm:$0xf]
        %v730 = vld [vmem:[%s1 + $0xba0] sm:$0xff]
        %v731 = vld [vmem:[%s1 + $0xba8] sm:$0xf]
        %v732 = vld [vmem:[%s1 + $0xbac] sm:$0xff]
        %v733 = vld [vmem:[%s1 + $0xbb4] sm:$0xf]
        %v734 = vld [vmem:[%s1 + $0xbb8] sm:$0xff]
        %v735 = vld [vmem:[%s1 + $0xbc0] sm:$0xf]
        %v736 = vld [vmem:[%s1 + $0xbc4] sm:$0xff]
        %v737 = vld [vmem:[%s1 + $0xbcc] sm:$0xf]
        %v738 = vld [vmem:[%s1 + $0xbd0] sm:$0xff]
        %v739 = vld [vmem:[%s1 + $0xbd8] sm:$0xf]
        %v740 = vld [vmem:[%s1 + $0xbdc] sm:$0xff]
        %v741 = vld [vmem:[%s1 + $0xbe4] sm:$0xf]
        %v742 = vld [vmem:[%s1 + $0xbe8] sm:$0xff]
        %v743 = vld [vmem:[%s1 + $0xbf0] sm:$0xf]
        %v744 = vld [vmem:[%s1 + $0xbf4] sm:$0xff]
        %v745 = vld [vmem:[%s1 + $0xbfc] sm:$0xf]
        %v810 = vunpack.c.l.b16 %v170
        %v811 = vunpack.c.h.b16 %v170
        %v812 = vunpack.c.l.b16 %v171
        %v813 = vunpack.c.h.b16 %v171
        %v814 = vunpack.c.l.b16 %v172
        %v815 = vunpack.c.h.b16 %v172
        %v816 = vunpack.c.l.b16 %v173
        %v817 = vunpack.c.h.b16 %v173
        %v818 = vunpack.c.l.b16 %v174
        %v819 = vunpack.c.h.b16 %v174
        %v820 = vunpack.c.l.b16 %v175
        %v821 = vunpack.c.h.b16 %v175
        %v822 = vunpack.c.l.b16 %v176
        %v823 = vunpack.c.h.b16 %v176
        %v824 = vunpack.c.l.b16 %v177
        %v825 = vunpack.c.h.b16 %v177
        %v826 = vunpack.c.l.b16 %v178
        %v827 = vunpack.c.h.b16 %v178
        %v828 = vunpack.c.l.b16 %v179
        %v829 = vunpack.c.h.b16 %v179
        %v830 = vunpack.c.l.b16 %v180
        %v831 = vunpack.c.h.b16 %v180
        %v832 = vunpack.c.l.b16 %v181
        %v833 = vunpack.c.h.b16 %v181
        %v834 = vunpack.c.l.b16 %v182
        %v835 = vunpack.c.h.b16 %v182
        %v836 = vunpack.c.l.b16 %v183
        %v837 = vunpack.c.h.b16 %v183
        %v838 = vunpack.c.l.b16 %v184
        %v839 = vunpack.c.h.b16 %v184
        %v840 = vunpack.c.l.b16 %v185
        %v841 = vunpack.c.h.b16 %v185
        %v842 = vunpack.c.l.b16 %v186
        %v843 = vunpack.c.h.b16 %v186
        %v844 = vunpack.c.l.b16 %v187
        %v845 = vunpack.c.h.b16 %v187
        %v846 = vunpack.c.l.b16 %v188
        %v847 = vunpack.c.h.b16 %v188
        %v848 = vunpack.c.l.b16 %v189
        %v849 = vunpack.c.h.b16 %v189
        %v850 = vunpack.c.l.b16 %v190
        %v851 = vunpack.c.h.b16 %v190
        %v852 = vunpack.c.l.b16 %v191
        %v853 = vunpack.c.h.b16 %v191
        %v854 = vunpack.c.l.b16 %v192
        %v855 = vunpack.c.h.b16 %v192
        %v856 = vunpack.c.l.b16 %v193
        %v857 = vunpack.c.h.b16 %v193
        %v858 = vunpack.c.l.b16 %v194
        %v859 = vunpack.c.h.b16 %v194
        %v860 = vunpack.c.l.b16 %v195
        %v861 = vunpack.c.h.b16 %v195
        %v862 = vunpack.c.l.b16 %v196
        %v863 = vunpack.c.h.b16 %v196
        %v864 = vunpack.c.l.b16 %v197
        %v865 = vunpack.c.h.b16 %v197
        %v866 = vunpack.c.l.b16 %v198
        %v867 = vunpack.c.h.b16 %v198
        %v868 = vunpack.c.l.b16 %v199
        %v869 = vunpack.c.h.b16 %v199
        %v870 = vunpack.c.l.b16 %v200
        %v871 = vunpack.c.h.b16 %v200
        %v872 = vunpack.c.l.b16 %v201
        %v873 = vunpack.c.h.b16 %v201
        %v874 = vunpack.c.l.b16 %v202
        %v875 = vunpack.c.h.b16 %v202
        %v876 = vunpack.c.l.b16 %v203
        %v877 = vunpack.c.h.b16 %v203
        %v878 = vunpack.c.l.b16 %v204
        %v879 = vunpack.c.h.b16 %v204
        %v880 = vunpack.c.l.b16 %v205
        %v881 = vunpack.c.h.b16 %v205
        %v882 = vunpack.c.l.b16 %v206
        %v883 = vunpack.c.h.b16 %v206
        %v884 = vunpack.c.l.b16 %v207
        %v885 = vunpack.c.h.b16 %v207
        %v886 = vunpack.c.l.b16 %v208
        %v887 = vunpack.c.h.b16 %v208
        %v888 = vunpack.c.l.b16 %v209
        %v889 = vunpack.c.h.b16 %v209
        %v890 = vunpack.c.l.b16 %v210
        %v891 = vunpack.c.h.b16 %v210
        %v892 = vunpack.c.l.b16 %v211
        %v893 = vunpack.c.h.b16 %v211
        %v894 = vunpack.c.l.b16 %v212
        %v895 = vunpack.c.h.b16 %v212
        %v896 = vunpack.c.l.b16 %v213
        %v897 = vunpack.c.h.b16 %v213
        %v898 = vunpack.c.l.b16 %v214
        %v899 = vunpack.c.h.b16 %v214
        %v900 = vunpack.c.l.b16 %v215
        %v901 = vunpack.c.h.b16 %v215
        %v902 = vunpack.c.l.b16 %v216
        %v903 = vunpack.c.h.b16 %v216
        %v904 = vunpack.c.l.b16 %v217
        %v905 = vunpack.c.h.b16 %v217
        %v906 = vunpack.c.l.b16 %v218
        %v907 = vunpack.c.h.b16 %v218
        %v908 = vunpack.c.l.b16 %v219
        %v909 = vunpack.c.h.b16 %v219
        %v910 = vunpack.c.l.b16 %v220
        %v911 = vunpack.c.h.b16 %v220
        %v912 = vunpack.c.l.b16 %v221
        %v913 = vunpack.c.h.b16 %v221
        %v914 = vunpack.c.l.b16 %v222
        %v915 = vunpack.c.h.b16 %v222
        %v916 = vunpack.c.l.b16 %v223
        %v917 = vunpack.c.h.b16 %v223
        %v918 = vunpack.c.l.b16 %v224
        %v919 = vunpack.c.h.b16 %v224
        %v920 = vunpack.c.l.b16 %v225
        %v921 = vunpack.c.h.b16 %v225
        %v922 = vunpack.c.l.b16 %v226
        %v923 = vunpack.c.h.b16 %v226
        %v924 = vunpack.c.l.b16 %v227
        %v925 = vunpack.c.h.b16 %v227
        %v926 = vunpack.c.l.b16 %v228
        %v927 = vunpack.c.h.b16 %v228
        %v928 = vunpack.c.l.b16 %v229
        %v929 = vunpack.c.h.b16 %v229
        %v930 = vunpack.c.l.b16 %v230
        %v931 = vunpack.c.h.b16 %v230
        %v932 = vunpack.c.l.b16 %v231
        %v933 = vunpack.c.h.b16 %v231
        %v934 = vunpack.c.l.b16 %v232
        %v935 = vunpack.c.h.b16 %v232
        %v936 = vunpack.c.l.b16 %v233
        %v937 = vunpack.c.h.b16 %v233
        %v938 = vpack.c.b16 %v826, %v810
        %v939 = vpack.c.b16 %v827, %v811
        %v940 = vpack.c.b16 %v828, %v812
        %v941 = vpack.c.b16 %v829, %v813
        %v942 = vpack.c.b16 %v830, %v814
        %v943 = vpack.c.b16 %v831, %v815
        %v944 = vpack.c.b16 %v832, %v816
        %v945 = vpack.c.b16 %v833, %v817
        %v946 = vpack.c.b16 %v834, %v818
        %v947 = vpack.c.b16 %v835, %v819
        %v948 = vpack.c.b16 %v836, %v820
        %v949 = vpack.c.b16 %v837, %v821
        %v950 = vpack.c.b16 %v838, %v822
        %v951 = vpack.c.b16 %v839, %v823
        %v952 = vpack.c.b16 %v840, %v824
        %v953 = vpack.c.b16 %v841, %v825
        %v954 = vpack.c.b16 %v858, %v842
        %v955 = vpack.c.b16 %v859, %v843
        %v956 = vpack.c.b16 %v860, %v844
        %v957 = vpack.c.b16 %v861, %v845
        %v958 = vpack.c.b16 %v862, %v846
        %v959 = vpack.c.b16 %v863, %v847
        %v960 = vpack.c.b16 %v864, %v848
        %v961 = vpack.c.b16 %v865, %v849
        %v962 = vpack.c.b16 %v866, %v850
        %v963 = vpack.c.b16 %v867, %v851
        %v964 = vpack.c.b16 %v868, %v852
        %v965 = vpack.c.b16 %v869, %v853
        %v966 = vpack.c.b16 %v870, %v854
        %v967 = vpack.c.b16 %v871, %v855
        %v968 = vpack.c.b16 %v872, %v856
        %v969 = vpack.c.b16 %v873, %v857
        %v970 = vpack.c.b16 %v890, %v874
        %v971 = vpack.c.b16 %v891, %v875
        %v972 = vpack.c.b16 %v892, %v876
        %v973 = vpack.c.b16 %v893, %v877
        %v974 = vpack.c.b16 %v894, %v878
        %v975 = vpack.c.b16 %v895, %v879
        %v976 = vpack.c.b16 %v896, %v880
        %v977 = vpack.c.b16 %v897, %v881
        %v978 = vpack.c.b16 %v898, %v882
        %v979 = vpack.c.b16 %v899, %v883
        %v980 = vpack.c.b16 %v900, %v884
        %v981 = vpack.c.b16 %v901, %v885
        %v982 = vpack.c.b16 %v902, %v886
        %v983 = vpack.c.b16 %v903, %v887
        %v984 = vpack.c.b16 %v904, %v888
        %v985 = vpack.c.b16 %v905, %v889
        %v986 = vpack.c.b16 %v922, %v906
        %v987 = vpack.c.b16 %v923, %v907
        %v988 = vpack.c.b16 %v924, %v908
        %v989 = vpack.c.b16 %v925, %v909
        %v990 = vpack.c.b16 %v926, %v910
        %v991 = vpack.c.b16 %v927, %v911
        %v992 = vpack.c.b16 %v928, %v912
        %v993 = vpack.c.b16 %v929, %v913
        %v994 = vpack.c.b16 %v930, %v914
        %v995 = vpack.c.b16 %v931, %v915
        %v996 = vpack.c.b16 %v932, %v916
        %v997 = vpack.c.b16 %v933, %v917
        %v998 = vpack.c.b16 %v934, %v918
        %v999 = vpack.c.b16 %v935, %v919
        %v1000 = vpack.c.b16 %v936, %v920
        %v1001 = vpack.c.b16 %v937, %v921
        %v1578 = vunpack.c.l.b16 %v234
        %v1579 = vunpack.c.h.b16 %v234
        %v1580 = vunpack.c.l.b16 %v235
        %v1581 = vunpack.c.l.b16 %v236
        %v1582 = vunpack.c.h.b16 %v236
        %v1583 = vunpack.c.l.b16 %v237
        %v1584 = vunpack.c.l.b16 %v238
        %v1585 = vunpack.c.h.b16 %v238
        %v1586 = vunpack.c.l.b16 %v239
        %v1587 = vunpack.c.l.b16 %v240
        %v1588 = vunpack.c.h.b16 %v240
        %v1589 = vunpack.c.l.b16 %v241
        %v1590 = vunpack.c.l.b16 %v242
        %v1591 = vunpack.c.h.b16 %v242
        %v1592 = vunpack.c.l.b16 %v243
        %v1593 = vunpack.c.l.b16 %v244
        %v1594 = vunpack.c.h.b16 %v244
        %v1595 = vunpack.c.l.b16 %v245
        %v1596 = vunpack.c.l.b16 %v246
        %v1597 = vunpack.c.h.b16 %v246
        %v1598 = vunpack.c.l.b16 %v247
        %v1599 = vunpack.c.l.b16 %v248
        %v1600 = vunpack.c.h.b16 %v248
        %v1601 = vunpack.c.l.b16 %v249
        %v1602 = vunpack.c.l.b16 %v250
        %v1603 = vunpack.c.h.b16 %v250
        %v1604 = vunpack.c.l.b16 %v251
        %v1605 = vunpack.c.l.b16 %v252
        %v1606 = vunpack.c.h.b16 %v252
        %v1607 = vunpack.c.l.b16 %v253
        %v1608 = vunpack.c.l.b16 %v254
        %v1609 = vunpack.c.h.b16 %v254
        %v1610 = vunpack.c.l.b16 %v255
        %v1611 = vunpack.c.l.b16 %v256
        %v1612 = vunpack.c.h.b16 %v256
        %v1613 = vunpack.c.l.b16 %v257
        %v1614 = vunpack.c.l.b16 %v258
        %v1615 = vunpack.c.h.b16 %v258
        %v1616 = vunpack.c.l.b16 %v259
        %v1617 = vunpack.c.l.b16 %v260
        %v1618 = vunpack.c.h.b16 %v260
        %v1619 = vunpack.c.l.b16 %v261
        %v1620 = vunpack.c.l.b16 %v262
        %v1621 = vunpack.c.h.b16 %v262
        %v1622 = vunpack.c.l.b16 %v263
        %v1623 = vunpack.c.l.b16 %v264
        %v1624 = vunpack.c.h.b16 %v264
        %v1625 = vunpack.c.l.b16 %v265
        %v1626 = vunpack.c.l.b16 %v266
        %v1627 = vunpack.c.h.b16 %v266
        %v1628 = vunpack.c.l.b16 %v267
        %v1629 = vunpack.c.l.b16 %v268
        %v1630 = vunpack.c.h.b16 %v268
        %v1631 = vunpack.c.l.b16 %v269
        %v1632 = vunpack.c.l.b16 %v270
        %v1633 = vunpack.c.h.b16 %v270
        %v1634 = vunpack.c.l.b16 %v271
        %v1635 = vunpack.c.l.b16 %v272
        %v1636 = vunpack.c.h.b16 %v272
        %v1637 = vunpack.c.l.b16 %v273
        %v1638 = vunpack.c.l.b16 %v274
        %v1639 = vunpack.c.h.b16 %v274
        %v1640 = vunpack.c.l.b16 %v275
        %v1641 = vunpack.c.l.b16 %v276
        %v1642 = vunpack.c.h.b16 %v276
        %v1643 = vunpack.c.l.b16 %v277
        %v1644 = vunpack.c.l.b16 %v278
        %v1645 = vunpack.c.h.b16 %v278
        %v1646 = vunpack.c.l.b16 %v279
        %v1647 = vunpack.c.l.b16 %v280
        %v1648 = vunpack.c.h.b16 %v280
        %v1649 = vunpack.c.l.b16 %v281
        %v1650 = vunpack.c.l.b16 %v282
        %v1651 = vunpack.c.h.b16 %v282
        %v1652 = vunpack.c.l.b16 %v283
        %v1653 = vunpack.c.l.b16 %v284
        %v1654 = vunpack.c.h.b16 %v284
        %v1655 = vunpack.c.l.b16 %v285
        %v1656 = vunpack.c.l.b16 %v286
        %v1657 = vunpack.c.h.b16 %v286
        %v1658 = vunpack.c.l.b16 %v287
        %v1659 = vunpack.c.l.b16 %v288
        %v1660 = vunpack.c.h.b16 %v288
        %v1661 = vunpack.c.l.b16 %v289
        %v1662 = vunpack.c.l.b16 %v290
        %v1663 = vunpack.c.h.b16 %v290
        %v1664 = vunpack.c.l.b16 %v291
        %v1665 = vunpack.c.l.b16 %v292
        %v1666 = vunpack.c.h.b16 %v292
        %v1667 = vunpack.c.l.b16 %v293
        %v1668 = vunpack.c.l.b16 %v294
        %v1669 = vunpack.c.h.b16 %v294
        %v1670 = vunpack.c.l.b16 %v295
        %v1671 = vunpack.c.l.b16 %v296
        %v1672 = vunpack.c.h.b16 %v296
        %v1673 = vunpack.c.l.b16 %v297
        %v1674 = vunpack.c.l.b16 %v298
        %v1675 = vunpack.c.h.b16 %v298
        %v1676 = vunpack.c.l.b16 %v299
        %v1677 = vunpack.c.l.b16 %v300
        %v1678 = vunpack.c.h.b16 %v300
        %v1679 = vunpack.c.l.b16 %v301
        %v1680 = vunpack.c.l.b16 %v302
        %v1681 = vunpack.c.h.b16 %v302
        %v1682 = vunpack.c.l.b16 %v303
        %v1683 = vunpack.c.l.b16 %v304
        %v1684 = vunpack.c.h.b16 %v304
        %v1685 = vunpack.c.l.b16 %v305
        %v1686 = vunpack.c.l.b16 %v306
        %v1687 = vunpack.c.h.b16 %v306
        %v1688 = vunpack.c.l.b16 %v307
        %v1689 = vunpack.c.l.b16 %v308
        %v1690 = vunpack.c.h.b16 %v308
        %v1691 = vunpack.c.l.b16 %v309
        %v1692 = vunpack.c.l.b16 %v310
        %v1693 = vunpack.c.h.b16 %v310
        %v1694 = vunpack.c.l.b16 %v311
        %v1695 = vunpack.c.l.b16 %v312
        %v1696 = vunpack.c.h.b16 %v312
        %v1697 = vunpack.c.l.b16 %v313
        %v1698 = vunpack.c.l.b16 %v314
        %v1699 = vunpack.c.h.b16 %v314
        %v1700 = vunpack.c.l.b16 %v315
        %v1701 = vunpack.c.l.b16 %v316
        %v1702 = vunpack.c.h.b16 %v316
        %v1703 = vunpack.c.l.b16 %v317
        %v1704 = vunpack.c.l.b16 %v318
        %v1705 = vunpack.c.h.b16 %v318
        %v1706 = vunpack.c.l.b16 %v319
        %v1707 = vunpack.c.l.b16 %v320
        %v1708 = vunpack.c.h.b16 %v320
        %v1709 = vunpack.c.l.b16 %v321
        %v1710 = vunpack.c.l.b16 %v322
        %v1711 = vunpack.c.h.b16 %v322
        %v1712 = vunpack.c.l.b16 %v323
        %v1713 = vunpack.c.l.b16 %v324
        %v1714 = vunpack.c.h.b16 %v324
        %v1715 = vunpack.c.l.b16 %v325
        %v1716 = vunpack.c.l.b16 %v326
        %v1717 = vunpack.c.h.b16 %v326
        %v1718 = vunpack.c.l.b16 %v327
        %v1719 = vunpack.c.l.b16 %v328
        %v1720 = vunpack.c.h.b16 %v328
        %v1721 = vunpack.c.l.b16 %v329
        %v1722 = vunpack.c.l.b16 %v330
        %v1723 = vunpack.c.h.b16 %v330
        %v1724 = vunpack.c.l.b16 %v331
        %v1725 = vunpack.c.l.b16 %v332
        %v1726 = vunpack.c.h.b16 %v332
        %v1727 = vunpack.c.l.b16 %v333
        %v1728 = vunpack.c.l.b16 %v334
        %v1729 = vunpack.c.h.b16 %v334
        %v1730 = vunpack.c.l.b16 %v335
        %v1731 = vunpack.c.l.b16 %v336
        %v1732 = vunpack.c.h.b16 %v336
        %v1733 = vunpack.c.l.b16 %v337
        %v1734 = vunpack.c.l.b16 %v338
        %v1735 = vunpack.c.h.b16 %v338
        %v1736 = vunpack.c.l.b16 %v339
        %v1737 = vunpack.c.l.b16 %v340
        %v1738 = vunpack.c.h.b16 %v340
        %v1739 = vunpack.c.l.b16 %v341
        %v1740 = vunpack.c.l.b16 %v342
        %v1741 = vunpack.c.h.b16 %v342
        %v1742 = vunpack.c.l.b16 %v343
        %v1743 = vunpack.c.l.b16 %v344
        %v1744 = vunpack.c.h.b16 %v344
        %v1745 = vunpack.c.l.b16 %v345
        %v1746 = vunpack.c.l.b16 %v346
        %v1747 = vunpack.c.h.b16 %v346
        %v1748 = vunpack.c.l.b16 %v347
        %v1749 = vunpack.c.l.b16 %v348
        %v1750 = vunpack.c.h.b16 %v348
        %v1751 = vunpack.c.l.b16 %v349
        %v1752 = vunpack.c.l.b16 %v350
        %v1753 = vunpack.c.h.b16 %v350
        %v1754 = vunpack.c.l.b16 %v351
        %v1755 = vunpack.c.l.b16 %v352
        %v1756 = vunpack.c.h.b16 %v352
        %v1757 = vunpack.c.l.b16 %v353
        %v1758 = vunpack.c.l.b16 %v354
        %v1759 = vunpack.c.h.b16 %v354
        %v1760 = vunpack.c.l.b16 %v355
        %v1761 = vunpack.c.l.b16 %v356
        %v1762 = vunpack.c.h.b16 %v356
        %v1763 = vunpack.c.l.b16 %v357
        %v1764 = vunpack.c.l.b16 %v358
        %v1765 = vunpack.c.h.b16 %v358
        %v1766 = vunpack.c.l.b16 %v359
        %v1767 = vunpack.c.l.b16 %v360
        %v1768 = vunpack.c.h.b16 %v360
        %v1769 = vunpack.c.l.b16 %v361
        %v1770 = vunpack.c.l.b16 %v362
        %v1771 = vunpack.c.h.b16 %v362
        %v1772 = vunpack.c.l.b16 %v363
        %v1773 = vunpack.c.l.b16 %v364
        %v1774 = vunpack.c.h.b16 %v364
        %v1775 = vunpack.c.l.b16 %v365
        %v1776 = vunpack.c.l.b16 %v366
        %v1777 = vunpack.c.h.b16 %v366
        %v1778 = vunpack.c.l.b16 %v367
        %v1779 = vunpack.c.l.b16 %v368
        %v1780 = vunpack.c.h.b16 %v368
        %v1781 = vunpack.c.l.b16 %v369
        %v1782 = vunpack.c.l.b16 %v370
        %v1783 = vunpack.c.h.b16 %v370
        %v1784 = vunpack.c.l.b16 %v371
        %v1785 = vunpack.c.l.b16 %v372
        %v1786 = vunpack.c.h.b16 %v372
        %v1787 = vunpack.c.l.b16 %v373
        %v1788 = vunpack.c.l.b16 %v374
        %v1789 = vunpack.c.h.b16 %v374
        %v1790 = vunpack.c.l.b16 %v375
        %v1791 = vunpack.c.l.b16 %v376
        %v1792 = vunpack.c.h.b16 %v376
        %v1793 = vunpack.c.l.b16 %v377
        %v1794 = vunpack.c.l.b16 %v378
        %v1795 = vunpack.c.h.b16 %v378
        %v1796 = vunpack.c.l.b16 %v379
        %v1797 = vunpack.c.l.b16 %v380
        %v1798 = vunpack.c.h.b16 %v380
        %v1799 = vunpack.c.l.b16 %v381
        %v1800 = vunpack.c.l.b16 %v382
        %v1801 = vunpack.c.h.b16 %v382
        %v1802 = vunpack.c.l.b16 %v383
        %v1803 = vunpack.c.l.b16 %v384
        %v1804 = vunpack.c.h.b16 %v384
        %v1805 = vunpack.c.l.b16 %v385
        %v1806 = vunpack.c.l.b16 %v386
        %v1807 = vunpack.c.h.b16 %v386
        %v1808 = vunpack.c.l.b16 %v387
        %v1809 = vunpack.c.l.b16 %v388
        %v1810 = vunpack.c.h.b16 %v388
        %v1811 = vunpack.c.l.b16 %v389
        %v1812 = vunpack.c.l.b16 %v390
        %v1813 = vunpack.c.h.b16 %v390
        %v1814 = vunpack.c.l.b16 %v391
        %v1815 = vunpack.c.l.b16 %v392
        %v1816 = vunpack.c.h.b16 %v392
        %v1817 = vunpack.c.l.b16 %v393
        %v1818 = vunpack.c.l.b16 %v394
        %v1819 = vunpack.c.h.b16 %v394
        %v1820 = vunpack.c.l.b16 %v395
        %v1821 = vunpack.c.l.b16 %v396
        %v1822 = vunpack.c.h.b16 %v396
        %v1823 = vunpack.c.l.b16 %v397
        %v1824 = vunpack.c.l.b16 %v398
        %v1825 = vunpack.c.h.b16 %v398
        %v1826 = vunpack.c.l.b16 %v399
        %v1827 = vunpack.c.l.b16 %v400
        %v1828 = vunpack.c.h.b16 %v400
        %v1829 = vunpack.c.l.b16 %v401
        %v1830 = vunpack.c.l.b16 %v402
        %v1831 = vunpack.c.h.b16 %v402
        %v1832 = vunpack.c.l.b16 %v403
        %v1833 = vunpack.c.l.b16 %v404
        %v1834 = vunpack.c.h.b16 %v404
        %v1835 = vunpack.c.l.b16 %v405
        %v1836 = vunpack.c.l.b16 %v406
        %v1837 = vunpack.c.h.b16 %v406
        %v1838 = vunpack.c.l.b16 %v407
        %v1839 = vunpack.c.l.b16 %v408
        %v1840 = vunpack.c.h.b16 %v408
        %v1841 = vunpack.c.l.b16 %v409
        %v1842 = vunpack.c.l.b16 %v410
        %v1843 = vunpack.c.h.b16 %v410
        %v1844 = vunpack.c.l.b16 %v411
        %v1845 = vunpack.c.l.b16 %v412
        %v1846 = vunpack.c.h.b16 %v412
        %v1847 = vunpack.c.l.b16 %v413
        %v1848 = vunpack.c.l.b16 %v414
        %v1849 = vunpack.c.h.b16 %v414
        %v1850 = vunpack.c.l.b16 %v415
        %v1851 = vunpack.c.l.b16 %v416
        %v1852 = vunpack.c.h.b16 %v416
        %v1853 = vunpack.c.l.b16 %v417
        %v1854 = vunpack.c.l.b16 %v418
        %v1855 = vunpack.c.h.b16 %v418
        %v1856 = vunpack.c.l.b16 %v419
        %v1857 = vunpack.c.l.b16 %v420
        %v1858 = vunpack.c.h.b16 %v420
        %v1859 = vunpack.c.l.b16 %v421
        %v1860 = vunpack.c.l.b16 %v422
        %v1861 = vunpack.c.h.b16 %v422
        %v1862 = vunpack.c.l.b16 %v423
        %v1863 = vunpack.c.l.b16 %v424
        %v1864 = vunpack.c.h.b16 %v424
        %v1865 = vunpack.c.l.b16 %v425
        %v1866 = vunpack.c.l.b16 %v426
        %v1867 = vunpack.c.h.b16 %v426
        %v1868 = vunpack.c.l.b16 %v427
        %v1869 = vunpack.c.l.b16 %v428
        %v1870 = vunpack.c.h.b16 %v428
        %v1871 = vunpack.c.l.b16 %v429
        %v1872 = vunpack.c.l.b16 %v430
        %v1873 = vunpack.c.h.b16 %v430
        %v1874 = vunpack.c.l.b16 %v431
        %v1875 = vunpack.c.l.b16 %v432
        %v1876 = vunpack.c.h.b16 %v432
        %v1877 = vunpack.c.l.b16 %v433
        %v1878 = vunpack.c.l.b16 %v434
        %v1879 = vunpack.c.h.b16 %v434
        %v1880 = vunpack.c.l.b16 %v435
        %v1881 = vunpack.c.l.b16 %v436
        %v1882 = vunpack.c.h.b16 %v436
        %v1883 = vunpack.c.l.b16 %v437
        %v1884 = vunpack.c.l.b16 %v438
        %v1885 = vunpack.c.h.b16 %v438
        %v1886 = vunpack.c.l.b16 %v439
        %v1887 = vunpack.c.l.b16 %v440
        %v1888 = vunpack.c.h.b16 %v440
        %v1889 = vunpack.c.l.b16 %v441
        %v1890 = vunpack.c.l.b16 %v442
        %v1891 = vunpack.c.h.b16 %v442
        %v1892 = vunpack.c.l.b16 %v443
        %v1893 = vunpack.c.l.b16 %v444
        %v1894 = vunpack.c.h.b16 %v444
        %v1895 = vunpack.c.l.b16 %v445
        %v1896 = vunpack.c.l.b16 %v446
        %v1897 = vunpack.c.h.b16 %v446
        %v1898 = vunpack.c.l.b16 %v447
        %v1899 = vunpack.c.l.b16 %v448
        %v1900 = vunpack.c.h.b16 %v448
        %v1901 = vunpack.c.l.b16 %v449
        %v1902 = vunpack.c.l.b16 %v450
        %v1903 = vunpack.c.h.b16 %v450
        %v1904 = vunpack.c.l.b16 %v451
        %v1905 = vunpack.c.l.b16 %v452
        %v1906 = vunpack.c.h.b16 %v452
        %v1907 = vunpack.c.l.b16 %v453
        %v1908 = vunpack.c.l.b16 %v454
        %v1909 = vunpack.c.h.b16 %v454
        %v1910 = vunpack.c.l.b16 %v455
        %v1911 = vunpack.c.l.b16 %v456
        %v1912 = vunpack.c.h.b16 %v456
        %v1913 = vunpack.c.l.b16 %v457
        %v1914 = vunpack.c.l.b16 %v458
        %v1915 = vunpack.c.h.b16 %v458
        %v1916 = vunpack.c.l.b16 %v459
        %v1917 = vunpack.c.l.b16 %v460
        %v1918 = vunpack.c.h.b16 %v460
        %v1919 = vunpack.c.l.b16 %v461
        %v1920 = vunpack.c.l.b16 %v462
        %v1921 = vunpack.c.h.b16 %v462
        %v1922 = vunpack.c.l.b16 %v463
        %v1923 = vunpack.c.l.b16 %v464
        %v1924 = vunpack.c.h.b16 %v464
        %v1925 = vunpack.c.l.b16 %v465
        %v1926 = vunpack.c.l.b16 %v466
        %v1927 = vunpack.c.h.b16 %v466
        %v1928 = vunpack.c.l.b16 %v467
        %v1929 = vunpack.c.l.b16 %v468
        %v1930 = vunpack.c.h.b16 %v468
        %v1931 = vunpack.c.l.b16 %v469
        %v1932 = vunpack.c.l.b16 %v470
        %v1933 = vunpack.c.h.b16 %v470
        %v1934 = vunpack.c.l.b16 %v471
        %v1935 = vunpack.c.l.b16 %v472
        %v1936 = vunpack.c.h.b16 %v472
        %v1937 = vunpack.c.l.b16 %v473
        %v1938 = vunpack.c.l.b16 %v474
        %v1939 = vunpack.c.h.b16 %v474
        %v1940 = vunpack.c.l.b16 %v475
        %v1941 = vunpack.c.l.b16 %v476
        %v1942 = vunpack.c.h.b16 %v476
        %v1943 = vunpack.c.l.b16 %v477
        %v1944 = vunpack.c.l.b16 %v478
        %v1945 = vunpack.c.h.b16 %v478
        %v1946 = vunpack.c.l.b16 %v479
        %v1947 = vunpack.c.l.b16 %v480
        %v1948 = vunpack.c.h.b16 %v480
        %v1949 = vunpack.c.l.b16 %v481
        %v1950 = vunpack.c.l.b16 %v482
        %v1951 = vunpack.c.h.b16 %v482
        %v1952 = vunpack.c.l.b16 %v483
        %v1953 = vunpack.c.l.b16 %v484
        %v1954 = vunpack.c.h.b16 %v484
        %v1955 = vunpack.c.l.b16 %v485
        %v1956 = vunpack.c.l.b16 %v486
        %v1957 = vunpack.c.h.b16 %v486
        %v1958 = vunpack.c.l.b16 %v487
        %v1959 = vunpack.c.l.b16 %v488
        %v1960 = vunpack.c.h.b16 %v488
        %v1961 = vunpack.c.l.b16 %v489
        %v1962 = vunpack.c.l.b16 %v490
        %v1963 = vunpack.c.h.b16 %v490
        %v1964 = vunpack.c.l.b16 %v491
        %v1965 = vunpack.c.l.b16 %v492
        %v1966 = vunpack.c.h.b16 %v492
        %v1967 = vunpack.c.l.b16 %v493
        %v1968 = vunpack.c.l.b16 %v494
        %v1969 = vunpack.c.h.b16 %v494
        %v1970 = vunpack.c.l.b16 %v495
        %v1971 = vunpack.c.l.b16 %v496
        %v1972 = vunpack.c.h.b16 %v496
        %v1973 = vunpack.c.l.b16 %v497
        %v1974 = vunpack.c.l.b16 %v498
        %v1975 = vunpack.c.h.b16 %v498
        %v1976 = vunpack.c.l.b16 %v499
        %v1977 = vunpack.c.l.b16 %v500
        %v1978 = vunpack.c.h.b16 %v500
        %v1979 = vunpack.c.l.b16 %v501
        %v1980 = vunpack.c.l.b16 %v502
        %v1981 = vunpack.c.h.b16 %v502
        %v1982 = vunpack.c.l.b16 %v503
        %v1983 = vunpack.c.l.b16 %v504
        %v1984 = vunpack.c.h.b16 %v504
        %v1985 = vunpack.c.l.b16 %v505
        %v1986 = vunpack.c.l.b16 %v506
        %v1987 = vunpack.c.h.b16 %v506
        %v1988 = vunpack.c.l.b16 %v507
        %v1989 = vunpack.c.l.b16 %v508
        %v1990 = vunpack.c.h.b16 %v508
        %v1991 = vunpack.c.l.b16 %v509
        %v1992 = vunpack.c.l.b16 %v510
        %v1993 = vunpack.c.h.b16 %v510
        %v1994 = vunpack.c.l.b16 %v511
        %v1995 = vunpack.c.l.b16 %v512
        %v1996 = vunpack.c.h.b16 %v512
        %v1997 = vunpack.c.l.b16 %v513
        %v1998 = vunpack.c.l.b16 %v514
        %v1999 = vunpack.c.h.b16 %v514
        %v2000 = vunpack.c.l.b16 %v515
        %v2001 = vunpack.c.l.b16 %v516
        %v2002 = vunpack.c.h.b16 %v516
        %v2003 = vunpack.c.l.b16 %v517
        %v2004 = vunpack.c.l.b16 %v518
        %v2005 = vunpack.c.h.b16 %v518
        %v2006 = vunpack.c.l.b16 %v519
        %v2007 = vunpack.c.l.b16 %v520
        %v2008 = vunpack.c.h.b16 %v520
        %v2009 = vunpack.c.l.b16 %v521
        %v2010 = vunpack.c.l.b16 %v522
        %v2011 = vunpack.c.h.b16 %v522
        %v2012 = vunpack.c.l.b16 %v523
        %v2013 = vunpack.c.l.b16 %v524
        %v2014 = vunpack.c.h.b16 %v524
        %v2015 = vunpack.c.l.b16 %v525
        %v2016 = vunpack.c.l.b16 %v526
        %v2017 = vunpack.c.h.b16 %v526
        %v2018 = vunpack.c.l.b16 %v527
        %v2019 = vunpack.c.l.b16 %v528
        %v2020 = vunpack.c.h.b16 %v528
        %v2021 = vunpack.c.l.b16 %v529
        %v2022 = vunpack.c.l.b16 %v530
        %v2023 = vunpack.c.h.b16 %v530
        %v2024 = vunpack.c.l.b16 %v531
        %v2025 = vunpack.c.l.b16 %v532
        %v2026 = vunpack.c.h.b16 %v532
        %v2027 = vunpack.c.l.b16 %v533
        %v2028 = vunpack.c.l.b16 %v534
        %v2029 = vunpack.c.h.b16 %v534
        %v2030 = vunpack.c.l.b16 %v535
        %v2031 = vunpack.c.l.b16 %v536
        %v2032 = vunpack.c.h.b16 %v536
        %v2033 = vunpack.c.l.b16 %v537
        %v2034 = vunpack.c.l.b16 %v538
        %v2035 = vunpack.c.h.b16 %v538
        %v2036 = vunpack.c.l.b16 %v539
        %v2037 = vunpack.c.l.b16 %v540
        %v2038 = vunpack.c.h.b16 %v540
        %v2039 = vunpack.c.l.b16 %v541
        %v2040 = vunpack.c.l.b16 %v542
        %v2041 = vunpack.c.h.b16 %v542
        %v2042 = vunpack.c.l.b16 %v543
        %v2043 = vunpack.c.l.b16 %v544
        %v2044 = vunpack.c.h.b16 %v544
        %v2045 = vunpack.c.l.b16 %v545
        %v2046 = vunpack.c.l.b16 %v546
        %v2047 = vunpack.c.h.b16 %v546
        %v2048 = vunpack.c.l.b16 %v547
        %v2049 = vunpack.c.l.b16 %v548
        %v2050 = vunpack.c.h.b16 %v548
        %v2051 = vunpack.c.l.b16 %v549
        %v2052 = vunpack.c.l.b16 %v550
        %v2053 = vunpack.c.h.b16 %v550
        %v2054 = vunpack.c.l.b16 %v551
        %v2055 = vunpack.c.l.b16 %v552
        %v2056 = vunpack.c.h.b16 %v552
        %v2057 = vunpack.c.l.b16 %v553
        %v2058 = vunpack.c.l.b16 %v554
        %v2059 = vunpack.c.h.b16 %v554
        %v2060 = vunpack.c.l.b16 %v555
        %v2061 = vunpack.c.l.b16 %v556
        %v2062 = vunpack.c.h.b16 %v556
        %v2063 = vunpack.c.l.b16 %v557
        %v2064 = vunpack.c.l.b16 %v558
        %v2065 = vunpack.c.h.b16 %v558
        %v2066 = vunpack.c.l.b16 %v559
        %v2067 = vunpack.c.l.b16 %v560
        %v2068 = vunpack.c.h.b16 %v560
        %v2069 = vunpack.c.l.b16 %v561
        %v2070 = vunpack.c.l.b16 %v562
        %v2071 = vunpack.c.h.b16 %v562
        %v2072 = vunpack.c.l.b16 %v563
        %v2073 = vunpack.c.l.b16 %v564
        %v2074 = vunpack.c.h.b16 %v564
        %v2075 = vunpack.c.l.b16 %v565
        %v2076 = vunpack.c.l.b16 %v566
        %v2077 = vunpack.c.h.b16 %v566
        %v2078 = vunpack.c.l.b16 %v567
        %v2079 = vunpack.c.l.b16 %v568
        %v2080 = vunpack.c.h.b16 %v568
        %v2081 = vunpack.c.l.b16 %v569
        %v2082 = vunpack.c.l.b16 %v570
        %v2083 = vunpack.c.h.b16 %v570
        %v2084 = vunpack.c.l.b16 %v571
        %v2085 = vunpack.c.l.b16 %v572
        %v2086 = vunpack.c.h.b16 %v572
        %v2087 = vunpack.c.l.b16 %v573
        %v2088 = vunpack.c.l.b16 %v574
        %v2089 = vunpack.c.h.b16 %v574
        %v2090 = vunpack.c.l.b16 %v575
        %v2091 = vunpack.c.l.b16 %v576
        %v2092 = vunpack.c.h.b16 %v576
        %v2093 = vunpack.c.l.b16 %v577
        %v2094 = vunpack.c.l.b16 %v578
        %v2095 = vunpack.c.h.b16 %v578
        %v2096 = vunpack.c.l.b16 %v579
        %v2097 = vunpack.c.l.b16 %v580
        %v2098 = vunpack.c.h.b16 %v580
        %v2099 = vunpack.c.l.b16 %v581
        %v2100 = vunpack.c.l.b16 %v582
        %v2101 = vunpack.c.h.b16 %v582
        %v2102 = vunpack.c.l.b16 %v583
        %v2103 = vunpack.c.l.b16 %v584
        %v2104 = vunpack.c.h.b16 %v584
        %v2105 = vunpack.c.l.b16 %v585
        %v2106 = vunpack.c.l.b16 %v586
        %v2107 = vunpack.c.h.b16 %v586
        %v2108 = vunpack.c.l.b16 %v587
        %v2109 = vunpack.c.l.b16 %v588
        %v2110 = vunpack.c.h.b16 %v588
        %v2111 = vunpack.c.l.b16 %v589
        %v2112 = vunpack.c.l.b16 %v590
        %v2113 = vunpack.c.h.b16 %v590
        %v2114 = vunpack.c.l.b16 %v591
        %v2115 = vunpack.c.l.b16 %v592
        %v2116 = vunpack.c.h.b16 %v592
        %v2117 = vunpack.c.l.b16 %v593
        %v2118 = vunpack.c.l.b16 %v594
        %v2119 = vunpack.c.h.b16 %v594
        %v2120 = vunpack.c.l.b16 %v595
        %v2121 = vunpack.c.l.b16 %v596
        %v2122 = vunpack.c.h.b16 %v596
        %v2123 = vunpack.c.l.b16 %v597
        %v2124 = vunpack.c.l.b16 %v598
        %v2125 = vunpack.c.h.b16 %v598
        %v2126 = vunpack.c.l.b16 %v599
        %v2127 = vunpack.c.l.b16 %v600
        %v2128 = vunpack.c.h.b16 %v600
        %v2129 = vunpack.c.l.b16 %v601
        %v2130 = vunpack.c.l.b16 %v602
        %v2131 = vunpack.c.h.b16 %v602
        %v2132 = vunpack.c.l.b16 %v603
        %v2133 = vunpack.c.l.b16 %v604
        %v2134 = vunpack.c.h.b16 %v604
        %v2135 = vunpack.c.l.b16 %v605
        %v2136 = vunpack.c.l.b16 %v606
        %v2137 = vunpack.c.h.b16 %v606
        %v2138 = vunpack.c.l.b16 %v607
        %v2139 = vunpack.c.l.b16 %v608
        %v2140 = vunpack.c.h.b16 %v608
        %v2141 = vunpack.c.l.b16 %v609
        %v2142 = vunpack.c.l.b16 %v610
        %v2143 = vunpack.c.h.b16 %v610
        %v2144 = vunpack.c.l.b16 %v611
        %v2145 = vunpack.c.l.b16 %v612
        %v2146 = vunpack.c.h.b16 %v612
        %v2147 = vunpack.c.l.b16 %v613
        %v2148 = vunpack.c.l.b16 %v614
        %v2149 = vunpack.c.h.b16 %v614
        %v2150 = vunpack.c.l.b16 %v615
        %v2151 = vunpack.c.l.b16 %v616
        %v2152 = vunpack.c.h.b16 %v616
        %v2153 = vunpack.c.l.b16 %v617
        %v2154 = vunpack.c.l.b16 %v618
        %v2155 = vunpack.c.h.b16 %v618
        %v2156 = vunpack.c.l.b16 %v619
        %v2157 = vunpack.c.l.b16 %v620
        %v2158 = vunpack.c.h.b16 %v620
        %v2159 = vunpack.c.l.b16 %v621
        %v2160 = vunpack.c.l.b16 %v622
        %v2161 = vunpack.c.h.b16 %v622
        %v2162 = vunpack.c.l.b16 %v623
        %v2163 = vunpack.c.l.b16 %v624
        %v2164 = vunpack.c.h.b16 %v624
        %v2165 = vunpack.c.l.b16 %v625
        %v2166 = vunpack.c.l.b16 %v626
        %v2167 = vunpack.c.h.b16 %v626
        %v2168 = vunpack.c.l.b16 %v627
        %v2169 = vunpack.c.l.b16 %v628
        %v2170 = vunpack.c.h.b16 %v628
        %v2171 = vunpack.c.l.b16 %v629
        %v2172 = vunpack.c.l.b16 %v630
        %v2173 = vunpack.c.h.b16 %v630
        %v2174 = vunpack.c.l.b16 %v631
        %v2175 = vunpack.c.l.b16 %v632
        %v2176 = vunpack.c.h.b16 %v632
        %v2177 = vunpack.c.l.b16 %v633
        %v2178 = vunpack.c.l.b16 %v634
        %v2179 = vunpack.c.h.b16 %v634
        %v2180 = vunpack.c.l.b16 %v635
        %v2181 = vunpack.c.l.b16 %v636
        %v2182 = vunpack.c.h.b16 %v636
        %v2183 = vunpack.c.l.b16 %v637
        %v2184 = vunpack.c.l.b16 %v638
        %v2185 = vunpack.c.h.b16 %v638
        %v2186 = vunpack.c.l.b16 %v639
        %v2187 = vunpack.c.l.b16 %v640
        %v2188 = vunpack.c.h.b16 %v640
        %v2189 = vunpack.c.l.b16 %v641
        %v2190 = vunpack.c.l.b16 %v642
        %v2191 = vunpack.c.h.b16 %v642
        %v2192 = vunpack.c.l.b16 %v643
        %v2193 = vunpack.c.l.b16 %v644
        %v2194 = vunpack.c.h.b16 %v644
        %v2195 = vunpack.c.l.b16 %v645
        %v2196 = vunpack.c.l.b16 %v646
        %v2197 = vunpack.c.h.b16 %v646
        %v2198 = vunpack.c.l.b16 %v647
        %v2199 = vunpack.c.l.b16 %v648
        %v2200 = vunpack.c.h.b16 %v648
        %v2201 = vunpack.c.l.b16 %v649
        %v2202 = vunpack.c.l.b16 %v650
        %v2203 = vunpack.c.h.b16 %v650
        %v2204 = vunpack.c.l.b16 %v651
        %v2205 = vunpack.c.l.b16 %v652
        %v2206 = vunpack.c.h.b16 %v652
        %v2207 = vunpack.c.l.b16 %v653
        %v2208 = vunpack.c.l.b16 %v654
        %v2209 = vunpack.c.h.b16 %v654
        %v2210 = vunpack.c.l.b16 %v655
        %v2211 = vunpack.c.l.b16 %v656
        %v2212 = vunpack.c.h.b16 %v656
        %v2213 = vunpack.c.l.b16 %v657
        %v2214 = vunpack.c.l.b16 %v658
        %v2215 = vunpack.c.h.b16 %v658
        %v2216 = vunpack.c.l.b16 %v659
        %v2217 = vunpack.c.l.b16 %v660
        %v2218 = vunpack.c.h.b16 %v660
        %v2219 = vunpack.c.l.b16 %v661
        %v2220 = vunpack.c.l.b16 %v662
        %v2221 = vunpack.c.h.b16 %v662
        %v2222 = vunpack.c.l.b16 %v663
        %v2223 = vunpack.c.l.b16 %v664
        %v2224 = vunpack.c.h.b16 %v664
        %v2225 = vunpack.c.l.b16 %v665
        %v2226 = vunpack.c.l.b16 %v666
        %v2227 = vunpack.c.h.b16 %v666
        %v2228 = vunpack.c.l.b16 %v667
        %v2229 = vunpack.c.l.b16 %v668
        %v2230 = vunpack.c.h.b16 %v668
        %v2231 = vunpack.c.l.b16 %v669
        %v2232 = vunpack.c.l.b16 %v670
        %v2233 = vunpack.c.h.b16 %v670
        %v2234 = vunpack.c.l.b16 %v671
        %v2235 = vunpack.c.l.b16 %v672
        %v2236 = vunpack.c.h.b16 %v672
        %v2237 = vunpack.c.l.b16 %v673
        %v2238 = vunpack.c.l.b16 %v674
        %v2239 = vunpack.c.h.b16 %v674
        %v2240 = vunpack.c.l.b16 %v675
        %v2241 = vunpack.c.l.b16 %v676
        %v2242 = vunpack.c.h.b16 %v676
        %v2243 = vunpack.c.l.b16 %v677
        %v2244 = vunpack.c.l.b16 %v678
        %v2245 = vunpack.c.h.b16 %v678
        %v2246 = vunpack.c.l.b16 %v679
        %v2247 = vunpack.c.l.b16 %v680
        %v2248 = vunpack.c.h.b16 %v680
        %v2249 = vunpack.c.l.b16 %v681
        %v2250 = vunpack.c.l.b16 %v682
        %v2251 = vunpack.c.h.b16 %v682
        %v2252 = vunpack.c.l.b16 %v683
        %v2253 = vunpack.c.l.b16 %v684
        %v2254 = vunpack.c.h.b16 %v684
        %v2255 = vunpack.c.l.b16 %v685
        %v2256 = vunpack.c.l.b16 %v686
        %v2257 = vunpack.c.h.b16 %v686
        %v2258 = vunpack.c.l.b16 %v687
        %v2259 = vunpack.c.l.b16 %v688
        %v2260 = vunpack.c.h.b16 %v688
        %v2261 = vunpack.c.l.b16 %v689
        %v2262 = vunpack.c.l.b16 %v690
        %v2263 = vunpack.c.h.b16 %v690
        %v2264 = vunpack.c.l.b16 %v691
        %v2265 = vunpack.c.l.b16 %v692
        %v2266 = vunpack.c.h.b16 %v692
        %v2267 = vunpack.c.l.b16 %v693
        %v2268 = vunpack.c.l.b16 %v694
        %v2269 = vunpack.c.h.b16 %v694
        %v2270 = vunpack.c.l.b16 %v695
        %v2271 = vunpack.c.l.b16 %v696
        %v2272 = vunpack.c.h.b16 %v696
        %v2273 = vunpack.c.l.b16 %v697
        %v2274 = vunpack.c.l.b16 %v698
        %v2275 = vunpack.c.h.b16 %v698
        %v2276 = vunpack.c.l.b16 %v699
        %v2277 = vunpack.c.l.b16 %v700
        %v2278 = vunpack.c.h.b16 %v700
        %v2279 = vunpack.c.l.b16 %v701
        %v2280 = vunpack.c.l.b16 %v702
        %v2281 = vunpack.c.h.b16 %v702
        %v2282 = vunpack.c.l.b16 %v703
        %v2283 = vunpack.c.l.b16 %v704
        %v2284 = vunpack.c.h.b16 %v704
        %v2285 = vunpack.c.l.b16 %v705
        %v2286 = vunpack.c.l.b16 %v706
        %v2287 = vunpack.c.h.b16 %v706
        %v2288 = vunpack.c.l.b16 %v707
        %v2289 = vunpack.c.l.b16 %v708
        %v2290 = vunpack.c.h.b16 %v708
        %v2291 = vunpack.c.l.b16 %v709
        %v2292 = vunpack.c.l.b16 %v710
        %v2293 = vunpack.c.h.b16 %v710
        %v2294 = vunpack.c.l.b16 %v711
        %v2295 = vunpack.c.l.b16 %v712
        %v2296 = vunpack.c.h.b16 %v712
        %v2297 = vunpack.c.l.b16 %v713
        %v2298 = vunpack.c.l.b16 %v714
        %v2299 = vunpack.c.h.b16 %v714
        %v2300 = vunpack.c.l.b16 %v715
        %v2301 = vunpack.c.l.b16 %v716
        %v2302 = vunpack.c.h.b16 %v716
        %v2303 = vunpack.c.l.b16 %v717
        %v2304 = vunpack.c.l.b16 %v718
        %v2305 = vunpack.c.h.b16 %v718
        %v2306 = vunpack.c.l.b16 %v719
        %v2307 = vunpack.c.l.b16 %v720
        %v2308 = vunpack.c.h.b16 %v720
        %v2309 = vunpack.c.l.b16 %v721
        %v2310 = vunpack.c.l.b16 %v722
        %v2311 = vunpack.c.h.b16 %v722
        %v2312 = vunpack.c.l.b16 %v723
        %v2313 = vunpack.c.l.b16 %v724
        %v2314 = vunpack.c.h.b16 %v724
        %v2315 = vunpack.c.l.b16 %v725
        %v2316 = vunpack.c.l.b16 %v726
        %v2317 = vunpack.c.h.b16 %v726
        %v2318 = vunpack.c.l.b16 %v727
        %v2319 = vunpack.c.l.b16 %v728
        %v2320 = vunpack.c.h.b16 %v728
        %v2321 = vunpack.c.l.b16 %v729
        %v2322 = vunpack.c.l.b16 %v730
        %v2323 = vunpack.c.h.b16 %v730
        %v2324 = vunpack.c.l.b16 %v731
        %v2325 = vunpack.c.l.b16 %v732
        %v2326 = vunpack.c.h.b16 %v732
        %v2327 = vunpack.c.l.b16 %v733
        %v2328 = vunpack.c.l.b16 %v734
        %v2329 = vunpack.c.h.b16 %v734
        %v2330 = vunpack.c.l.b16 %v735
        %v2331 = vunpack.c.l.b16 %v736
        %v2332 = vunpack.c.h.b16 %v736
        %v2333 = vunpack.c.l.b16 %v737
        %v2334 = vunpack.c.l.b16 %v738
        %v2335 = vunpack.c.h.b16 %v738
        %v2336 = vunpack.c.l.b16 %v739
        %v2337 = vunpack.c.l.b16 %v740
        %v2338 = vunpack.c.h.b16 %v740
        %v2339 = vunpack.c.l.b16 %v741
        %v2340 = vunpack.c.l.b16 %v742
        %v2341 = vunpack.c.h.b16 %v742
        %v2342 = vunpack.c.l.b16 %v743
        %v2343 = vunpack.c.l.b16 %v744
        %v2344 = vunpack.c.h.b16 %v744
        %v2345 = vunpack.c.l.b16 %v745
        %v2346 = vpack.c.b16 %v1581, %v1578
        %v2347 = vpack.c.b16 %v1582, %v1579
        %v2348 = vpack.c.b16 %v1583, %v1580
        %v2349 = vpack.c.b16 %v1587, %v1584
        %v2350 = vpack.c.b16 %v1588, %v1585
        %v2351 = vpack.c.b16 %v1589, %v1586
        %v2352 = vpack.c.b16 %v1593, %v1590
        %v2353 = vpack.c.b16 %v1594, %v1591
        %v2354 = vpack.c.b16 %v1595, %v1592
        %v2355 = vpack.c.b16 %v1599, %v1596
        %v2356 = vpack.c.b16 %v1600, %v1597
        %v2357 = vpack.c.b16 %v1601, %v1598
        %v2358 = vpack.c.b16 %v1605, %v1602
        %v2359 = vpack.c.b16 %v1606, %v1603
        %v2360 = vpack.c.b16 %v1607, %v1604
        %v2361 = vpack.c.b16 %v1611, %v1608
        %v2362 = vpack.c.b16 %v1612, %v1609
        %v2363 = vpack.c.b16 %v1613, %v1610
        %v2364 = vpack.c.b16 %v1617, %v1614
        %v2365 = vpack.c.b16 %v1618, %v1615
        %v2366 = vpack.c.b16 %v1619, %v1616
        %v2367 = vpack.c.b16 %v1623, %v1620
        %v2368 = vpack.c.b16 %v1624, %v1621
        %v2369 = vpack.c.b16 %v1625, %v1622
        %v2370 = vpack.c.b16 %v1629, %v1626
        %v2371 = vpack.c.b16 %v1630, %v1627
        %v2372 = vpack.c.b16 %v1631, %v1628
        %v2373 = vpack.c.b16 %v1635, %v1632
        %v2374 = vpack.c.b16 %v1636, %v1633
        %v2375 = vpack.c.b16 %v1637, %v1634
        %v2376 = vpack.c.b16 %v1641, %v1638
        %v2377 = vpack.c.b16 %v1642, %v1639
        %v2378 = vpack.c.b16 %v1643, %v1640
        %v2379 = vpack.c.b16 %v1647, %v1644
        %v2380 = vpack.c.b16 %v1648, %v1645
        %v2381 = vpack.c.b16 %v1649, %v1646
        %v2382 = vpack.c.b16 %v1653, %v1650
        %v2383 = vpack.c.b16 %v1654, %v1651
        %v2384 = vpack.c.b16 %v1655, %v1652
        %v2385 = vpack.c.b16 %v1659, %v1656
        %v2386 = vpack.c.b16 %v1660, %v1657
        %v2387 = vpack.c.b16 %v1661, %v1658
        %v2388 = vpack.c.b16 %v1665, %v1662
        %v2389 = vpack.c.b16 %v1666, %v1663
        %v2390 = vpack.c.b16 %v1667, %v1664
        %v2391 = vpack.c.b16 %v1671, %v1668
        %v2392 = vpack.c.b16 %v1672, %v1669
        %v2393 = vpack.c.b16 %v1673, %v1670
        %v2394 = vpack.c.b16 %v1677, %v1674
        %v2395 = vpack.c.b16 %v1678, %v1675
        %v2396 = vpack.c.b16 %v1679, %v1676
        %v2397 = vpack.c.b16 %v1683, %v1680
        %v2398 = vpack.c.b16 %v1684, %v1681
        %v2399 = vpack.c.b16 %v1685, %v1682
        %v2400 = vpack.c.b16 %v1689, %v1686
        %v2401 = vpack.c.b16 %v1690, %v1687
        %v2402 = vpack.c.b16 %v1691, %v1688
        %v2403 = vpack.c.b16 %v1695, %v1692
        %v2404 = vpack.c.b16 %v1696, %v1693
        %v2405 = vpack.c.b16 %v1697, %v1694
        %v2406 = vpack.c.b16 %v1701, %v1698
        %v2407 = vpack.c.b16 %v1702, %v1699
        %v2408 = vpack.c.b16 %v1703, %v1700
        %v2409 = vpack.c.b16 %v1707, %v1704
        %v2410 = vpack.c.b16 %v1708, %v1705
        %v2411 = vpack.c.b16 %v1709, %v1706
        %v2412 = vpack.c.b16 %v1713, %v1710
        %v2413 = vpack.c.b16 %v1714, %v1711
        %v2414 = vpack.c.b16 %v1715, %v1712
        %v2415 = vpack.c.b16 %v1719, %v1716
        %v2416 = vpack.c.b16 %v1720, %v1717
        %v2417 = vpack.c.b16 %v1721, %v1718
        %v2418 = vpack.c.b16 %v1725, %v1722
        %v2419 = vpack.c.b16 %v1726, %v1723
        %v2420 = vpack.c.b16 %v1727, %v1724
        %v2421 = vpack.c.b16 %v1731, %v1728
        %v2422 = vpack.c.b16 %v1732, %v1729
        %v2423 = vpack.c.b16 %v1733, %v1730
        %v2424 = vpack.c.b16 %v1737, %v1734
        %v2425 = vpack.c.b16 %v1738, %v1735
        %v2426 = vpack.c.b16 %v1739, %v1736
        %v2427 = vpack.c.b16 %v1743, %v1740
        %v2428 = vpack.c.b16 %v1744, %v1741
        %v2429 = vpack.c.b16 %v1745, %v1742
        %v2430 = vpack.c.b16 %v1749, %v1746
        %v2431 = vpack.c.b16 %v1750, %v1747
        %v2432 = vpack.c.b16 %v1751, %v1748
        %v2433 = vpack.c.b16 %v1755, %v1752
        %v2434 = vpack.c.b16 %v1756, %v1753
        %v2435 = vpack.c.b16 %v1757, %v1754
        %v2436 = vpack.c.b16 %v1761, %v1758
        %v2437 = vpack.c.b16 %v1762, %v1759
        %v2438 = vpack.c.b16 %v1763, %v1760
        %v2439 = vpack.c.b16 %v1767, %v1764
        %v2440 = vpack.c.b16 %v1768, %v1765
        %v2441 = vpack.c.b16 %v1769, %v1766
        %v2442 = vpack.c.b16 %v1773, %v1770
        %v2443 = vpack.c.b16 %v1774, %v1771
        %v2444 = vpack.c.b16 %v1775, %v1772
        %v2445 = vpack.c.b16 %v1779, %v1776
        %v2446 = vpack.c.b16 %v1780, %v1777
        %v2447 = vpack.c.b16 %v1781, %v1778
        %v2448 = vpack.c.b16 %v1785, %v1782
        %v2449 = vpack.c.b16 %v1786, %v1783
        %v2450 = vpack.c.b16 %v1787, %v1784
        %v2451 = vpack.c.b16 %v1791, %v1788
        %v2452 = vpack.c.b16 %v1792, %v1789
        %v2453 = vpack.c.b16 %v1793, %v1790
        %v2454 = vpack.c.b16 %v1797, %v1794
        %v2455 = vpack.c.b16 %v1798, %v1795
        %v2456 = vpack.c.b16 %v1799, %v1796
        %v2457 = vpack.c.b16 %v1803, %v1800
        %v2458 = vpack.c.b16 %v1804, %v1801
        %v2459 = vpack.c.b16 %v1805, %v1802
        %v2460 = vpack.c.b16 %v1809, %v1806
        %v2461 = vpack.c.b16 %v1810, %v1807
        %v2462 = vpack.c.b16 %v1811, %v1808
        %v2463 = vpack.c.b16 %v1815, %v1812
        %v2464 = vpack.c.b16 %v1816, %v1813
        %v2465 = vpack.c.b16 %v1817, %v1814
        %v2466 = vpack.c.b16 %v1821, %v1818
        %v2467 = vpack.c.b16 %v1822, %v1819
        %v2468 = vpack.c.b16 %v1823, %v1820
        %v2469 = vpack.c.b16 %v1827, %v1824
        %v2470 = vpack.c.b16 %v1828, %v1825
        %v2471 = vpack.c.b16 %v1829, %v1826
        %v2472 = vpack.c.b16 %v1833, %v1830
        %v2473 = vpack.c.b16 %v1834, %v1831
        %v2474 = vpack.c.b16 %v1835, %v1832
        %v2475 = vpack.c.b16 %v1839, %v1836
        %v2476 = vpack.c.b16 %v1840, %v1837
        %v2477 = vpack.c.b16 %v1841, %v1838
        %v2478 = vpack.c.b16 %v1845, %v1842
        %v2479 = vpack.c.b16 %v1846, %v1843
        %v2480 = vpack.c.b16 %v1847, %v1844
        %v2481 = vpack.c.b16 %v1851, %v1848
        %v2482 = vpack.c.b16 %v1852, %v1849
        %v2483 = vpack.c.b16 %v1853, %v1850
        %v2484 = vpack.c.b16 %v1857, %v1854
        %v2485 = vpack.c.b16 %v1858, %v1855
        %v2486 = vpack.c.b16 %v1859, %v1856
        %v2487 = vpack.c.b16 %v1863, %v1860
        %v2488 = vpack.c.b16 %v1864, %v1861
        %v2489 = vpack.c.b16 %v1865, %v1862
        %v2490 = vpack.c.b16 %v1869, %v1866
        %v2491 = vpack.c.b16 %v1870, %v1867
        %v2492 = vpack.c.b16 %v1871, %v1868
        %v2493 = vpack.c.b16 %v1875, %v1872
        %v2494 = vpack.c.b16 %v1876, %v1873
        %v2495 = vpack.c.b16 %v1877, %v1874
        %v2496 = vpack.c.b16 %v1881, %v1878
        %v2497 = vpack.c.b16 %v1882, %v1879
        %v2498 = vpack.c.b16 %v1883, %v1880
        %v2499 = vpack.c.b16 %v1887, %v1884
        %v2500 = vpack.c.b16 %v1888, %v1885
        %v2501 = vpack.c.b16 %v1889, %v1886
        %v2502 = vpack.c.b16 %v1893, %v1890
        %v2503 = vpack.c.b16 %v1894, %v1891
        %v2504 = vpack.c.b16 %v1895, %v1892
        %v2505 = vpack.c.b16 %v1899, %v1896
        %v2506 = vpack.c.b16 %v1900, %v1897
        %v2507 = vpack.c.b16 %v1901, %v1898
        %v2508 = vpack.c.b16 %v1905, %v1902
        %v2509 = vpack.c.b16 %v1906, %v1903
        %v2510 = vpack.c.b16 %v1907, %v1904
        %v2511 = vpack.c.b16 %v1911, %v1908
        %v2512 = vpack.c.b16 %v1912, %v1909
        %v2513 = vpack.c.b16 %v1913, %v1910
        %v2514 = vpack.c.b16 %v1917, %v1914
        %v2515 = vpack.c.b16 %v1918, %v1915
        %v2516 = vpack.c.b16 %v1919, %v1916
        %v2517 = vpack.c.b16 %v1923, %v1920
        %v2518 = vpack.c.b16 %v1924, %v1921
        %v2519 = vpack.c.b16 %v1925, %v1922
        %v2520 = vpack.c.b16 %v1929, %v1926
        %v2521 = vpack.c.b16 %v1930, %v1927
        %v2522 = vpack.c.b16 %v1931, %v1928
        %v2523 = vpack.c.b16 %v1935, %v1932
        %v2524 = vpack.c.b16 %v1936, %v1933
        %v2525 = vpack.c.b16 %v1937, %v1934
        %v2526 = vpack.c.b16 %v1941, %v1938
        %v2527 = vpack.c.b16 %v1942, %v1939
        %v2528 = vpack.c.b16 %v1943, %v1940
        %v2529 = vpack.c.b16 %v1947, %v1944
        %v2530 = vpack.c.b16 %v1948, %v1945
        %v2531 = vpack.c.b16 %v1949, %v1946
        %v2532 = vpack.c.b16 %v1953, %v1950
        %v2533 = vpack.c.b16 %v1954, %v1951
        %v2534 = vpack.c.b16 %v1955, %v1952
        %v2535 = vpack.c.b16 %v1959, %v1956
        %v2536 = vpack.c.b16 %v1960, %v1957
        %v2537 = vpack.c.b16 %v1961, %v1958
        %v2538 = vpack.c.b16 %v1965, %v1962
        %v2539 = vpack.c.b16 %v1966, %v1963
        %v2540 = vpack.c.b16 %v1967, %v1964
        %v2541 = vpack.c.b16 %v1971, %v1968
        %v2542 = vpack.c.b16 %v1972, %v1969
        %v2543 = vpack.c.b16 %v1973, %v1970
        %v2544 = vpack.c.b16 %v1977, %v1974
        %v2545 = vpack.c.b16 %v1978, %v1975
        %v2546 = vpack.c.b16 %v1979, %v1976
        %v2547 = vpack.c.b16 %v1983, %v1980
        %v2548 = vpack.c.b16 %v1984, %v1981
        %v2549 = vpack.c.b16 %v1985, %v1982
        %v2550 = vpack.c.b16 %v1989, %v1986
        %v2551 = vpack.c.b16 %v1990, %v1987
        %v2552 = vpack.c.b16 %v1991, %v1988
        %v2553 = vpack.c.b16 %v1995, %v1992
        %v2554 = vpack.c.b16 %v1996, %v1993
        %v2555 = vpack.c.b16 %v1997, %v1994
        %v2556 = vpack.c.b16 %v2001, %v1998
        %v2557 = vpack.c.b16 %v2002, %v1999
        %v2558 = vpack.c.b16 %v2003, %v2000
        %v2559 = vpack.c.b16 %v2007, %v2004
        %v2560 = vpack.c.b16 %v2008, %v2005
        %v2561 = vpack.c.b16 %v2009, %v2006
        %v2562 = vpack.c.b16 %v2013, %v2010
        %v2563 = vpack.c.b16 %v2014, %v2011
        %v2564 = vpack.c.b16 %v2015, %v2012
        %v2565 = vpack.c.b16 %v2019, %v2016
        %v2566 = vpack.c.b16 %v2020, %v2017
        %v2567 = vpack.c.b16 %v2021, %v2018
        %v2568 = vpack.c.b16 %v2025, %v2022
        %v2569 = vpack.c.b16 %v2026, %v2023
        %v2570 = vpack.c.b16 %v2027, %v2024
        %v2571 = vpack.c.b16 %v2031, %v2028
        %v2572 = vpack.c.b16 %v2032, %v2029
        %v2573 = vpack.c.b16 %v2033, %v2030
        %v2574 = vpack.c.b16 %v2037, %v2034
        %v2575 = vpack.c.b16 %v2038, %v2035
        %v2576 = vpack.c.b16 %v2039, %v2036
        %v2577 = vpack.c.b16 %v2043, %v2040
        %v2578 = vpack.c.b16 %v2044, %v2041
        %v2579 = vpack.c.b16 %v2045, %v2042
        %v2580 = vpack.c.b16 %v2049, %v2046
        %v2581 = vpack.c.b16 %v2050, %v2047
        %v2582 = vpack.c.b16 %v2051, %v2048
        %v2583 = vpack.c.b16 %v2055, %v2052
        %v2584 = vpack.c.b16 %v2056, %v2053
        %v2585 = vpack.c.b16 %v2057, %v2054
        %v2586 = vpack.c.b16 %v2061, %v2058
        %v2587 = vpack.c.b16 %v2062, %v2059
        %v2588 = vpack.c.b16 %v2063, %v2060
        %v2589 = vpack.c.b16 %v2067, %v2064
        %v2590 = vpack.c.b16 %v2068, %v2065
        %v2591 = vpack.c.b16 %v2069, %v2066
        %v2592 = vpack.c.b16 %v2073, %v2070
        %v2593 = vpack.c.b16 %v2074, %v2071
        %v2594 = vpack.c.b16 %v2075, %v2072
        %v2595 = vpack.c.b16 %v2079, %v2076
        %v2596 = vpack.c.b16 %v2080, %v2077
        %v2597 = vpack.c.b16 %v2081, %v2078
        %v2598 = vpack.c.b16 %v2085, %v2082
        %v2599 = vpack.c.b16 %v2086, %v2083
        %v2600 = vpack.c.b16 %v2087, %v2084
        %v2601 = vpack.c.b16 %v2091, %v2088
        %v2602 = vpack.c.b16 %v2092, %v2089
        %v2603 = vpack.c.b16 %v2093, %v2090
        %v2604 = vpack.c.b16 %v2097, %v2094
        %v2605 = vpack.c.b16 %v2098, %v2095
        %v2606 = vpack.c.b16 %v2099, %v2096
        %v2607 = vpack.c.b16 %v2103, %v2100
        %v2608 = vpack.c.b16 %v2104, %v2101
        %v2609 = vpack.c.b16 %v2105, %v2102
        %v2610 = vpack.c.b16 %v2109, %v2106
        %v2611 = vpack.c.b16 %v2110, %v2107
        %v2612 = vpack.c.b16 %v2111, %v2108
        %v2613 = vpack.c.b16 %v2115, %v2112
        %v2614 = vpack.c.b16 %v2116, %v2113
        %v2615 = vpack.c.b16 %v2117, %v2114
        %v2616 = vpack.c.b16 %v2121, %v2118
        %v2617 = vpack.c.b16 %v2122, %v2119
        %v2618 = vpack.c.b16 %v2123, %v2120
        %v2619 = vpack.c.b16 %v2127, %v2124
        %v2620 = vpack.c.b16 %v2128, %v2125
        %v2621 = vpack.c.b16 %v2129, %v2126
        %v2622 = vpack.c.b16 %v2133, %v2130
        %v2623 = vpack.c.b16 %v2134, %v2131
        %v2624 = vpack.c.b16 %v2135, %v2132
        %v2625 = vpack.c.b16 %v2139, %v2136
        %v2626 = vpack.c.b16 %v2140, %v2137
        %v2627 = vpack.c.b16 %v2141, %v2138
        %v2628 = vpack.c.b16 %v2145, %v2142
        %v2629 = vpack.c.b16 %v2146, %v2143
        %v2630 = vpack.c.b16 %v2147, %v2144
        %v2631 = vpack.c.b16 %v2151, %v2148
        %v2632 = vpack.c.b16 %v2152, %v2149
        %v2633 = vpack.c.b16 %v2153, %v2150
        %v2634 = vpack.c.b16 %v2157, %v2154
        %v2635 = vpack.c.b16 %v2158, %v2155
        %v2636 = vpack.c.b16 %v2159, %v2156
        %v2637 = vpack.c.b16 %v2163, %v2160
        %v2638 = vpack.c.b16 %v2164, %v2161
        %v2639 = vpack.c.b16 %v2165, %v2162
        %v2640 = vpack.c.b16 %v2169, %v2166
        %v2641 = vpack.c.b16 %v2170, %v2167
        %v2642 = vpack.c.b16 %v2171, %v2168
        %v2643 = vpack.c.b16 %v2175, %v2172
        %v2644 = vpack.c.b16 %v2176, %v2173
        %v2645 = vpack.c.b16 %v2177, %v2174
        %v2646 = vpack.c.b16 %v2181, %v2178
        %v2647 = vpack.c.b16 %v2182, %v2179
        %v2648 = vpack.c.b16 %v2183, %v2180
        %v2649 = vpack.c.b16 %v2187, %v2184
        %v2650 = vpack.c.b16 %v2188, %v2185
        %v2651 = vpack.c.b16 %v2189, %v2186
        %v2652 = vpack.c.b16 %v2193, %v2190
        %v2653 = vpack.c.b16 %v2194, %v2191
        %v2654 = vpack.c.b16 %v2195, %v2192
        %v2655 = vpack.c.b16 %v2199, %v2196
        %v2656 = vpack.c.b16 %v2200, %v2197
        %v2657 = vpack.c.b16 %v2201, %v2198
        %v2658 = vpack.c.b16 %v2205, %v2202
        %v2659 = vpack.c.b16 %v2206, %v2203
        %v2660 = vpack.c.b16 %v2207, %v2204
        %v2661 = vpack.c.b16 %v2211, %v2208
        %v2662 = vpack.c.b16 %v2212, %v2209
        %v2663 = vpack.c.b16 %v2213, %v2210
        %v2664 = vpack.c.b16 %v2217, %v2214
        %v2665 = vpack.c.b16 %v2218, %v2215
        %v2666 = vpack.c.b16 %v2219, %v2216
        %v2667 = vpack.c.b16 %v2223, %v2220
        %v2668 = vpack.c.b16 %v2224, %v2221
        %v2669 = vpack.c.b16 %v2225, %v2222
        %v2670 = vpack.c.b16 %v2229, %v2226
        %v2671 = vpack.c.b16 %v2230, %v2227
        %v2672 = vpack.c.b16 %v2231, %v2228
        %v2673 = vpack.c.b16 %v2235, %v2232
        %v2674 = vpack.c.b16 %v2236, %v2233
        %v2675 = vpack.c.b16 %v2237, %v2234
        %v2676 = vpack.c.b16 %v2241, %v2238
        %v2677 = vpack.c.b16 %v2242, %v2239
        %v2678 = vpack.c.b16 %v2243, %v2240
        %v2679 = vpack.c.b16 %v2247, %v2244
        %v2680 = vpack.c.b16 %v2248, %v2245
        %v2681 = vpack.c.b16 %v2249, %v2246
        %v2682 = vpack.c.b16 %v2253, %v2250
        %v2683 = vpack.c.b16 %v2254, %v2251
        %v2684 = vpack.c.b16 %v2255, %v2252
        %v2685 = vpack.c.b16 %v2259, %v2256
        %v2686 = vpack.c.b16 %v2260, %v2257
        %v2687 = vpack.c.b16 %v2261, %v2258
        %v2688 = vpack.c.b16 %v2265, %v2262
        %v2689 = vpack.c.b16 %v2266, %v2263
        %v2690 = vpack.c.b16 %v2267, %v2264
        %v2691 = vpack.c.b16 %v2271, %v2268
        %v2692 = vpack.c.b16 %v2272, %v2269
        %v2693 = vpack.c.b16 %v2273, %v2270
        %v2694 = vpack.c.b16 %v2277, %v2274
        %v2695 = vpack.c.b16 %v2278, %v2275
        %v2696 = vpack.c.b16 %v2279, %v2276
        %v2697 = vpack.c.b16 %v2283, %v2280
        %v2698 = vpack.c.b16 %v2284, %v2281
        %v2699 = vpack.c.b16 %v2285, %v2282
        %v2700 = vpack.c.b16 %v2289, %v2286
        %v2701 = vpack.c.b16 %v2290, %v2287
        %v2702 = vpack.c.b16 %v2291, %v2288
        %v2703 = vpack.c.b16 %v2295, %v2292
        %v2704 = vpack.c.b16 %v2296, %v2293
        %v2705 = vpack.c.b16 %v2297, %v2294
        %v2706 = vpack.c.b16 %v2301, %v2298
        %v2707 = vpack.c.b16 %v2302, %v2299
        %v2708 = vpack.c.b16 %v2303, %v2300
        %v2709 = vpack.c.b16 %v2307, %v2304
        %v2710 = vpack.c.b16 %v2308, %v2305
        %v2711 = vpack.c.b16 %v2309, %v2306
        %v2712 = vpack.c.b16 %v2313, %v2310
        %v2713 = vpack.c.b16 %v2314, %v2311
        %v2714 = vpack.c.b16 %v2315, %v2312
        %v2715 = vpack.c.b16 %v2319, %v2316
        %v2716 = vpack.c.b16 %v2320, %v2317
        %v2717 = vpack.c.b16 %v2321, %v2318
        %v2718 = vpack.c.b16 %v2325, %v2322
        %v2719 = vpack.c.b16 %v2326, %v2323
        %v2720 = vpack.c.b16 %v2327, %v2324
        %v2721 = vpack.c.b16 %v2331, %v2328
        %v2722 = vpack.c.b16 %v2332, %v2329
        %v2723 = vpack.c.b16 %v2333, %v2330
        %v2724 = vpack.c.b16 %v2337, %v2334
        %v2725 = vpack.c.b16 %v2338, %v2335
        %v2726 = vpack.c.b16 %v2339, %v2336
        %v2727 = vpack.c.b16 %v2343, %v2340
        %v2728 = vpack.c.b16 %v2344, %v2341
        %v2729 = vpack.c.b16 %v2345, %v2342
        %3114 = vmatprep.subr.bf16.mxu0 %v2368
        %3115 = vmatpush1.bf16.msra.mxu0 %v2367
        %3116 = vmatprep.subr.bf16.mxu0 %v2365
        %3117 = vmatpush1.bf16.msra.mxu0 %v2364
        %3118 = vmatprep.subr.bf16.mxu0 %v2362
        %3119 = vmatpush1.bf16.msra.mxu0 %v2361
        %3120 = vmatprep.subr.bf16.mxu0 %v2359
        %3121 = vmatpush1.bf16.msra.mxu0 %v2358
        %3122 = vmatprep.subr.bf16.mxu0 %v2356
        %3123 = vmatpush1.bf16.msra.mxu0 %v2355
        %3124 = vmatprep.subr.bf16.mxu0 %v2353
        %3125 = vmatpush1.bf16.msra.mxu0 %v2352
        %3126 = vmatprep.subr.bf16.mxu0 %v2350
        %3127 = vmatpush1.bf16.msra.mxu0 %v2349
        %3128 = vmatprep.subr.bf16.mxu0 %v2347
        %3129 = vmatpush1.bf16.msra.mxu0 %v2346
        %3130 = vmatprep.subr.bf16.mxu0 %v2392
        %3131 = vmatpush2.bf16.msra.mxu0 %v2391
        %3132 = vmatprep.subr.bf16.mxu0 %v2389
        %3133 = vmatpush2.bf16.msra.mxu0 %v2388
        %3134 = vmatprep.subr.bf16.mxu0 %v2386
        %3135 = vmatpush2.bf16.msra.mxu0 %v2385
        %3136 = vmatprep.subr.bf16.mxu0 %v2383
        %3137 = vmatpush2.bf16.msra.mxu0 %v2382
        %3138 = vmatprep.subr.bf16.mxu0 %v2380
        %3139 = vmatpush2.bf16.msra.mxu0 %v2379
        %3140 = vmatprep.subr.bf16.mxu0 %v2377
        %3141 = vmatpush2.bf16.msra.mxu0 %v2376
        %3142 = vmatprep.subr.bf16.mxu0 %v2374
        %3143 = vmatpush2.bf16.msra.mxu0 %v2373
        %3144 = vmatprep.subr.bf16.mxu0 %v2371
        %3145 = vmatpush2.bf16.msra.mxu0 %v2370
        %3146 = vmatprep.mubr.bf16.mxu0 %v939
        %3147 = vmatmul.mubr.bf16.gmra.mxu0 %v938
        %v3148 = vpop.f32.mrf.mxu0
        %v3149 = vadd.f32 0.0, %v3148
        %v3150 = vpop.f32.mrf.mxu0
        %v3151 = vadd.f32 0.0, %v3150
        %v3152 = vpop.f32.mrf.mxu0
        %v3153 = vadd.f32 0.0, %v3152
        %v3154 = vpop.f32.mrf.mxu0
        %v3155 = vadd.f32 0.0, %v3154
        %3156 = vmatprep.mubr.bf16.mxu0 %v955
        %3157 = vmatmul.mubr.bf16.gmra.mxu0 %v954
        %v3158 = vpop.f32.mrf.mxu0
        %v3159 = vadd.f32 0.0, %v3158
        %v3160 = vpop.f32.mrf.mxu0
        %v3161 = vadd.f32 0.0, %v3160
        %v3162 = vpop.f32.mrf.mxu0
        %v3163 = vadd.f32 0.0, %v3162
        %v3164 = vpop.f32.mrf.mxu0
        %v3165 = vadd.f32 0.0, %v3164
        %3166 = vmatprep.mubr.bf16.mxu0 %v971
        %3167 = vmatmul.mubr.bf16.gmra.mxu0 %v970
        %v3168 = vpop.f32.mrf.mxu0
        %v3169 = vadd.f32 0.0, %v3168
        %v3170 = vpop.f32.mrf.mxu0
        %v3171 = vadd.f32 0.0, %v3170
        %v3172 = vpop.f32.mrf.mxu0
        %v3173 = vadd.f32 0.0, %v3172
        %v3174 = vpop.f32.mrf.mxu0
        %v3175 = vadd.f32 0.0, %v3174
        %3176 = vmatprep.mubr.bf16.mxu0 %v987
        %3177 = vmatmul.mubr.bf16.gmra.mxu0 %v986
        %v3178 = vpop.f32.mrf.mxu0
        %v3179 = vadd.f32 0.0, %v3178
        %v3180 = vpop.f32.mrf.mxu0
        %v3181 = vadd.f32 0.0, %v3180
        %v3182 = vpop.f32.mrf.mxu0
        %v3183 = vadd.f32 0.0, %v3182
        %v3184 = vpop.f32.mrf.mxu0
        %v3185 = vadd.f32 0.0, %v3184
        %3186 = vdwg.mxu0
        %3187 = vmatprep.subr.bf16.mxu0 %v2416
        %3188 = vmatpush1.bf16.msra.mxu0 %v2415
        %3189 = vmatprep.subr.bf16.mxu0 %v2413
        %3190 = vmatpush1.bf16.msra.mxu0 %v2412
        %3191 = vmatprep.subr.bf16.mxu0 %v2410
        %3192 = vmatpush1.bf16.msra.mxu0 %v2409
        %3193 = vmatprep.subr.bf16.mxu0 %v2407
        %3194 = vmatpush1.bf16.msra.mxu0 %v2406
        %3195 = vmatprep.subr.bf16.mxu0 %v2404
        %3196 = vmatpush1.bf16.msra.mxu0 %v2403
        %3197 = vmatprep.subr.bf16.mxu0 %v2401
        %3198 = vmatpush1.bf16.msra.mxu0 %v2400
        %3199 = vmatprep.subr.bf16.mxu0 %v2398
        %3200 = vmatpush1.bf16.msra.mxu0 %v2397
        %3201 = vmatprep.subr.bf16.mxu0 %v2395
        %3202 = vmatpush1.bf16.msra.mxu0 %v2394
        %3203 = vmatprep.subr.bf16.mxu0 %v2440
        %3204 = vmatpush2.bf16.msra.mxu0 %v2439
        %3205 = vmatprep.subr.bf16.mxu0 %v2437
        %3206 = vmatpush2.bf16.msra.mxu0 %v2436
        %3207 = vmatprep.subr.bf16.mxu0 %v2434
        %3208 = vmatpush2.bf16.msra.mxu0 %v2433
        %3209 = vmatprep.subr.bf16.mxu0 %v2431
        %3210 = vmatpush2.bf16.msra.mxu0 %v2430
        %3211 = vmatprep.subr.bf16.mxu0 %v2428
        %3212 = vmatpush2.bf16.msra.mxu0 %v2427
        %3213 = vmatprep.subr.bf16.mxu0 %v2425
        %3214 = vmatpush2.bf16.msra.mxu0 %v2424
        %3215 = vmatprep.subr.bf16.mxu0 %v2422
        %3216 = vmatpush2.bf16.msra.mxu0 %v2421
        %3217 = vmatprep.subr.bf16.mxu0 %v2419
        %3218 = vmatpush2.bf16.msra.mxu0 %v2418
        %3219 = vmatprep.mubr.bf16.mxu0 %v941
        %3220 = vmatmul.mubr.bf16.gmra.mxu0 %v940
        %v3221 = vpop.f32.mrf.mxu0
        %v3222 = vadd.f32 %v3149, %v3221
        %v3223 = vpop.f32.mrf.mxu0
        %v3224 = vadd.f32 %v3151, %v3223
        %v3225 = vpop.f32.mrf.mxu0
        %v3226 = vadd.f32 %v3153, %v3225
        %v3227 = vpop.f32.mrf.mxu0
        %v3228 = vadd.f32 %v3155, %v3227
        %3229 = vmatprep.mubr.bf16.mxu0 %v957
        %3230 = vmatmul.mubr.bf16.gmra.mxu0 %v956
        %v3231 = vpop.f32.mrf.mxu0
        %v3232 = vadd.f32 %v3159, %v3231
        %v3233 = vpop.f32.mrf.mxu0
        %v3234 = vadd.f32 %v3161, %v3233
        %v3235 = vpop.f32.mrf.mxu0
        %v3236 = vadd.f32 %v3163, %v3235
        %v3237 = vpop.f32.mrf.mxu0
        %v3238 = vadd.f32 %v3165, %v3237
        %3239 = vmatprep.mubr.bf16.mxu0 %v973
        %3240 = vmatmul.mubr.bf16.gmra.mxu0 %v972
        %v3241 = vpop.f32.mrf.mxu0
        %v3242 = vadd.f32 %v3169, %v3241
        %v3243 = vpop.f32.mrf.mxu0
        %v3244 = vadd.f32 %v3171, %v3243
        %v3245 = vpop.f32.mrf.mxu0
        %v3246 = vadd.f32 %v3173, %v3245
        %v3247 = vpop.f32.mrf.mxu0
        %v3248 = vadd.f32 %v3175, %v3247
        %3249 = vmatprep.mubr.bf16.mxu0 %v989
        %3250 = vmatmul.mubr.bf16.gmra.mxu0 %v988
        %v3251 = vpop.f32.mrf.mxu0
        %v3252 = vadd.f32 %v3179, %v3251
        %v3253 = vpop.f32.mrf.mxu0
        %v3254 = vadd.f32 %v3181, %v3253
        %v3255 = vpop.f32.mrf.mxu0
        %v3256 = vadd.f32 %v3183, %v3255
        %v3257 = vpop.f32.mrf.mxu0
        %v3258 = vadd.f32 %v3185, %v3257
        %3259 = vdwg.mxu0
        %3260 = vmatprep.subr.bf16.mxu0 %v2464
        %3261 = vmatpush1.bf16.msra.mxu0 %v2463
        %3262 = vmatprep.subr.bf16.mxu0 %v2461
        %3263 = vmatpush1.bf16.msra.mxu0 %v2460
        %3264 = vmatprep.subr.bf16.mxu0 %v2458
        %3265 = vmatpush1.bf16.msra.mxu0 %v2457
        %3266 = vmatprep.subr.bf16.mxu0 %v2455
        %3267 = vmatpush1.bf16.msra.mxu0 %v2454
        %3268 = vmatprep.subr.bf16.mxu0 %v2452
        %3269 = vmatpush1.bf16.msra.mxu0 %v2451
        %3270 = vmatprep.subr.bf16.mxu0 %v2449
        %3271 = vmatpush1.bf16.msra.mxu0 %v2448
        %3272 = vmatprep.subr.bf16.mxu0 %v2446
        %3273 = vmatpush1.bf16.msra.mxu0 %v2445
        %3274 = vmatprep.subr.bf16.mxu0 %v2443
        %3275 = vmatpush1.bf16.msra.mxu0 %v2442
        %3276 = vmatprep.subr.bf16.mxu0 %v2488
        %3277 = vmatpush2.bf16.msra.mxu0 %v2487
        %3278 = vmatprep.subr.bf16.mxu0 %v2485
        %3279 = vmatpush2.bf16.msra.mxu0 %v2484
        %3280 = vmatprep.subr.bf16.mxu0 %v2482
        %3281 = vmatpush2.bf16.msra.mxu0 %v2481
        %3282 = vmatprep.subr.bf16.mxu0 %v2479
        %3283 = vmatpush2.bf16.msra.mxu0 %v2478
        %3284 = vmatprep.subr.bf16.mxu0 %v2476
        %3285 = vmatpush2.bf16.msra.mxu0 %v2475
        %3286 = vmatprep.subr.bf16.mxu0 %v2473
        %3287 = vmatpush2.bf16.msra.mxu0 %v2472
        %3288 = vmatprep.subr.bf16.mxu0 %v2470
        %3289 = vmatpush2.bf16.msra.mxu0 %v2469
        %3290 = vmatprep.subr.bf16.mxu0 %v2467
        %3291 = vmatpush2.bf16.msra.mxu0 %v2466
        %3292 = vmatprep.mubr.bf16.mxu0 %v943
        %3293 = vmatmul.mubr.bf16.gmra.mxu0 %v942
        %v3294 = vpop.f32.mrf.mxu0
        %v3295 = vadd.f32 %v3222, %v3294
        %v3296 = vpop.f32.mrf.mxu0
        %v3297 = vadd.f32 %v3224, %v3296
        %v3298 = vpop.f32.mrf.mxu0
        %v3299 = vadd.f32 %v3226, %v3298
        %v3300 = vpop.f32.mrf.mxu0
        %v3301 = vadd.f32 %v3228, %v3300
        %3302 = vmatprep.mubr.bf16.mxu0 %v959
        %3303 = vmatmul.mubr.bf16.gmra.mxu0 %v958
        %v3304 = vpop.f32.mrf.mxu0
        %v3305 = vadd.f32 %v3232, %v3304
        %v3306 = vpop.f32.mrf.mxu0
        %v3307 = vadd.f32 %v3234, %v3306
        %v3308 = vpop.f32.mrf.mxu0
        %v3309 = vadd.f32 %v3236, %v3308
        %v3310 = vpop.f32.mrf.mxu0
        %v3311 = vadd.f32 %v3238, %v3310
        %3312 = vmatprep.mubr.bf16.mxu0 %v975
        %3313 = vmatmul.mubr.bf16.gmra.mxu0 %v974
        %v3314 = vpop.f32.mrf.mxu0
        %v3315 = vadd.f32 %v3242, %v3314
        %v3316 = vpop.f32.mrf.mxu0
        %v3317 = vadd.f32 %v3244, %v3316
        %v3318 = vpop.f32.mrf.mxu0
        %v3319 = vadd.f32 %v3246, %v3318
        %v3320 = vpop.f32.mrf.mxu0
        %v3321 = vadd.f32 %v3248, %v3320
        %3322 = vmatprep.mubr.bf16.mxu0 %v991
        %3323 = vmatmul.mubr.bf16.gmra.mxu0 %v990
        %v3324 = vpop.f32.mrf.mxu0
        %v3325 = vadd.f32 %v3252, %v3324
        %v3326 = vpop.f32.mrf.mxu0
        %v3327 = vadd.f32 %v3254, %v3326
        %v3328 = vpop.f32.mrf.mxu0
        %v3329 = vadd.f32 %v3256, %v3328
        %v3330 = vpop.f32.mrf.mxu0
        %v3331 = vadd.f32 %v3258, %v3330
        %3332 = vdwg.mxu0
        %3333 = vmatprep.subr.bf16.mxu0 %v2512
        %3334 = vmatpush1.bf16.msra.mxu0 %v2511
        %3335 = vmatprep.subr.bf16.mxu0 %v2509
        %3336 = vmatpush1.bf16.msra.mxu0 %v2508
        %3337 = vmatprep.subr.bf16.mxu0 %v2506
        %3338 = vmatpush1.bf16.msra.mxu0 %v2505
        %3339 = vmatprep.subr.bf16.mxu0 %v2503
        %3340 = vmatpush1.bf16.msra.mxu0 %v2502
        %3341 = vmatprep.subr.bf16.mxu0 %v2500
        %3342 = vmatpush1.bf16.msra.mxu0 %v2499
        %3343 = vmatprep.subr.bf16.mxu0 %v2497
        %3344 = vmatpush1.bf16.msra.mxu0 %v2496
        %3345 = vmatprep.subr.bf16.mxu0 %v2494
        %3346 = vmatpush1.bf16.msra.mxu0 %v2493
        %3347 = vmatprep.subr.bf16.mxu0 %v2491
        %3348 = vmatpush1.bf16.msra.mxu0 %v2490
        %3349 = vmatprep.subr.bf16.mxu0 %v2536
        %3350 = vmatpush2.bf16.msra.mxu0 %v2535
        %3351 = vmatprep.subr.bf16.mxu0 %v2533
        %3352 = vmatpush2.bf16.msra.mxu0 %v2532
        %3353 = vmatprep.subr.bf16.mxu0 %v2530
        %3354 = vmatpush2.bf16.msra.mxu0 %v2529
        %3355 = vmatprep.subr.bf16.mxu0 %v2527
        %3356 = vmatpush2.bf16.msra.mxu0 %v2526
        %3357 = vmatprep.subr.bf16.mxu0 %v2524
        %3358 = vmatpush2.bf16.msra.mxu0 %v2523
        %3359 = vmatprep.subr.bf16.mxu0 %v2521
        %3360 = vmatpush2.bf16.msra.mxu0 %v2520
        %3361 = vmatprep.subr.bf16.mxu0 %v2518
        %3362 = vmatpush2.bf16.msra.mxu0 %v2517
        %3363 = vmatprep.subr.bf16.mxu0 %v2515
        %3364 = vmatpush2.bf16.msra.mxu0 %v2514
        %3365 = vmatprep.mubr.bf16.mxu0 %v945
        %3366 = vmatmul.mubr.bf16.gmra.mxu0 %v944
        %v3367 = vpop.f32.mrf.mxu0
        %v3368 = vadd.f32 %v3295, %v3367
        %v3369 = vpop.f32.mrf.mxu0
        %v3370 = vadd.f32 %v3297, %v3369
        %v3371 = vpop.f32.mrf.mxu0
        %v3372 = vadd.f32 %v3299, %v3371
        %v3373 = vpop.f32.mrf.mxu0
        %v3374 = vadd.f32 %v3301, %v3373
        %3375 = vmatprep.mubr.bf16.mxu0 %v961
        %3376 = vmatmul.mubr.bf16.gmra.mxu0 %v960
        %v3377 = vpop.f32.mrf.mxu0
        %v3378 = vadd.f32 %v3305, %v3377
        %v3379 = vpop.f32.mrf.mxu0
        %v3380 = vadd.f32 %v3307, %v3379
        %v3381 = vpop.f32.mrf.mxu0
        %v3382 = vadd.f32 %v3309, %v3381
        %v3383 = vpop.f32.mrf.mxu0
        %v3384 = vadd.f32 %v3311, %v3383
        %3385 = vmatprep.mubr.bf16.mxu0 %v977
        %3386 = vmatmul.mubr.bf16.gmra.mxu0 %v976
        %v3387 = vpop.f32.mrf.mxu0
        %v3388 = vadd.f32 %v3315, %v3387
        %v3389 = vpop.f32.mrf.mxu0
        %v3390 = vadd.f32 %v3317, %v3389
        %v3391 = vpop.f32.mrf.mxu0
        %v3392 = vadd.f32 %v3319, %v3391
        %v3393 = vpop.f32.mrf.mxu0
        %v3394 = vadd.f32 %v3321, %v3393
        %3395 = vmatprep.mubr.bf16.mxu0 %v993
        %3396 = vmatmul.mubr.bf16.gmra.mxu0 %v992
        %v3397 = vpop.f32.mrf.mxu0
        %v3398 = vadd.f32 %v3325, %v3397
        %v3399 = vpop.f32.mrf.mxu0
        %v3400 = vadd.f32 %v3327, %v3399
        %v3401 = vpop.f32.mrf.mxu0
        %v3402 = vadd.f32 %v3329, %v3401
        %v3403 = vpop.f32.mrf.mxu0
        %v3404 = vadd.f32 %v3331, %v3403
        %3405 = vdwg.mxu0
        %3406 = vmatprep.subr.bf16.mxu0 %v2560
        %3407 = vmatpush1.bf16.msra.mxu0 %v2559
        %3408 = vmatprep.subr.bf16.mxu0 %v2557
        %3409 = vmatpush1.bf16.msra.mxu0 %v2556
        %3410 = vmatprep.subr.bf16.mxu0 %v2554
        %3411 = vmatpush1.bf16.msra.mxu0 %v2553
        %3412 = vmatprep.subr.bf16.mxu0 %v2551
        %3413 = vmatpush1.bf16.msra.mxu0 %v2550
        %3414 = vmatprep.subr.bf16.mxu0 %v2548
        %3415 = vmatpush1.bf16.msra.mxu0 %v2547
        %3416 = vmatprep.subr.bf16.mxu0 %v2545
        %3417 = vmatpush1.bf16.msra.mxu0 %v2544
        %3418 = vmatprep.subr.bf16.mxu0 %v2542
        %3419 = vmatpush1.bf16.msra.mxu0 %v2541
        %3420 = vmatprep.subr.bf16.mxu0 %v2539
        %3421 = vmatpush1.bf16.msra.mxu0 %v2538
        %3422 = vmatprep.subr.bf16.mxu0 %v2584
        %3423 = vmatpush2.bf16.msra.mxu0 %v2583
        %3424 = vmatprep.subr.bf16.mxu0 %v2581
        %3425 = vmatpush2.bf16.msra.mxu0 %v2580
        %3426 = vmatprep.subr.bf16.mxu0 %v2578
        %3427 = vmatpush2.bf16.msra.mxu0 %v2577
        %3428 = vmatprep.subr.bf16.mxu0 %v2575
        %3429 = vmatpush2.bf16.msra.mxu0 %v2574
        %3430 = vmatprep.subr.bf16.mxu0 %v2572
        %3431 = vmatpush2.bf16.msra.mxu0 %v2571
        %3432 = vmatprep.subr.bf16.mxu0 %v2569
        %3433 = vmatpush2.bf16.msra.mxu0 %v2568
        %3434 = vmatprep.subr.bf16.mxu0 %v2566
        %3435 = vmatpush2.bf16.msra.mxu0 %v2565
        %3436 = vmatprep.subr.bf16.mxu0 %v2563
        %3437 = vmatpush2.bf16.msra.mxu0 %v2562
        %3438 = vmatprep.mubr.bf16.mxu0 %v947
        %3439 = vmatmul.mubr.bf16.gmra.mxu0 %v946
        %v3440 = vpop.f32.mrf.mxu0
        %v3441 = vadd.f32 %v3368, %v3440
        %v3442 = vpop.f32.mrf.mxu0
        %v3443 = vadd.f32 %v3370, %v3442
        %v3444 = vpop.f32.mrf.mxu0
        %v3445 = vadd.f32 %v3372, %v3444
        %v3446 = vpop.f32.mrf.mxu0
        %v3447 = vadd.f32 %v3374, %v3446
        %3448 = vmatprep.mubr.bf16.mxu0 %v963
        %3449 = vmatmul.mubr.bf16.gmra.mxu0 %v962
        %v3450 = vpop.f32.mrf.mxu0
        %v3451 = vadd.f32 %v3378, %v3450
        %v3452 = vpop.f32.mrf.mxu0
        %v3453 = vadd.f32 %v3380, %v3452
        %v3454 = vpop.f32.mrf.mxu0
        %v3455 = vadd.f32 %v3382, %v3454
        %v3456 = vpop.f32.mrf.mxu0
        %v3457 = vadd.f32 %v3384, %v3456
        %3458 = vmatprep.mubr.bf16.mxu0 %v979
        %3459 = vmatmul.mubr.bf16.gmra.mxu0 %v978
        %v3460 = vpop.f32.mrf.mxu0
        %v3461 = vadd.f32 %v3388, %v3460
        %v3462 = vpop.f32.mrf.mxu0
        %v3463 = vadd.f32 %v3390, %v3462
        %v3464 = vpop.f32.mrf.mxu0
        %v3465 = vadd.f32 %v3392, %v3464
        %v3466 = vpop.f32.mrf.mxu0
        %v3467 = vadd.f32 %v3394, %v3466
        %3468 = vmatprep.mubr.bf16.mxu0 %v995
        %3469 = vmatmul.mubr.bf16.gmra.mxu0 %v994
        %v3470 = vpop.f32.mrf.mxu0
        %v3471 = vadd.f32 %v3398, %v3470
        %v3472 = vpop.f32.mrf.mxu0
        %v3473 = vadd.f32 %v3400, %v3472
        %v3474 = vpop.f32.mrf.mxu0
        %v3475 = vadd.f32 %v3402, %v3474
        %v3476 = vpop.f32.mrf.mxu0
        %v3477 = vadd.f32 %v3404, %v3476
        %3478 = vdwg.mxu0
        %3479 = vmatprep.subr.bf16.mxu0 %v2608
        %3480 = vmatpush1.bf16.msra.mxu0 %v2607
        %3481 = vmatprep.subr.bf16.mxu0 %v2605
        %3482 = vmatpush1.bf16.msra.mxu0 %v2604
        %3483 = vmatprep.subr.bf16.mxu0 %v2602
        %3484 = vmatpush1.bf16.msra.mxu0 %v2601
        %3485 = vmatprep.subr.bf16.mxu0 %v2599
        %3486 = vmatpush1.bf16.msra.mxu0 %v2598
        %3487 = vmatprep.subr.bf16.mxu0 %v2596
        %3488 = vmatpush1.bf16.msra.mxu0 %v2595
        %3489 = vmatprep.subr.bf16.mxu0 %v2593
        %3490 = vmatpush1.bf16.msra.mxu0 %v2592
        %3491 = vmatprep.subr.bf16.mxu0 %v2590
        %3492 = vmatpush1.bf16.msra.mxu0 %v2589
        %3493 = vmatprep.subr.bf16.mxu0 %v2587
        %3494 = vmatpush1.bf16.msra.mxu0 %v2586
        %3495 = vmatprep.subr.bf16.mxu0 %v2632
        %3496 = vmatpush2.bf16.msra.mxu0 %v2631
        %3497 = vmatprep.subr.bf16.mxu0 %v2629
        %3498 = vmatpush2.bf16.msra.mxu0 %v2628
        %3499 = vmatprep.subr.bf16.mxu0 %v2626
        %3500 = vmatpush2.bf16.msra.mxu0 %v2625
        %3501 = vmatprep.subr.bf16.mxu0 %v2623
        %3502 = vmatpush2.bf16.msra.mxu0 %v2622
        %3503 = vmatprep.subr.bf16.mxu0 %v2620
        %3504 = vmatpush2.bf16.msra.mxu0 %v2619
        %3505 = vmatprep.subr.bf16.mxu0 %v2617
        %3506 = vmatpush2.bf16.msra.mxu0 %v2616
        %3507 = vmatprep.subr.bf16.mxu0 %v2614
        %3508 = vmatpush2.bf16.msra.mxu0 %v2613
        %3509 = vmatprep.subr.bf16.mxu0 %v2611
        %3510 = vmatpush2.bf16.msra.mxu0 %v2610
        %3511 = vmatprep.mubr.bf16.mxu0 %v949
        %3512 = vmatmul.mubr.bf16.gmra.mxu0 %v948
        %v3513 = vpop.f32.mrf.mxu0
        %v3514 = vadd.f32 %v3441, %v3513
        %v3515 = vpop.f32.mrf.mxu0
        %v3516 = vadd.f32 %v3443, %v3515
        %v3517 = vpop.f32.mrf.mxu0
        %v3518 = vadd.f32 %v3445, %v3517
        %v3519 = vpop.f32.mrf.mxu0
        %v3520 = vadd.f32 %v3447, %v3519
        %3521 = vmatprep.mubr.bf16.mxu0 %v965
        %3522 = vmatmul.mubr.bf16.gmra.mxu0 %v964
        %v3523 = vpop.f32.mrf.mxu0
        %v3524 = vadd.f32 %v3451, %v3523
        %v3525 = vpop.f32.mrf.mxu0
        %v3526 = vadd.f32 %v3453, %v3525
        %v3527 = vpop.f32.mrf.mxu0
        %v3528 = vadd.f32 %v3455, %v3527
        %v3529 = vpop.f32.mrf.mxu0
        %v3530 = vadd.f32 %v3457, %v3529
        %3531 = vmatprep.mubr.bf16.mxu0 %v981
        %3532 = vmatmul.mubr.bf16.gmra.mxu0 %v980
        %v3533 = vpop.f32.mrf.mxu0
        %v3534 = vadd.f32 %v3461, %v3533
        %v3535 = vpop.f32.mrf.mxu0
        %v3536 = vadd.f32 %v3463, %v3535
        %v3537 = vpop.f32.mrf.mxu0
        %v3538 = vadd.f32 %v3465, %v3537
        %v3539 = vpop.f32.mrf.mxu0
        %v3540 = vadd.f32 %v3467, %v3539
        %3541 = vmatprep.mubr.bf16.mxu0 %v997
        %3542 = vmatmul.mubr.bf16.gmra.mxu0 %v996
        %v3543 = vpop.f32.mrf.mxu0
        %v3544 = vadd.f32 %v3471, %v3543
        %v3545 = vpop.f32.mrf.mxu0
        %v3546 = vadd.f32 %v3473, %v3545
        %v3547 = vpop.f32.mrf.mxu0
        %v3548 = vadd.f32 %v3475, %v3547
        %v3549 = vpop.f32.mrf.mxu0
        %v3550 = vadd.f32 %v3477, %v3549
        %3551 = vdwg.mxu0
        %3552 = vmatprep.subr.bf16.mxu0 %v2656
        %3553 = vmatpush1.bf16.msra.mxu0 %v2655
        %3554 = vmatprep.subr.bf16.mxu0 %v2653
        %3555 = vmatpush1.bf16.msra.mxu0 %v2652
        %3556 = vmatprep.subr.bf16.mxu0 %v2650
        %3557 = vmatpush1.bf16.msra.mxu0 %v2649
        %3558 = vmatprep.subr.bf16.mxu0 %v2647
        %3559 = vmatpush1.bf16.msra.mxu0 %v2646
        %3560 = vmatprep.subr.bf16.mxu0 %v2644
        %3561 = vmatpush1.bf16.msra.mxu0 %v2643
        %3562 = vmatprep.subr.bf16.mxu0 %v2641
        %3563 = vmatpush1.bf16.msra.mxu0 %v2640
        %3564 = vmatprep.subr.bf16.mxu0 %v2638
        %3565 = vmatpush1.bf16.msra.mxu0 %v2637
        %3566 = vmatprep.subr.bf16.mxu0 %v2635
        %3567 = vmatpush1.bf16.msra.mxu0 %v2634
        %3568 = vmatprep.subr.bf16.mxu0 %v2680
        %3569 = vmatpush2.bf16.msra.mxu0 %v2679
        %3570 = vmatprep.subr.bf16.mxu0 %v2677
        %3571 = vmatpush2.bf16.msra.mxu0 %v2676
        %3572 = vmatprep.subr.bf16.mxu0 %v2674
        %3573 = vmatpush2.bf16.msra.mxu0 %v2673
        %3574 = vmatprep.subr.bf16.mxu0 %v2671
        %3575 = vmatpush2.bf16.msra.mxu0 %v2670
        %3576 = vmatprep.subr.bf16.mxu0 %v2668
        %3577 = vmatpush2.bf16.msra.mxu0 %v2667
        %3578 = vmatprep.subr.bf16.mxu0 %v2665
        %3579 = vmatpush2.bf16.msra.mxu0 %v2664
        %3580 = vmatprep.subr.bf16.mxu0 %v2662
        %3581 = vmatpush2.bf16.msra.mxu0 %v2661
        %3582 = vmatprep.subr.bf16.mxu0 %v2659
        %3583 = vmatpush2.bf16.msra.mxu0 %v2658
        %3584 = vmatprep.mubr.bf16.mxu0 %v951
        %3585 = vmatmul.mubr.bf16.gmra.mxu0 %v950
        %v3586 = vpop.f32.mrf.mxu0
        %v3587 = vadd.f32 %v3514, %v3586
        %v3588 = vpop.f32.mrf.mxu0
        %v3589 = vadd.f32 %v3516, %v3588
        %v3590 = vpop.f32.mrf.mxu0
        %v3591 = vadd.f32 %v3518, %v3590
        %v3592 = vpop.f32.mrf.mxu0
        %v3593 = vadd.f32 %v3520, %v3592
        %3594 = vmatprep.mubr.bf16.mxu0 %v967
        %3595 = vmatmul.mubr.bf16.gmra.mxu0 %v966
        %v3596 = vpop.f32.mrf.mxu0
        %v3597 = vadd.f32 %v3524, %v3596
        %v3598 = vpop.f32.mrf.mxu0
        %v3599 = vadd.f32 %v3526, %v3598
        %v3600 = vpop.f32.mrf.mxu0
        %v3601 = vadd.f32 %v3528, %v3600
        %v3602 = vpop.f32.mrf.mxu0
        %v3603 = vadd.f32 %v3530, %v3602
        %3604 = vmatprep.mubr.bf16.mxu0 %v983
        %3605 = vmatmul.mubr.bf16.gmra.mxu0 %v982
        %v3606 = vpop.f32.mrf.mxu0
        %v3607 = vadd.f32 %v3534, %v3606
        %v3608 = vpop.f32.mrf.mxu0
        %v3609 = vadd.f32 %v3536, %v3608
        %v3610 = vpop.f32.mrf.mxu0
        %v3611 = vadd.f32 %v3538, %v3610
        %v3612 = vpop.f32.mrf.mxu0
        %v3613 = vadd.f32 %v3540, %v3612
        %3614 = vmatprep.mubr.bf16.mxu0 %v999
        %3615 = vmatmul.mubr.bf16.gmra.mxu0 %v998
        %v3616 = vpop.f32.mrf.mxu0
        %v3617 = vadd.f32 %v3544, %v3616
        %v3618 = vpop.f32.mrf.mxu0
        %v3619 = vadd.f32 %v3546, %v3618
        %v3620 = vpop.f32.mrf.mxu0
        %v3621 = vadd.f32 %v3548, %v3620
        %v3622 = vpop.f32.mrf.mxu0
        %v3623 = vadd.f32 %v3550, %v3622
        %3624 = vdwg.mxu0
        %3625 = vmatprep.subr.bf16.mxu0 %v2704
        %3626 = vmatpush1.bf16.msra.mxu0 %v2703
        %3627 = vmatprep.subr.bf16.mxu0 %v2701
        %3628 = vmatpush1.bf16.msra.mxu0 %v2700
        %3629 = vmatprep.subr.bf16.mxu0 %v2698
        %3630 = vmatpush1.bf16.msra.mxu0 %v2697
        %3631 = vmatprep.subr.bf16.mxu0 %v2695
        %3632 = vmatpush1.bf16.msra.mxu0 %v2694
        %3633 = vmatprep.subr.bf16.mxu0 %v2692
        %3634 = vmatpush1.bf16.msra.mxu0 %v2691
        %3635 = vmatprep.subr.bf16.mxu0 %v2689
        %3636 = vmatpush1.bf16.msra.mxu0 %v2688
        %3637 = vmatprep.subr.bf16.mxu0 %v2686
        %3638 = vmatpush1.bf16.msra.mxu0 %v2685
        %3639 = vmatprep.subr.bf16.mxu0 %v2683
        %3640 = vmatpush1.bf16.msra.mxu0 %v2682
        %3641 = vmatprep.subr.bf16.mxu0 %v2728
        %3642 = vmatpush2.bf16.msra.mxu0 %v2727
        %3643 = vmatprep.subr.bf16.mxu0 %v2725
        %3644 = vmatpush2.bf16.msra.mxu0 %v2724
        %3645 = vmatprep.subr.bf16.mxu0 %v2722
        %3646 = vmatpush2.bf16.msra.mxu0 %v2721
        %3647 = vmatprep.subr.bf16.mxu0 %v2719
        %3648 = vmatpush2.bf16.msra.mxu0 %v2718
        %3649 = vmatprep.subr.bf16.mxu0 %v2716
        %3650 = vmatpush2.bf16.msra.mxu0 %v2715
        %3651 = vmatprep.subr.bf16.mxu0 %v2713
        %3652 = vmatpush2.bf16.msra.mxu0 %v2712
        %3653 = vmatprep.subr.bf16.mxu0 %v2710
        %3654 = vmatpush2.bf16.msra.mxu0 %v2709
        %3655 = vmatprep.subr.bf16.mxu0 %v2707
        %3656 = vmatpush2.bf16.msra.mxu0 %v2706
        %3657 = vmatprep.mubr.bf16.mxu0 %v953
        %3658 = vmatmul.mubr.bf16.gmra.mxu0 %v952
        %v3659 = vpop.f32.mrf.mxu0
        %v3660 = vadd.f32 %v3587, %v3659
        %v3661 = vpop.f32.mrf.mxu0
        %v3662 = vadd.f32 %v3589, %v3661
        %v3663 = vpop.f32.mrf.mxu0
        %v3664 = vadd.f32 %v3591, %v3663
        %v3665 = vpop.f32.mrf.mxu0
        %v3666 = vadd.f32 %v3593, %v3665
        %3667 = vmatprep.mubr.bf16.mxu0 %v969
        %3668 = vmatmul.mubr.bf16.gmra.mxu0 %v968
        %v3669 = vpop.f32.mrf.mxu0
        %v3670 = vadd.f32 %v3597, %v3669
        %v3671 = vpop.f32.mrf.mxu0
        %v3672 = vadd.f32 %v3599, %v3671
        %v3673 = vpop.f32.mrf.mxu0
        %v3674 = vadd.f32 %v3601, %v3673
        %v3675 = vpop.f32.mrf.mxu0
        %v3676 = vadd.f32 %v3603, %v3675
        %3677 = vmatprep.mubr.bf16.mxu0 %v985
        %3678 = vmatmul.mubr.bf16.gmra.mxu0 %v984
        %v3679 = vpop.f32.mrf.mxu0
        %v3680 = vadd.f32 %v3607, %v3679
        %v3681 = vpop.f32.mrf.mxu0
        %v3682 = vadd.f32 %v3609, %v3681
        %v3683 = vpop.f32.mrf.mxu0
        %v3684 = vadd.f32 %v3611, %v3683
        %v3685 = vpop.f32.mrf.mxu0
        %v3686 = vadd.f32 %v3613, %v3685
        %3687 = vmatprep.mubr.bf16.mxu0 %v1001
        %3688 = vmatmul.mubr.bf16.gmra.mxu0 %v1000
        %v3689 = vpop.f32.mrf.mxu0
        %v3690 = vadd.f32 %v3617, %v3689
        %v3691 = vpop.f32.mrf.mxu0
        %v3692 = vadd.f32 %v3619, %v3691
        %v3693 = vpop.f32.mrf.mxu0
        %v3694 = vadd.f32 %v3621, %v3693
        %v3695 = vpop.f32.mrf.mxu0
        %v3696 = vadd.f32 %v3623, %v3695
        %3697 = vdwg.mxu0
        %3698 = vmatprep.subr.bf16.mxu0 0
        %3699 = vmatpush1.bf16.msra.mxu0 %v2369
        %3700 = vmatprep.subr.bf16.mxu0 0
        %3701 = vmatpush1.bf16.msra.mxu0 %v2366
        %3702 = vmatprep.subr.bf16.mxu0 0
        %3703 = vmatpush1.bf16.msra.mxu0 %v2363
        %3704 = vmatprep.subr.bf16.mxu0 0
        %3705 = vmatpush1.bf16.msra.mxu0 %v2360
        %3706 = vmatprep.subr.bf16.mxu0 0
        %3707 = vmatpush1.bf16.msra.mxu0 %v2357
        %3708 = vmatprep.subr.bf16.mxu0 0
        %3709 = vmatpush1.bf16.msra.mxu0 %v2354
        %3710 = vmatprep.subr.bf16.mxu0 0
        %3711 = vmatpush1.bf16.msra.mxu0 %v2351
        %3712 = vmatprep.subr.bf16.mxu0 0
        %3713 = vmatpush1.bf16.msra.mxu0 %v2348
        %3714 = vmatprep.subr.bf16.mxu0 0
        %3715 = vmatpush2.bf16.msra.mxu0 %v2393
        %3716 = vmatprep.subr.bf16.mxu0 0
        %3717 = vmatpush2.bf16.msra.mxu0 %v2390
        %3718 = vmatprep.subr.bf16.mxu0 0
        %3719 = vmatpush2.bf16.msra.mxu0 %v2387
        %3720 = vmatprep.subr.bf16.mxu0 0
        %3721 = vmatpush2.bf16.msra.mxu0 %v2384
        %3722 = vmatprep.subr.bf16.mxu0 0
        %3723 = vmatpush2.bf16.msra.mxu0 %v2381
        %3724 = vmatprep.subr.bf16.mxu0 0
        %3725 = vmatpush2.bf16.msra.mxu0 %v2378
        %3726 = vmatprep.subr.bf16.mxu0 0
        %3727 = vmatpush2.bf16.msra.mxu0 %v2375
        %3728 = vmatprep.subr.bf16.mxu0 0
        %3729 = vmatpush2.bf16.msra.mxu0 %v2372
        %3730 = vmatprep.mubr.bf16.mxu0 %v939
        %3731 = vmatmul.mubr.bf16.gmra.mxu0 %v938
        %v3732 = vpop.f32.mrf.mxu0
        %v3733 = vadd.f32 0.0, %v3732
        %v3734 = vpop.f32.mrf.mxu0
        %v3735 = vpop.f32.mrf.mxu0
        %v3736 = vadd.f32 0.0, %v3735
        %v3737 = vpop.f32.mrf.mxu0
        %3738 = vmatprep.mubr.bf16.mxu0 %v955
        %3739 = vmatmul.mubr.bf16.gmra.mxu0 %v954
        %v3740 = vpop.f32.mrf.mxu0
        %v3741 = vadd.f32 0.0, %v3740
        %v3742 = vpop.f32.mrf.mxu0
        %v3743 = vpop.f32.mrf.mxu0
        %v3744 = vadd.f32 0.0, %v3743
        %v3745 = vpop.f32.mrf.mxu0
        %3746 = vmatprep.mubr.bf16.mxu0 %v971
        %3747 = vmatmul.mubr.bf16.gmra.mxu0 %v970
        %v3748 = vpop.f32.mrf.mxu0
        %v3749 = vadd.f32 0.0, %v3748
        %v3750 = vpop.f32.mrf.mxu0
        %v3751 = vpop.f32.mrf.mxu0
        %v3752 = vadd.f32 0.0, %v3751
        %v3753 = vpop.f32.mrf.mxu0
        %3754 = vmatprep.mubr.bf16.mxu0 %v987
        %3755 = vmatmul.mubr.bf16.gmra.mxu0 %v986
        %v3756 = vpop.f32.mrf.mxu0
        %v3757 = vadd.f32 0.0, %v3756
        %v3758 = vpop.f32.mrf.mxu0
        %v3759 = vpop.f32.mrf.mxu0
        %v3760 = vadd.f32 0.0, %v3759
        %v3761 = vpop.f32.mrf.mxu0
        %3762 = vdwg.mxu0
        %3763 = vmatprep.subr.bf16.mxu0 0
        %3764 = vmatpush1.bf16.msra.mxu0 %v2417
        %3765 = vmatprep.subr.bf16.mxu0 0
        %3766 = vmatpush1.bf16.msra.mxu0 %v2414
        %3767 = vmatprep.subr.bf16.mxu0 0
        %3768 = vmatpush1.bf16.msra.mxu0 %v2411
        %3769 = vmatprep.subr.bf16.mxu0 0
        %3770 = vmatpush1.bf16.msra.mxu0 %v2408
        %3771 = vmatprep.subr.bf16.mxu0 0
        %3772 = vmatpush1.bf16.msra.mxu0 %v2405
        %3773 = vmatprep.subr.bf16.mxu0 0
        %3774 = vmatpush1.bf16.msra.mxu0 %v2402
        %3775 = vmatprep.subr.bf16.mxu0 0
        %3776 = vmatpush1.bf16.msra.mxu0 %v2399
        %3777 = vmatprep.subr.bf16.mxu0 0
        %3778 = vmatpush1.bf16.msra.mxu0 %v2396
        %3779 = vmatprep.subr.bf16.mxu0 0
        %3780 = vmatpush2.bf16.msra.mxu0 %v2441
        %3781 = vmatprep.subr.bf16.mxu0 0
        %3782 = vmatpush2.bf16.msra.mxu0 %v2438
        %3783 = vmatprep.subr.bf16.mxu0 0
        %3784 = vmatpush2.bf16.msra.mxu0 %v2435
        %3785 = vmatprep.subr.bf16.mxu0 0
        %3786 = vmatpush2.bf16.msra.mxu0 %v2432
        %3787 = vmatprep.subr.bf16.mxu0 0
        %3788 = vmatpush2.bf16.msra.mxu0 %v2429
        %3789 = vmatprep.subr.bf16.mxu0 0
        %3790 = vmatpush2.bf16.msra.mxu0 %v2426
        %3791 = vmatprep.subr.bf16.mxu0 0
        %3792 = vmatpush2.bf16.msra.mxu0 %v2423
        %3793 = vmatprep.subr.bf16.mxu0 0
        %3794 = vmatpush2.bf16.msra.mxu0 %v2420
        %3795 = vmatprep.mubr.bf16.mxu0 %v941
        %3796 = vmatmul.mubr.bf16.gmra.mxu0 %v940
        %v3797 = vpop.f32.mrf.mxu0
        %v3798 = vadd.f32 %v3733, %v3797
        %v3799 = vpop.f32.mrf.mxu0
        %v3800 = vpop.f32.mrf.mxu0
        %v3801 = vadd.f32 %v3736, %v3800
        %v3802 = vpop.f32.mrf.mxu0
        %3803 = vmatprep.mubr.bf16.mxu0 %v957
        %3804 = vmatmul.mubr.bf16.gmra.mxu0 %v956
        %v3805 = vpop.f32.mrf.mxu0
        %v3806 = vadd.f32 %v3741, %v3805
        %v3807 = vpop.f32.mrf.mxu0
        %v3808 = vpop.f32.mrf.mxu0
        %v3809 = vadd.f32 %v3744, %v3808
        %v3810 = vpop.f32.mrf.mxu0
        %3811 = vmatprep.mubr.bf16.mxu0 %v973
        %3812 = vmatmul.mubr.bf16.gmra.mxu0 %v972
        %v3813 = vpop.f32.mrf.mxu0
        %v3814 = vadd.f32 %v3749, %v3813
        %v3815 = vpop.f32.mrf.mxu0
        %v3816 = vpop.f32.mrf.mxu0
        %v3817 = vadd.f32 %v3752, %v3816
        %v3818 = vpop.f32.mrf.mxu0
        %3819 = vmatprep.mubr.bf16.mxu0 %v989
        %3820 = vmatmul.mubr.bf16.gmra.mxu0 %v988
        %v3821 = vpop.f32.mrf.mxu0
        %v3822 = vadd.f32 %v3757, %v3821
        %v3823 = vpop.f32.mrf.mxu0
        %v3824 = vpop.f32.mrf.mxu0
        %v3825 = vadd.f32 %v3760, %v3824
        %v3826 = vpop.f32.mrf.mxu0
        %3827 = vdwg.mxu0
        %3828 = vmatprep.subr.bf16.mxu0 0
        %3829 = vmatpush1.bf16.msra.mxu0 %v2465
        %3830 = vmatprep.subr.bf16.mxu0 0
        %3831 = vmatpush1.bf16.msra.mxu0 %v2462
        %3832 = vmatprep.subr.bf16.mxu0 0
        %3833 = vmatpush1.bf16.msra.mxu0 %v2459
        %3834 = vmatprep.subr.bf16.mxu0 0
        %3835 = vmatpush1.bf16.msra.mxu0 %v2456
        %3836 = vmatprep.subr.bf16.mxu0 0
        %3837 = vmatpush1.bf16.msra.mxu0 %v2453
        %3838 = vmatprep.subr.bf16.mxu0 0
        %3839 = vmatpush1.bf16.msra.mxu0 %v2450
        %3840 = vmatprep.subr.bf16.mxu0 0
        %3841 = vmatpush1.bf16.msra.mxu0 %v2447
        %3842 = vmatprep.subr.bf16.mxu0 0
        %3843 = vmatpush1.bf16.msra.mxu0 %v2444
        %3844 = vmatprep.subr.bf16.mxu0 0
        %3845 = vmatpush2.bf16.msra.mxu0 %v2489
        %3846 = vmatprep.subr.bf16.mxu0 0
        %3847 = vmatpush2.bf16.msra.mxu0 %v2486
        %3848 = vmatprep.subr.bf16.mxu0 0
        %3849 = vmatpush2.bf16.msra.mxu0 %v2483
        %3850 = vmatprep.subr.bf16.mxu0 0
        %3851 = vmatpush2.bf16.msra.mxu0 %v2480
        %3852 = vmatprep.subr.bf16.mxu0 0
        %3853 = vmatpush2.bf16.msra.mxu0 %v2477
        %3854 = vmatprep.subr.bf16.mxu0 0
        %3855 = vmatpush2.bf16.msra.mxu0 %v2474
        %3856 = vmatprep.subr.bf16.mxu0 0
        %3857 = vmatpush2.bf16.msra.mxu0 %v2471
        %3858 = vmatprep.subr.bf16.mxu0 0
        %3859 = vmatpush2.bf16.msra.mxu0 %v2468
        %3860 = vmatprep.mubr.bf16.mxu0 %v943
        %3861 = vmatmul.mubr.bf16.gmra.mxu0 %v942
        %v3862 = vpop.f32.mrf.mxu0
        %v3863 = vadd.f32 %v3798, %v3862
        %v3864 = vpop.f32.mrf.mxu0
        %v3865 = vpop.f32.mrf.mxu0
        %v3866 = vadd.f32 %v3801, %v3865
        %v3867 = vpop.f32.mrf.mxu0
        %3868 = vmatprep.mubr.bf16.mxu0 %v959
        %3869 = vmatmul.mubr.bf16.gmra.mxu0 %v958
        %v3870 = vpop.f32.mrf.mxu0
        %v3871 = vadd.f32 %v3806, %v3870
        %v3872 = vpop.f32.mrf.mxu0
        %v3873 = vpop.f32.mrf.mxu0
        %v3874 = vadd.f32 %v3809, %v3873
        %v3875 = vpop.f32.mrf.mxu0
        %3876 = vmatprep.mubr.bf16.mxu0 %v975
        %3877 = vmatmul.mubr.bf16.gmra.mxu0 %v974
        %v3878 = vpop.f32.mrf.mxu0
        %v3879 = vadd.f32 %v3814, %v3878
        %v3880 = vpop.f32.mrf.mxu0
        %v3881 = vpop.f32.mrf.mxu0
        %v3882 = vadd.f32 %v3817, %v3881
        %v3883 = vpop.f32.mrf.mxu0
        %3884 = vmatprep.mubr.bf16.mxu0 %v991
        %3885 = vmatmul.mubr.bf16.gmra.mxu0 %v990
        %v3886 = vpop.f32.mrf.mxu0
        %v3887 = vadd.f32 %v3822, %v3886
        %v3888 = vpop.f32.mrf.mxu0
        %v3889 = vpop.f32.mrf.mxu0
        %v3890 = vadd.f32 %v3825, %v3889
        %v3891 = vpop.f32.mrf.mxu0
        %3892 = vdwg.mxu0
        %3893 = vmatprep.subr.bf16.mxu0 0
        %3894 = vmatpush1.bf16.msra.mxu0 %v2513
        %3895 = vmatprep.subr.bf16.mxu0 0
        %3896 = vmatpush1.bf16.msra.mxu0 %v2510
        %3897 = vmatprep.subr.bf16.mxu0 0
        %3898 = vmatpush1.bf16.msra.mxu0 %v2507
        %3899 = vmatprep.subr.bf16.mxu0 0
        %3900 = vmatpush1.bf16.msra.mxu0 %v2504
        %3901 = vmatprep.subr.bf16.mxu0 0
        %3902 = vmatpush1.bf16.msra.mxu0 %v2501
        %3903 = vmatprep.subr.bf16.mxu0 0
        %3904 = vmatpush1.bf16.msra.mxu0 %v2498
        %3905 = vmatprep.subr.bf16.mxu0 0
        %3906 = vmatpush1.bf16.msra.mxu0 %v2495
        %3907 = vmatprep.subr.bf16.mxu0 0
        %3908 = vmatpush1.bf16.msra.mxu0 %v2492
        %3909 = vmatprep.subr.bf16.mxu0 0
        %3910 = vmatpush2.bf16.msra.mxu0 %v2537
        %3911 = vmatprep.subr.bf16.mxu0 0
        %3912 = vmatpush2.bf16.msra.mxu0 %v2534
        %3913 = vmatprep.subr.bf16.mxu0 0
        %3914 = vmatpush2.bf16.msra.mxu0 %v2531
        %3915 = vmatprep.subr.bf16.mxu0 0
        %3916 = vmatpush2.bf16.msra.mxu0 %v2528
        %3917 = vmatprep.subr.bf16.mxu0 0
        %3918 = vmatpush2.bf16.msra.mxu0 %v2525
        %3919 = vmatprep.subr.bf16.mxu0 0
        %3920 = vmatpush2.bf16.msra.mxu0 %v2522
        %3921 = vmatprep.subr.bf16.mxu0 0
        %3922 = vmatpush2.bf16.msra.mxu0 %v2519
        %3923 = vmatprep.subr.bf16.mxu0 0
        %3924 = vmatpush2.bf16.msra.mxu0 %v2516
        %3925 = vmatprep.mubr.bf16.mxu0 %v945
        %3926 = vmatmul.mubr.bf16.gmra.mxu0 %v944
        %v3927 = vpop.f32.mrf.mxu0
        %v3928 = vadd.f32 %v3863, %v3927
        %v3929 = vpop.f32.mrf.mxu0
        %v3930 = vpop.f32.mrf.mxu0
        %v3931 = vadd.f32 %v3866, %v3930
        %v3932 = vpop.f32.mrf.mxu0
        %3933 = vmatprep.mubr.bf16.mxu0 %v961
        %3934 = vmatmul.mubr.bf16.gmra.mxu0 %v960
        %v3935 = vpop.f32.mrf.mxu0
        %v3936 = vadd.f32 %v3871, %v3935
        %v3937 = vpop.f32.mrf.mxu0
        %v3938 = vpop.f32.mrf.mxu0
        %v3939 = vadd.f32 %v3874, %v3938
        %v3940 = vpop.f32.mrf.mxu0
        %3941 = vmatprep.mubr.bf16.mxu0 %v977
        %3942 = vmatmul.mubr.bf16.gmra.mxu0 %v976
        %v3943 = vpop.f32.mrf.mxu0
        %v3944 = vadd.f32 %v3879, %v3943
        %v3945 = vpop.f32.mrf.mxu0
        %v3946 = vpop.f32.mrf.mxu0
        %v3947 = vadd.f32 %v3882, %v3946
        %v3948 = vpop.f32.mrf.mxu0
        %3949 = vmatprep.mubr.bf16.mxu0 %v993
        %3950 = vmatmul.mubr.bf16.gmra.mxu0 %v992
        %v3951 = vpop.f32.mrf.mxu0
        %v3952 = vadd.f32 %v3887, %v3951
        %v3953 = vpop.f32.mrf.mxu0
        %v3954 = vpop.f32.mrf.mxu0
        %v3955 = vadd.f32 %v3890, %v3954
        %v3956 = vpop.f32.mrf.mxu0
        %3957 = vdwg.mxu0
        %3958 = vmatprep.subr.bf16.mxu0 0
        %3959 = vmatpush1.bf16.msra.mxu0 %v2561
        %3960 = vmatprep.subr.bf16.mxu0 0
        %3961 = vmatpush1.bf16.msra.mxu0 %v2558
        %3962 = vmatprep.subr.bf16.mxu0 0
        %3963 = vmatpush1.bf16.msra.mxu0 %v2555
        %3964 = vmatprep.subr.bf16.mxu0 0
        %3965 = vmatpush1.bf16.msra.mxu0 %v2552
        %3966 = vmatprep.subr.bf16.mxu0 0
        %3967 = vmatpush1.bf16.msra.mxu0 %v2549
        %3968 = vmatprep.subr.bf16.mxu0 0
        %3969 = vmatpush1.bf16.msra.mxu0 %v2546
        %3970 = vmatprep.subr.bf16.mxu0 0
        %3971 = vmatpush1.bf16.msra.mxu0 %v2543
        %3972 = vmatprep.subr.bf16.mxu0 0
        %3973 = vmatpush1.bf16.msra.mxu0 %v2540
        %3974 = vmatprep.subr.bf16.mxu0 0
        %3975 = vmatpush2.bf16.msra.mxu0 %v2585
        %3976 = vmatprep.subr.bf16.mxu0 0
        %3977 = vmatpush2.bf16.msra.mxu0 %v2582
        %3978 = vmatprep.subr.bf16.mxu0 0
        %3979 = vmatpush2.bf16.msra.mxu0 %v2579
        %3980 = vmatprep.subr.bf16.mxu0 0
        %3981 = vmatpush2.bf16.msra.mxu0 %v2576
        %3982 = vmatprep.subr.bf16.mxu0 0
        %3983 = vmatpush2.bf16.msra.mxu0 %v2573
        %3984 = vmatprep.subr.bf16.mxu0 0
        %3985 = vmatpush2.bf16.msra.mxu0 %v2570
        %3986 = vmatprep.subr.bf16.mxu0 0
        %3987 = vmatpush2.bf16.msra.mxu0 %v2567
        %3988 = vmatprep.subr.bf16.mxu0 0
        %3989 = vmatpush2.bf16.msra.mxu0 %v2564
        %3990 = vmatprep.mubr.bf16.mxu0 %v947
        %3991 = vmatmul.mubr.bf16.gmra.mxu0 %v946
        %v3992 = vpop.f32.mrf.mxu0
        %v3993 = vadd.f32 %v3928, %v3992
        %v3994 = vpop.f32.mrf.mxu0
        %v3995 = vpop.f32.mrf.mxu0
        %v3996 = vadd.f32 %v3931, %v3995
        %v3997 = vpop.f32.mrf.mxu0
        %3998 = vmatprep.mubr.bf16.mxu0 %v963
        %3999 = vmatmul.mubr.bf16.gmra.mxu0 %v962
        %v4000 = vpop.f32.mrf.mxu0
        %v4001 = vadd.f32 %v3936, %v4000
        %v4002 = vpop.f32.mrf.mxu0
        %v4003 = vpop.f32.mrf.mxu0
        %v4004 = vadd.f32 %v3939, %v4003
        %v4005 = vpop.f32.mrf.mxu0
        %4006 = vmatprep.mubr.bf16.mxu0 %v979
        %4007 = vmatmul.mubr.bf16.gmra.mxu0 %v978
        %v4008 = vpop.f32.mrf.mxu0
        %v4009 = vadd.f32 %v3944, %v4008
        %v4010 = vpop.f32.mrf.mxu0
        %v4011 = vpop.f32.mrf.mxu0
        %v4012 = vadd.f32 %v3947, %v4011
        %v4013 = vpop.f32.mrf.mxu0
        %4014 = vmatprep.mubr.bf16.mxu0 %v995
        %4015 = vmatmul.mubr.bf16.gmra.mxu0 %v994
        %v4016 = vpop.f32.mrf.mxu0
        %v4017 = vadd.f32 %v3952, %v4016
        %v4018 = vpop.f32.mrf.mxu0
        %v4019 = vpop.f32.mrf.mxu0
        %v4020 = vadd.f32 %v3955, %v4019
        %v4021 = vpop.f32.mrf.mxu0
        %4022 = vdwg.mxu0
        %4023 = vmatprep.subr.bf16.mxu0 0
        %4024 = vmatpush1.bf16.msra.mxu0 %v2609
        %4025 = vmatprep.subr.bf16.mxu0 0
        %4026 = vmatpush1.bf16.msra.mxu0 %v2606
        %4027 = vmatprep.subr.bf16.mxu0 0
        %4028 = vmatpush1.bf16.msra.mxu0 %v2603
        %4029 = vmatprep.subr.bf16.mxu0 0
        %4030 = vmatpush1.bf16.msra.mxu0 %v2600
        %4031 = vmatprep.subr.bf16.mxu0 0
        %4032 = vmatpush1.bf16.msra.mxu0 %v2597
        %4033 = vmatprep.subr.bf16.mxu0 0
        %4034 = vmatpush1.bf16.msra.mxu0 %v2594
        %4035 = vmatprep.subr.bf16.mxu0 0
        %4036 = vmatpush1.bf16.msra.mxu0 %v2591
        %4037 = vmatprep.subr.bf16.mxu0 0
        %4038 = vmatpush1.bf16.msra.mxu0 %v2588
        %4039 = vmatprep.subr.bf16.mxu0 0
        %4040 = vmatpush2.bf16.msra.mxu0 %v2633
        %4041 = vmatprep.subr.bf16.mxu0 0
        %4042 = vmatpush2.bf16.msra.mxu0 %v2630
        %4043 = vmatprep.subr.bf16.mxu0 0
        %4044 = vmatpush2.bf16.msra.mxu0 %v2627
        %4045 = vmatprep.subr.bf16.mxu0 0
        %4046 = vmatpush2.bf16.msra.mxu0 %v2624
        %4047 = vmatprep.subr.bf16.mxu0 0
        %4048 = vmatpush2.bf16.msra.mxu0 %v2621
        %4049 = vmatprep.subr.bf16.mxu0 0
        %4050 = vmatpush2.bf16.msra.mxu0 %v2618
        %4051 = vmatprep.subr.bf16.mxu0 0
        %4052 = vmatpush2.bf16.msra.mxu0 %v2615
        %4053 = vmatprep.subr.bf16.mxu0 0
        %4054 = vmatpush2.bf16.msra.mxu0 %v2612
        %4055 = vmatprep.mubr.bf16.mxu0 %v949
        %4056 = vmatmul.mubr.bf16.gmra.mxu0 %v948
        %v4057 = vpop.f32.mrf.mxu0
        %v4058 = vadd.f32 %v3993, %v4057
        %v4059 = vpop.f32.mrf.mxu0
        %v4060 = vpop.f32.mrf.mxu0
        %v4061 = vadd.f32 %v3996, %v4060
        %v4062 = vpop.f32.mrf.mxu0
        %4063 = vmatprep.mubr.bf16.mxu0 %v965
        %4064 = vmatmul.mubr.bf16.gmra.mxu0 %v964
        %v4065 = vpop.f32.mrf.mxu0
        %v4066 = vadd.f32 %v4001, %v4065
        %v4067 = vpop.f32.mrf.mxu0
        %v4068 = vpop.f32.mrf.mxu0
        %v4069 = vadd.f32 %v4004, %v4068
        %v4070 = vpop.f32.mrf.mxu0
        %4071 = vmatprep.mubr.bf16.mxu0 %v981
        %4072 = vmatmul.mubr.bf16.gmra.mxu0 %v980
        %v4073 = vpop.f32.mrf.mxu0
        %v4074 = vadd.f32 %v4009, %v4073
        %v4075 = vpop.f32.mrf.mxu0
        %v4076 = vpop.f32.mrf.mxu0
        %v4077 = vadd.f32 %v4012, %v4076
        %v4078 = vpop.f32.mrf.mxu0
        %4079 = vmatprep.mubr.bf16.mxu0 %v997
        %4080 = vmatmul.mubr.bf16.gmra.mxu0 %v996
        %v4081 = vpop.f32.mrf.mxu0
        %v4082 = vadd.f32 %v4017, %v4081
        %v4083 = vpop.f32.mrf.mxu0
        %v4084 = vpop.f32.mrf.mxu0
        %v4085 = vadd.f32 %v4020, %v4084
        %v4086 = vpop.f32.mrf.mxu0
        %4087 = vdwg.mxu0
        %4088 = vmatprep.subr.bf16.mxu0 0
        %4089 = vmatpush1.bf16.msra.mxu0 %v2657
        %4090 = vmatprep.subr.bf16.mxu0 0
        %4091 = vmatpush1.bf16.msra.mxu0 %v2654
        %4092 = vmatprep.subr.bf16.mxu0 0
        %4093 = vmatpush1.bf16.msra.mxu0 %v2651
        %4094 = vmatprep.subr.bf16.mxu0 0
        %4095 = vmatpush1.bf16.msra.mxu0 %v2648
        %4096 = vmatprep.subr.bf16.mxu0 0
        %4097 = vmatpush1.bf16.msra.mxu0 %v2645
        %4098 = vmatprep.subr.bf16.mxu0 0
        %4099 = vmatpush1.bf16.msra.mxu0 %v2642
        %4100 = vmatprep.subr.bf16.mxu0 0
        %4101 = vmatpush1.bf16.msra.mxu0 %v2639
        %4102 = vmatprep.subr.bf16.mxu0 0
        %4103 = vmatpush1.bf16.msra.mxu0 %v2636
        %4104 = vmatprep.subr.bf16.mxu0 0
        %4105 = vmatpush2.bf16.msra.mxu0 %v2681
        %4106 = vmatprep.subr.bf16.mxu0 0
        %4107 = vmatpush2.bf16.msra.mxu0 %v2678
        %4108 = vmatprep.subr.bf16.mxu0 0
        %4109 = vmatpush2.bf16.msra.mxu0 %v2675
        %4110 = vmatprep.subr.bf16.mxu0 0
        %4111 = vmatpush2.bf16.msra.mxu0 %v2672
        %4112 = vmatprep.subr.bf16.mxu0 0
        %4113 = vmatpush2.bf16.msra.mxu0 %v2669
        %4114 = vmatprep.subr.bf16.mxu0 0
        %4115 = vmatpush2.bf16.msra.mxu0 %v2666
        %4116 = vmatprep.subr.bf16.mxu0 0
        %4117 = vmatpush2.bf16.msra.mxu0 %v2663
        %4118 = vmatprep.subr.bf16.mxu0 0
        %4119 = vmatpush2.bf16.msra.mxu0 %v2660
        %4120 = vmatprep.mubr.bf16.mxu0 %v951
        %4121 = vmatmul.mubr.bf16.gmra.mxu0 %v950
        %v4122 = vpop.f32.mrf.mxu0
        %v4123 = vadd.f32 %v4058, %v4122
        %v4124 = vpop.f32.mrf.mxu0
        %v4125 = vpop.f32.mrf.mxu0
        %v4126 = vadd.f32 %v4061, %v4125
        %v4127 = vpop.f32.mrf.mxu0
        %4128 = vmatprep.mubr.bf16.mxu0 %v967
        %4129 = vmatmul.mubr.bf16.gmra.mxu0 %v966
        %v4130 = vpop.f32.mrf.mxu0
        %v4131 = vadd.f32 %v4066, %v4130
        %v4132 = vpop.f32.mrf.mxu0
        %v4133 = vpop.f32.mrf.mxu0
        %v4134 = vadd.f32 %v4069, %v4133
        %v4135 = vpop.f32.mrf.mxu0
        %4136 = vmatprep.mubr.bf16.mxu0 %v983
        %4137 = vmatmul.mubr.bf16.gmra.mxu0 %v982
        %v4138 = vpop.f32.mrf.mxu0
        %v4139 = vadd.f32 %v4074, %v4138
        %v4140 = vpop.f32.mrf.mxu0
        %v4141 = vpop.f32.mrf.mxu0
        %v4142 = vadd.f32 %v4077, %v4141
        %v4143 = vpop.f32.mrf.mxu0
        %4144 = vmatprep.mubr.bf16.mxu0 %v999
        %4145 = vmatmul.mubr.bf16.gmra.mxu0 %v998
        %v4146 = vpop.f32.mrf.mxu0
        %v4147 = vadd.f32 %v4082, %v4146
        %v4148 = vpop.f32.mrf.mxu0
        %v4149 = vpop.f32.mrf.mxu0
        %v4150 = vadd.f32 %v4085, %v4149
        %v4151 = vpop.f32.mrf.mxu0
        %4152 = vdwg.mxu0
        %4153 = vmatprep.subr.bf16.mxu0 0
        %4154 = vmatpush1.bf16.msra.mxu0 %v2705
        %4155 = vmatprep.subr.bf16.mxu0 0
        %4156 = vmatpush1.bf16.msra.mxu0 %v2702
        %4157 = vmatprep.subr.bf16.mxu0 0
        %4158 = vmatpush1.bf16.msra.mxu0 %v2699
        %4159 = vmatprep.subr.bf16.mxu0 0
        %4160 = vmatpush1.bf16.msra.mxu0 %v2696
        %4161 = vmatprep.subr.bf16.mxu0 0
        %4162 = vmatpush1.bf16.msra.mxu0 %v2693
        %4163 = vmatprep.subr.bf16.mxu0 0
        %4164 = vmatpush1.bf16.msra.mxu0 %v2690
        %4165 = vmatprep.subr.bf16.mxu0 0
        %4166 = vmatpush1.bf16.msra.mxu0 %v2687
        %4167 = vmatprep.subr.bf16.mxu0 0
        %4168 = vmatpush1.bf16.msra.mxu0 %v2684
        %4169 = vmatprep.subr.bf16.mxu0 0
        %4170 = vmatpush2.bf16.msra.mxu0 %v2729
        %4171 = vmatprep.subr.bf16.mxu0 0
        %4172 = vmatpush2.bf16.msra.mxu0 %v2726
        %4173 = vmatprep.subr.bf16.mxu0 0
        %4174 = vmatpush2.bf16.msra.mxu0 %v2723
        %4175 = vmatprep.subr.bf16.mxu0 0
        %4176 = vmatpush2.bf16.msra.mxu0 %v2720
        %4177 = vmatprep.subr.bf16.mxu0 0
        %4178 = vmatpush2.bf16.msra.mxu0 %v2717
        %4179 = vmatprep.subr.bf16.mxu0 0
        %4180 = vmatpush2.bf16.msra.mxu0 %v2714
        %4181 = vmatprep.subr.bf16.mxu0 0
        %4182 = vmatpush2.bf16.msra.mxu0 %v2711
        %4183 = vmatprep.subr.bf16.mxu0 0
        %4184 = vmatpush2.bf16.msra.mxu0 %v2708
        %4185 = vmatprep.mubr.bf16.mxu0 %v953
        %4186 = vmatmul.mubr.bf16.gmra.mxu0 %v952
        %v4187 = vpop.f32.mrf.mxu0
        %v4188 = vadd.f32 %v4123, %v4187
        %v4189 = vpop.f32.mrf.mxu0
        %v4190 = vpop.f32.mrf.mxu0
        %v4191 = vadd.f32 %v4126, %v4190
        %v4192 = vpop.f32.mrf.mxu0
        %4193 = vmatprep.mubr.bf16.mxu0 %v969
        %4194 = vmatmul.mubr.bf16.gmra.mxu0 %v968
        %v4195 = vpop.f32.mrf.mxu0
        %v4196 = vadd.f32 %v4131, %v4195
        %v4197 = vpop.f32.mrf.mxu0
        %v4198 = vpop.f32.mrf.mxu0
        %v4199 = vadd.f32 %v4134, %v4198
        %v4200 = vpop.f32.mrf.mxu0
        %4201 = vmatprep.mubr.bf16.mxu0 %v985
        %4202 = vmatmul.mubr.bf16.gmra.mxu0 %v984
        %v4203 = vpop.f32.mrf.mxu0
        %v4204 = vadd.f32 %v4139, %v4203
        %v4205 = vpop.f32.mrf.mxu0
        %v4206 = vpop.f32.mrf.mxu0
        %v4207 = vadd.f32 %v4142, %v4206
        %v4208 = vpop.f32.mrf.mxu0
        %4209 = vmatprep.mubr.bf16.mxu0 %v1001
        %4210 = vmatmul.mubr.bf16.gmra.mxu0 %v1000
        %v4211 = vpop.f32.mrf.mxu0
        %v4212 = vadd.f32 %v4147, %v4211
        %v4213 = vpop.f32.mrf.mxu0
        %v4214 = vpop.f32.mrf.mxu0
        %v4215 = vadd.f32 %v4150, %v4214
        %v4216 = vpop.f32.mrf.mxu0
        %4217 = vdwg.mxu0
        %vm4218 = vcmask 261120
        %4219 = vst.msk [vmem:[#allocation2] sm:$0xff] %vm4218, 0.0
        %vm4220 = vcmask 254976
        %4221 = vst.msk [vmem:[#allocation2 + $0x8] sm:$0x3] %vm4220, 0.0
        %4222 = vst.msk [vmem:[#allocation2 + $0x10] sm:$0xff] %vm4218, 0.0
        %4223 = vst.msk [vmem:[#allocation2 + $0x18] sm:$0x3] %vm4220, 0.0
        %4224 = vst.msk [vmem:[#allocation2 + $0x20] sm:$0xff] %vm4218, 0.0
        %4225 = vst.msk [vmem:[#allocation2 + $0x28] sm:$0x3] %vm4220, 0.0
        %4226 = vst.msk [vmem:[#allocation2 + $0x30] sm:$0xff] %vm4218, 0.0
        %4227 = vst.msk [vmem:[#allocation2 + $0x38] sm:$0x3] %vm4220, 0.0
        %4228 = vst.msk [vmem:[#allocation2 + $0x40] sm:$0xff] %vm4218, 0.0
        %4229 = vst.msk [vmem:[#allocation2 + $0x48] sm:$0x3] %vm4220, 0.0
        %4230 = vst.msk [vmem:[#allocation2 + $0x50] sm:$0xff] %vm4218, 0.0
        %4231 = vst.msk [vmem:[#allocation2 + $0x58] sm:$0x3] %vm4220, 0.0
        %4232 = vst.msk [vmem:[#allocation2 + $0x60] sm:$0xff] %vm4218, 0.0
        %4233 = vst.msk [vmem:[#allocation2 + $0x68] sm:$0x3] %vm4220, 0.0
        %4234 = vst.msk [vmem:[#allocation2 + $0x70] sm:$0xff] %vm4218, 0.0
        %4235 = vst.msk [vmem:[#allocation2 + $0x78] sm:$0x3] %vm4220, 0.0
        %4236 = vst.msk [vmem:[#allocation2 + $0x80] sm:$0xff] %vm4218, 0.0
        %4237 = vst.msk [vmem:[#allocation2 + $0x88] sm:$0x3] %vm4220, 0.0
        %4238 = vst.msk [vmem:[#allocation2 + $0x90] sm:$0xff] %vm4218, 0.0
        %4239 = vst.msk [vmem:[#allocation2 + $0x98] sm:$0x3] %vm4220, 0.0
        %s4240 = scalar_lea.vmem [#allocation2], 32
        %v4241 = vld [vmem:[%s4240 + $0x2] sm:$0xff]
        %v4242 = vld [vmem:[%s4240 + $0x12] sm:$0xff]
        %v4243 = vld [vmem:[%s4240 + $0x22] sm:$0xff]
        %v4244 = vld [vmem:[%s4240 + $0x32] sm:$0xff]
        %v4245 = vld [vmem:[%s4240 + $0x42] sm:$0xff]
        %v4246 = vld [vmem:[%s4240 + $0x52] sm:$0xff]
        %v4247 = vld [vmem:[%s4240 + $0x62] sm:$0xff]
        %v4248 = vld [vmem:[%s4240 + $0x72] sm:$0xff]
        %v4249 = vadd.f32 %v4241, %v3660
        %v4250 = vadd.f32 %v4242, %v3664
        %v4251 = vadd.f32 %v4243, %v3670
        %v4252 = vadd.f32 %v4244, %v3674
        %v4253 = vadd.f32 %v4245, %v3680
        %v4254 = vadd.f32 %v4246, %v3684
        %v4255 = vadd.f32 %v4247, %v3690
        %v4256 = vadd.f32 %v4248, %v3694
        %4257 = vst.msk [vmem:[%s4240 + $0x2] sm:$0xff] %vm4218, %v4249
        %4258 = vst.msk [vmem:[%s4240 + $0x12] sm:$0xff] %vm4218, %v4250
        %4259 = vst.msk [vmem:[%s4240 + $0x22] sm:$0xff] %vm4218, %v4251
        %4260 = vst.msk [vmem:[%s4240 + $0x32] sm:$0xff] %vm4218, %v4252
        %4261 = vst.msk [vmem:[%s4240 + $0x42] sm:$0xff] %vm4218, %v4253
        %4262 = vst.msk [vmem:[%s4240 + $0x52] sm:$0xff] %vm4218, %v4254
        %4263 = vst.msk [vmem:[%s4240 + $0x62] sm:$0xff] %vm4218, %v4255
        %4264 = vst.msk [vmem:[%s4240 + $0x72] sm:$0xff] %vm4218, %v4256
        %v4265 = vld [vmem:[%s4240 + $0x1] sm:$0xff]
        %v4266 = vld [vmem:[%s4240 + $0x11] sm:$0xff]
        %v4267 = vld [vmem:[%s4240 + $0x21] sm:$0xff]
        %v4268 = vld [vmem:[%s4240 + $0x31] sm:$0xff]
        %v4269 = vld [vmem:[%s4240 + $0x41] sm:$0xff]
        %v4270 = vld [vmem:[%s4240 + $0x51] sm:$0xff]
        %v4271 = vld [vmem:[%s4240 + $0x61] sm:$0xff]
        %v4272 = vld [vmem:[%s4240 + $0x71] sm:$0xff]
        %4281 = vrot.lane.b32.xlu0 %v3660, 96
        %v4282 = vpop.permute.xlu0 %4281
        %4283 = vrot.lane.b32.xlu0 %v3664, 96
        %v4284 = vpop.permute.xlu0 %4283
        %4285 = vrot.lane.b32.xlu0 %v3670, 96
        %v4286 = vpop.permute.xlu0 %4285
        %4287 = vrot.lane.b32.xlu0 %v3674, 96
        %v4288 = vpop.permute.xlu0 %4287
        %4289 = vrot.lane.b32.xlu0 %v3680, 96
        %v4290 = vpop.permute.xlu0 %4289
        %4291 = vrot.lane.b32.xlu0 %v3684, 96
        %v4292 = vpop.permute.xlu0 %4291
        %4293 = vrot.lane.b32.xlu0 %v3690, 96
        %v4294 = vpop.permute.xlu0 %4293
        %4295 = vrot.lane.b32.xlu0 %v3694, 96
        %v4296 = vpop.permute.xlu0 %4295
        %v4305 = vadd.f32 %v4265, %v4282
        %v4306 = vadd.f32 %v4266, %v4284
        %v4307 = vadd.f32 %v4267, %v4286
        %v4308 = vadd.f32 %v4268, %v4288
        %v4309 = vadd.f32 %v4269, %v4290
        %v4310 = vadd.f32 %v4270, %v4292
        %v4311 = vadd.f32 %v4271, %v4294
        %v4312 = vadd.f32 %v4272, %v4296
        %4313 = vst.msk [vmem:[%s4240 + $0x1] sm:$0xff] %vm4218, %v4305
        %4314 = vst.msk [vmem:[%s4240 + $0x11] sm:$0xff] %vm4218, %v4306
        %4315 = vst.msk [vmem:[%s4240 + $0x21] sm:$0xff] %vm4218, %v4307
        %4316 = vst.msk [vmem:[%s4240 + $0x31] sm:$0xff] %vm4218, %v4308
        %4317 = vst.msk [vmem:[%s4240 + $0x41] sm:$0xff] %vm4218, %v4309
        %4318 = vst.msk [vmem:[%s4240 + $0x51] sm:$0xff] %vm4218, %v4310
        %4319 = vst.msk [vmem:[%s4240 + $0x61] sm:$0xff] %vm4218, %v4311
        %4320 = vst.msk [vmem:[%s4240 + $0x71] sm:$0xff] %vm4218, %v4312
        %v4321 = vld [vmem:[%s4240] sm:$0xff]
        %v4322 = vld [vmem:[%s4240 + $0x10] sm:$0xff]
        %v4323 = vld [vmem:[%s4240 + $0x20] sm:$0xff]
        %v4324 = vld [vmem:[%s4240 + $0x30] sm:$0xff]
        %v4325 = vld [vmem:[%s4240 + $0x40] sm:$0xff]
        %v4326 = vld [vmem:[%s4240 + $0x50] sm:$0xff]
        %v4327 = vld [vmem:[%s4240 + $0x60] sm:$0xff]
        %v4328 = vld [vmem:[%s4240 + $0x70] sm:$0xff]
        %4329 = vrot.lane.b32.xlu0 %v3660, 64
        %v4330 = vpop.permute.xlu0 %4329
        %4331 = vrot.lane.b32.xlu0 %v3664, 64
        %v4332 = vpop.permute.xlu0 %4331
        %4333 = vrot.lane.b32.xlu0 %v3670, 64
        %v4334 = vpop.permute.xlu0 %4333
        %4335 = vrot.lane.b32.xlu0 %v3674, 64
        %v4336 = vpop.permute.xlu0 %4335
        %4337 = vrot.lane.b32.xlu0 %v3680, 64
        %v4338 = vpop.permute.xlu0 %4337
        %4339 = vrot.lane.b32.xlu0 %v3684, 64
        %v4340 = vpop.permute.xlu0 %4339
        %4341 = vrot.lane.b32.xlu0 %v3690, 64
        %v4342 = vpop.permute.xlu0 %4341
        %4343 = vrot.lane.b32.xlu0 %v3694, 64
        %v4344 = vpop.permute.xlu0 %4343
        %v4353 = vadd.f32 %v4321, %v4330
        %v4354 = vadd.f32 %v4322, %v4332
        %v4355 = vadd.f32 %v4323, %v4334
        %v4356 = vadd.f32 %v4324, %v4336
        %v4357 = vadd.f32 %v4325, %v4338
        %v4358 = vadd.f32 %v4326, %v4340
        %v4359 = vadd.f32 %v4327, %v4342
        %v4360 = vadd.f32 %v4328, %v4344
        %4361 = vst.msk [vmem:[%s4240] sm:$0xff] %vm4218, %v4353
        %4362 = vst.msk [vmem:[%s4240 + $0x10] sm:$0xff] %vm4218, %v4354
        %4363 = vst.msk [vmem:[%s4240 + $0x20] sm:$0xff] %vm4218, %v4355
        %4364 = vst.msk [vmem:[%s4240 + $0x30] sm:$0xff] %vm4218, %v4356
        %4365 = vst.msk [vmem:[%s4240 + $0x40] sm:$0xff] %vm4218, %v4357
        %4366 = vst.msk [vmem:[%s4240 + $0x50] sm:$0xff] %vm4218, %v4358
        %4367 = vst.msk [vmem:[%s4240 + $0x60] sm:$0xff] %vm4218, %v4359
        %4368 = vst.msk [vmem:[%s4240 + $0x70] sm:$0xff] %vm4218, %v4360
        %s4369 = scalar_lea.vmem [#allocation2], 16
        %v4370 = vld [vmem:[%s4369 + $0x2] sm:$0xff]
        %v4371 = vld [vmem:[%s4369 + $0x12] sm:$0xff]
        %v4372 = vld [vmem:[%s4369 + $0x22] sm:$0xff]
        %v4373 = vld [vmem:[%s4369 + $0x32] sm:$0xff]
        %v4374 = vld [vmem:[%s4369 + $0x42] sm:$0xff]
        %v4375 = vld [vmem:[%s4369 + $0x52] sm:$0xff]
        %v4376 = vld [vmem:[%s4369 + $0x62] sm:$0xff]
        %v4377 = vld [vmem:[%s4369 + $0x72] sm:$0xff]
        %4378 = vrot.lane.b32.xlu0 %v3660, 32
        %v4379 = vpop.permute.xlu0 %4378
        %4380 = vrot.lane.b32.xlu0 %v3664, 32
        %v4381 = vpop.permute.xlu0 %4380
        %4382 = vrot.lane.b32.xlu0 %v3670, 32
        %v4383 = vpop.permute.xlu0 %4382
        %4384 = vrot.lane.b32.xlu0 %v3674, 32
        %v4385 = vpop.permute.xlu0 %4384
        %4386 = vrot.lane.b32.xlu0 %v3680, 32
        %v4387 = vpop.permute.xlu0 %4386
        %4388 = vrot.lane.b32.xlu0 %v3684, 32
        %v4389 = vpop.permute.xlu0 %4388
        %4390 = vrot.lane.b32.xlu0 %v3690, 32
        %v4391 = vpop.permute.xlu0 %4390
        %4392 = vrot.lane.b32.xlu0 %v3694, 32
        %v4393 = vpop.permute.xlu0 %4392
        %v4402 = vadd.f32 %v4370, %v4379
        %v4403 = vadd.f32 %v4371, %v4381
        %v4404 = vadd.f32 %v4372, %v4383
        %v4405 = vadd.f32 %v4373, %v4385
        %v4406 = vadd.f32 %v4374, %v4387
        %v4407 = vadd.f32 %v4375, %v4389
        %v4408 = vadd.f32 %v4376, %v4391
        %v4409 = vadd.f32 %v4377, %v4393
        %4410 = vst.msk [vmem:[%s4369 + $0x2] sm:$0xff] %vm4218, %v4402
        %4411 = vst.msk [vmem:[%s4369 + $0x12] sm:$0xff] %vm4218, %v4403
        %4412 = vst.msk [vmem:[%s4369 + $0x22] sm:$0xff] %vm4218, %v4404
        %4413 = vst.msk [vmem:[%s4369 + $0x32] sm:$0xff] %vm4218, %v4405
        %4414 = vst.msk [vmem:[%s4369 + $0x42] sm:$0xff] %vm4218, %v4406
        %4415 = vst.msk [vmem:[%s4369 + $0x52] sm:$0xff] %vm4218, %v4407
        %4416 = vst.msk [vmem:[%s4369 + $0x62] sm:$0xff] %vm4218, %v4408
        %4417 = vst.msk [vmem:[%s4369 + $0x72] sm:$0xff] %vm4218, %v4409
        %v4418 = vld [vmem:[%s4369 + $0x1] sm:$0xff]
        %v4419 = vld [vmem:[%s4369 + $0x11] sm:$0xff]
        %v4420 = vld [vmem:[%s4369 + $0x21] sm:$0xff]
        %v4421 = vld [vmem:[%s4369 + $0x31] sm:$0xff]
        %v4422 = vld [vmem:[%s4369 + $0x41] sm:$0xff]
        %v4423 = vld [vmem:[%s4369 + $0x51] sm:$0xff]
        %v4424 = vld [vmem:[%s4369 + $0x61] sm:$0xff]
        %v4425 = vld [vmem:[%s4369 + $0x71] sm:$0xff]
        %v4426 = vadd.f32 %v4418, %v3662
        %v4427 = vadd.f32 %v4419, %v3666
        %v4428 = vadd.f32 %v4420, %v3672
        %v4429 = vadd.f32 %v4421, %v3676
        %v4430 = vadd.f32 %v4422, %v3682
        %v4431 = vadd.f32 %v4423, %v3686
        %v4432 = vadd.f32 %v4424, %v3692
        %v4433 = vadd.f32 %v4425, %v3696
        %4434 = vst.msk [vmem:[%s4369 + $0x1] sm:$0xff] %vm4218, %v4426
        %4435 = vst.msk [vmem:[%s4369 + $0x11] sm:$0xff] %vm4218, %v4427
        %4436 = vst.msk [vmem:[%s4369 + $0x21] sm:$0xff] %vm4218, %v4428
        %4437 = vst.msk [vmem:[%s4369 + $0x31] sm:$0xff] %vm4218, %v4429
        %4438 = vst.msk [vmem:[%s4369 + $0x41] sm:$0xff] %vm4218, %v4430
        %4439 = vst.msk [vmem:[%s4369 + $0x51] sm:$0xff] %vm4218, %v4431
        %4440 = vst.msk [vmem:[%s4369 + $0x61] sm:$0xff] %vm4218, %v4432
        %4441 = vst.msk [vmem:[%s4369 + $0x71] sm:$0xff] %vm4218, %v4433
        %v4442 = vld [vmem:[%s4369] sm:$0xff]
        %v4443 = vld [vmem:[%s4369 + $0x10] sm:$0xff]
        %v4444 = vld [vmem:[%s4369 + $0x20] sm:$0xff]
        %v4445 = vld [vmem:[%s4369 + $0x30] sm:$0xff]
        %v4446 = vld [vmem:[%s4369 + $0x40] sm:$0xff]
        %v4447 = vld [vmem:[%s4369 + $0x50] sm:$0xff]
        %v4448 = vld [vmem:[%s4369 + $0x60] sm:$0xff]
        %v4449 = vld [vmem:[%s4369 + $0x70] sm:$0xff]
        %4458 = vrot.lane.b32.xlu0 %v3662, 96
        %v4459 = vpop.permute.xlu0 %4458
        %4460 = vrot.lane.b32.xlu0 %v3666, 96
        %v4461 = vpop.permute.xlu0 %4460
        %4462 = vrot.lane.b32.xlu0 %v3672, 96
        %v4463 = vpop.permute.xlu0 %4462
        %4464 = vrot.lane.b32.xlu0 %v3676, 96
        %v4465 = vpop.permute.xlu0 %4464
        %4466 = vrot.lane.b32.xlu0 %v3682, 96
        %v4467 = vpop.permute.xlu0 %4466
        %4468 = vrot.lane.b32.xlu0 %v3686, 96
        %v4469 = vpop.permute.xlu0 %4468
        %4470 = vrot.lane.b32.xlu0 %v3692, 96
        %v4471 = vpop.permute.xlu0 %4470
        %4472 = vrot.lane.b32.xlu0 %v3696, 96
        %v4473 = vpop.permute.xlu0 %4472
        %v4482 = vadd.f32 %v4442, %v4459
        %v4483 = vadd.f32 %v4443, %v4461
        %v4484 = vadd.f32 %v4444, %v4463
        %v4485 = vadd.f32 %v4445, %v4465
        %v4486 = vadd.f32 %v4446, %v4467
        %v4487 = vadd.f32 %v4447, %v4469
        %v4488 = vadd.f32 %v4448, %v4471
        %v4489 = vadd.f32 %v4449, %v4473
        %4490 = vst.msk [vmem:[%s4369] sm:$0xff] %vm4218, %v4482
        %4491 = vst.msk [vmem:[%s4369 + $0x10] sm:$0xff] %vm4218, %v4483
        %4492 = vst.msk [vmem:[%s4369 + $0x20] sm:$0xff] %vm4218, %v4484
        %4493 = vst.msk [vmem:[%s4369 + $0x30] sm:$0xff] %vm4218, %v4485
        %4494 = vst.msk [vmem:[%s4369 + $0x40] sm:$0xff] %vm4218, %v4486
        %4495 = vst.msk [vmem:[%s4369 + $0x50] sm:$0xff] %vm4218, %v4487
        %4496 = vst.msk [vmem:[%s4369 + $0x60] sm:$0xff] %vm4218, %v4488
        %4497 = vst.msk [vmem:[%s4369 + $0x70] sm:$0xff] %vm4218, %v4489
        %v4498 = vld [vmem:[#allocation2 + $0x2] sm:$0xff]
        %v4499 = vld [vmem:[#allocation2 + $0x12] sm:$0xff]
        %v4500 = vld [vmem:[#allocation2 + $0x22] sm:$0xff]
        %v4501 = vld [vmem:[#allocation2 + $0x32] sm:$0xff]
        %v4502 = vld [vmem:[#allocation2 + $0x42] sm:$0xff]
        %v4503 = vld [vmem:[#allocation2 + $0x52] sm:$0xff]
        %v4504 = vld [vmem:[#allocation2 + $0x62] sm:$0xff]
        %v4505 = vld [vmem:[#allocation2 + $0x72] sm:$0xff]
        %4506 = vrot.lane.b32.xlu0 %v3662, 64
        %v4507 = vpop.permute.xlu0 %4506
        %4508 = vrot.lane.b32.xlu0 %v3666, 64
        %v4509 = vpop.permute.xlu0 %4508
        %4510 = vrot.lane.b32.xlu0 %v3672, 64
        %v4511 = vpop.permute.xlu0 %4510
        %4512 = vrot.lane.b32.xlu0 %v3676, 64
        %v4513 = vpop.permute.xlu0 %4512
        %4514 = vrot.lane.b32.xlu0 %v3682, 64
        %v4515 = vpop.permute.xlu0 %4514
        %4516 = vrot.lane.b32.xlu0 %v3686, 64
        %v4517 = vpop.permute.xlu0 %4516
        %4518 = vrot.lane.b32.xlu0 %v3692, 64
        %v4519 = vpop.permute.xlu0 %4518
        %4520 = vrot.lane.b32.xlu0 %v3696, 64
        %v4521 = vpop.permute.xlu0 %4520
        %v4530 = vadd.f32 %v4498, %v4507
        %v4531 = vadd.f32 %v4499, %v4509
        %v4532 = vadd.f32 %v4500, %v4511
        %v4533 = vadd.f32 %v4501, %v4513
        %v4534 = vadd.f32 %v4502, %v4515
        %v4535 = vadd.f32 %v4503, %v4517
        %v4536 = vadd.f32 %v4504, %v4519
        %v4537 = vadd.f32 %v4505, %v4521
        %4538 = vst.msk [vmem:[#allocation2 + $0x2] sm:$0xff] %vm4218, %v4530
        %4539 = vst.msk [vmem:[#allocation2 + $0x12] sm:$0xff] %vm4218, %v4531
        %4540 = vst.msk [vmem:[#allocation2 + $0x22] sm:$0xff] %vm4218, %v4532
        %4541 = vst.msk [vmem:[#allocation2 + $0x32] sm:$0xff] %vm4218, %v4533
        %4542 = vst.msk [vmem:[#allocation2 + $0x42] sm:$0xff] %vm4218, %v4534
        %4543 = vst.msk [vmem:[#allocation2 + $0x52] sm:$0xff] %vm4218, %v4535
        %4544 = vst.msk [vmem:[#allocation2 + $0x62] sm:$0xff] %vm4218, %v4536
        %4545 = vst.msk [vmem:[#allocation2 + $0x72] sm:$0xff] %vm4218, %v4537
        %v4546 = vld [vmem:[#allocation2 + $0x1] sm:$0xff]
        %v4547 = vld [vmem:[#allocation2 + $0x11] sm:$0xff]
        %v4548 = vld [vmem:[#allocation2 + $0x21] sm:$0xff]
        %v4549 = vld [vmem:[#allocation2 + $0x31] sm:$0xff]
        %v4550 = vld [vmem:[#allocation2 + $0x41] sm:$0xff]
        %v4551 = vld [vmem:[#allocation2 + $0x51] sm:$0xff]
        %v4552 = vld [vmem:[#allocation2 + $0x61] sm:$0xff]
        %v4553 = vld [vmem:[#allocation2 + $0x71] sm:$0xff]
        %4554 = vrot.lane.b32.xlu0 %v3662, 32
        %v4555 = vpop.permute.xlu0 %4554
        %4556 = vrot.lane.b32.xlu0 %v3666, 32
        %v4557 = vpop.permute.xlu0 %4556
        %4558 = vrot.lane.b32.xlu0 %v3672, 32
        %v4559 = vpop.permute.xlu0 %4558
        %4560 = vrot.lane.b32.xlu0 %v3676, 32
        %v4561 = vpop.permute.xlu0 %4560
        %4562 = vrot.lane.b32.xlu0 %v3682, 32
        %v4563 = vpop.permute.xlu0 %4562
        %4564 = vrot.lane.b32.xlu0 %v3686, 32
        %v4565 = vpop.permute.xlu0 %4564
        %4566 = vrot.lane.b32.xlu0 %v3692, 32
        %v4567 = vpop.permute.xlu0 %4566
        %4568 = vrot.lane.b32.xlu0 %v3696, 32
        %v4569 = vpop.permute.xlu0 %4568
        %v4578 = vadd.f32 %v4546, %v4555
        %v4579 = vadd.f32 %v4547, %v4557
        %v4580 = vadd.f32 %v4548, %v4559
        %v4581 = vadd.f32 %v4549, %v4561
        %v4582 = vadd.f32 %v4550, %v4563
        %v4583 = vadd.f32 %v4551, %v4565
        %v4584 = vadd.f32 %v4552, %v4567
        %v4585 = vadd.f32 %v4553, %v4569
        %4586 = vst.msk [vmem:[#allocation2 + $0x1] sm:$0xff] %vm4218, %v4578
        %4587 = vst.msk [vmem:[#allocation2 + $0x11] sm:$0xff] %vm4218, %v4579
        %4588 = vst.msk [vmem:[#allocation2 + $0x21] sm:$0xff] %vm4218, %v4580
        %4589 = vst.msk [vmem:[#allocation2 + $0x31] sm:$0xff] %vm4218, %v4581
        %4590 = vst.msk [vmem:[#allocation2 + $0x41] sm:$0xff] %vm4218, %v4582
        %4591 = vst.msk [vmem:[#allocation2 + $0x51] sm:$0xff] %vm4218, %v4583
        %4592 = vst.msk [vmem:[#allocation2 + $0x61] sm:$0xff] %vm4218, %v4584
        %4593 = vst.msk [vmem:[#allocation2 + $0x71] sm:$0xff] %vm4218, %v4585
        %v4594 = vld [vmem:[#allocation2] sm:$0xff]
        %v4595 = vld [vmem:[#allocation2 + $0x10] sm:$0xff]
        %v4596 = vld [vmem:[#allocation2 + $0x20] sm:$0xff]
        %v4597 = vld [vmem:[#allocation2 + $0x30] sm:$0xff]
        %v4598 = vld [vmem:[#allocation2 + $0x40] sm:$0xff]
        %v4599 = vld [vmem:[#allocation2 + $0x50] sm:$0xff]
        %v4600 = vld [vmem:[#allocation2 + $0x60] sm:$0xff]
        %v4601 = vld [vmem:[#allocation2 + $0x70] sm:$0xff]
        %v4602 = vadd.f32 %v4594, %v4188
        %v4603 = vadd.f32 %v4595, %v4191
        %v4604 = vadd.f32 %v4596, %v4196
        %v4605 = vadd.f32 %v4597, %v4199
        %v4606 = vadd.f32 %v4598, %v4204
        %v4607 = vadd.f32 %v4599, %v4207
        %v4608 = vadd.f32 %v4600, %v4212
        %v4609 = vadd.f32 %v4601, %v4215
        %4610 = vst.msk [vmem:[#allocation2] sm:$0xff] %vm4218, %v4602
        %4611 = vst.msk [vmem:[#allocation2 + $0x10] sm:$0xff] %vm4218, %v4603
        %4612 = vst.msk [vmem:[#allocation2 + $0x20] sm:$0xff] %vm4218, %v4604
        %4613 = vst.msk [vmem:[#allocation2 + $0x30] sm:$0xff] %vm4218, %v4605
        %4614 = vst.msk [vmem:[#allocation2 + $0x40] sm:$0xff] %vm4218, %v4606
        %4615 = vst.msk [vmem:[#allocation2 + $0x50] sm:$0xff] %vm4218, %v4607
        %4616 = vst.msk [vmem:[#allocation2 + $0x60] sm:$0xff] %vm4218, %v4608
        %4617 = vst.msk [vmem:[#allocation2 + $0x70] sm:$0xff] %vm4218, %v4609
        %v4618 = vld [vmem:[%s4369 + $0x1] sm:$0xff]
        %v4619 = vld [vmem:[%s4369 + $0x11] sm:$0xff]
        %v4620 = vld [vmem:[%s4369 + $0x21] sm:$0xff]
        %v4621 = vld [vmem:[%s4369 + $0x31] sm:$0xff]
        %v4622 = vld [vmem:[%s4369 + $0x41] sm:$0xff]
        %v4623 = vld [vmem:[%s4369 + $0x51] sm:$0xff]
        %v4624 = vld [vmem:[%s4369 + $0x61] sm:$0xff]
        %v4625 = vld [vmem:[%s4369 + $0x71] sm:$0xff]
        %v4626 = vld [vmem:[%s2] sm:$0x1]
        %v4628 = vlaneseq
        %v4629 = vshrl.u32 %v4628, 7
        %v4630 = vsub.s32 0, %v4629
        %v4631 = vrot.slane %v4626, %v4630
        %v4633 = vadd.f32 %v4618, %v4631
        %v4634 = vadd.f32 %v4619, %v4631
        %v4635 = vadd.f32 %v4620, %v4631
        %v4636 = vadd.f32 %v4621, %v4631
        %v4637 = vadd.f32 %v4622, %v4631
        %v4638 = vadd.f32 %v4623, %v4631
        %v4639 = vadd.f32 %v4624, %v4631
        %v4640 = vadd.f32 %v4625, %v4631
        %4641 = vst.msk [vmem:[%s163] sm:$0xff] %vm4218, %v4633
        %4642 = vst.msk [vmem:[%s163 + $0x8] sm:$0xff] %vm4218, %v4634
        %4643 = vst.msk [vmem:[%s163 + $0x10] sm:$0xff] %vm4218, %v4635
        %4644 = vst.msk [vmem:[%s163 + $0x18] sm:$0xff] %vm4218, %v4636
        %4645 = vst.msk [vmem:[%s163 + $0x20] sm:$0xff] %vm4218, %v4637
        %4646 = vst.msk [vmem:[%s163 + $0x28] sm:$0xff] %vm4218, %v4638
        %4647 = vst.msk [vmem:[%s163 + $0x30] sm:$0xff] %vm4218, %v4639
        %4648 = vst.msk [vmem:[%s163 + $0x38] sm:$0xff] %vm4218, %v4640
        %s4649 = sand.u32 %s93, 1
        %s4650 = scalar_lea.sflag [#allocation4], %s4649
        %s4651 = sand.u32 %s93, 1
        %s4652 = smul.addr %s4651, 64
        %s4653 = scalar_lea.vmem [#allocation3], %s4652
        // Predicated region
        $region33: #{tpu_custom_call.1} parent=31 // pred_check
          %p4654 = pneg %p103
        $region34: #{tpu_custom_call.1} parent=31 // pred_check_branch
          %4656 = sbr.rel (%p4654) target = $region36
        $region35: #{tpu_custom_call.1} parent=31 // pred_region
          %s4658 = ssub.s32 1024, 1024
          %4659 = vsyncadd %s4650, %s4658
          %s4660 = smul.addr %s17, 8
          %s4661 = smul.addr %s4660, 128
          %s4662 = scalar_lea.hbm %s3, %s4661
          %s4663 = sshll.u32 %s4653, 4
          %s4664 = int_to_ptr.vmem [resolvable:$true] %s4663
          %4669 = dma.vmem_to_hbm [thread:$0]  %s4664, 1024, %s4662, %s4650, 128, 128, 8
        $region36: #{tpu_custom_call.1} parent=31 // pred_fallthru
          _
      $region32: #{tpu_custom_call.1} parent=5 // pred_fallthru
        _
      %p4670 = scmp.le.s32.totalorder 2, %s12
      // Predicated region
      $region37: #{tpu_custom_call.1} parent=5 // pred_check
        %p4671 = pneg %p4670
      $region38: #{tpu_custom_call.1} parent=5 // pred_check_branch
        %4673 = sbr.rel (%p4671) target = $region40
      $region39: #{tpu_custom_call.1} parent=5 // pred_region
        %s4674 = ssub.s32 %s12, 2
        // Predicated region
        $region41: #{tpu_custom_call.1} parent=39 // pred_check
          %p4675 = pneg %p109
        $region42: #{tpu_custom_call.1} parent=39 // pred_check_branch
          %4677 = sbr.rel (%p4675) target = $region44
        $region43: #{tpu_custom_call.1} parent=39 // pred_region
          %s4678 = sand.u32 %s94, 1
          %s4679 = scalar_lea.sflag [#allocation4], %s4678
          %s4680 = sand.u32 %s94, 1
          %s4681 = smul.addr %s4680, 64
          %s4682 = scalar_lea.vmem [#allocation3], %s4681
          %4683 = dma.done %s4679, 1024
        $region44: #{tpu_custom_call.1} parent=39 // pred_fallthru
          _
      $region40: #{tpu_custom_call.1} parent=5 // pred_fallthru
        _
    $region6: #{tpu_custom_call.1} parent=1 // loop_footer
      %s16 = sadd.s32 1, %s12
    $region7: #{tpu_custom_call.1} parent=1 // loop_footer_branch
      %11 = sbr.rel target = $region3
    $region8: #{tpu_custom_call.1} parent=1 // loop_exit
      _
    %4684 = vsyncpa [#allocation4], 1
    %s4685 = scalar_lea.sflag [#allocation4], 1
    %4686 = vsyncpa %s4685, 1

</llo_original>
